<compile_context>
chip_gen: v7x
topology: tpu7x:2x2x1
jax: 0.10.0
libtpu: 0.0.40
codegen_flags: <defaults>
</compile_context>

<pallas_src>
import jax
import jax.numpy as jnp
from jax.experimental import pallas as pl
from jax.experimental.pallas import tpu as pltpu

BN_EPS = 1e-5
_INV_SQRT2 = 0.7071067811865476
_LPAD = 8  # left column pad inside the VMEM halo scratch -> aligned interior store


# ----------------------------------------------------------------------------
# In-kernel math helpers
# ----------------------------------------------------------------------------
def _erf(x):
    # f32-accurate rational approximation of erf (|err| < 1.3e-7), built from
    # exp (EUP), one approx reciprocal (EUP) + Newton step, and VPU ops.
    a = jnp.abs(x)
    d = 1.0 + 0.5 * a
    t = pl.reciprocal(d, approx=True)
    t = t * (2.0 - d * t)                 # one Newton step -> ~f32 accuracy
    y = t * jnp.exp(
        -a * a - 1.26551223
        + t * (1.00002368
        + t * (0.37409196
        + t * (0.09678418
        + t * (-0.18628806
        + t * (0.27886807
        + t * (-1.13520398
        + t * (1.48851587
        + t * (-0.82215223
        + t * 0.17087277)))))))))
    return jnp.where(x >= 0, 1.0 - y, y - 1.0)


def _gelu_exact(x):
    return 0.5 * x * (1.0 + _erf(x * _INV_SQRT2))


def _bn_scale_shift(g, b, rm, rv):
    s = g / jnp.sqrt(rv + BN_EPS)
    return s, b - rm * s


# ----------------------------------------------------------------------------
# Tiling helpers
# ----------------------------------------------------------------------------
def _choose_strip_rows(H, W, max_rows=1024):
    """Rows-per-strip TH.  Prefer a divisor of H; allow a non-divisor TH (with H
    padded in the wrapper) if all divisors would give a degenerate strip."""
    best = 1
    for th in range(1, H + 1):
        if th * W > max_rows:
            break
        if H % th == 0:
            best = th
    th_cap = max(1, min(H, max_rows // max(W, 1)))
    if best * W < 128 and th_cap * W >= 2 * best * W:
        return th_cap
    return best


def _choose_chunk_rows(rows, target=512):
    """Largest multiple-of-8 divisor of `rows` that is <= target (else rows)."""
    if rows <= target:
        return rows
    best = rows
    for d in range(8, target + 1, 8):
        if rows % d == 0:
            best = d
    return best


def _lane_pack_factor(N, C):
    """How many batch images to pack side-by-side on the 128-lane channel axis."""
    if C >= 128:
        return 1
    p = min(max(1, 128 // C), N, 4)   # cap the block-diagonal MXU blow-up at 4x
    while p > 1 and N % p != 0:
        p -= 1
    return p


# ----------------------------------------------------------------------------
# Fused kernel: RepVGGDW stencil -> (1x1 matmul, GELU, 1x1 matmul) -> residual
# ----------------------------------------------------------------------------
def _make_fused_kernel(H, H_pad, W, TH, C):
    LP = _LPAD
    ROWS = TH * W
    CR = _choose_chunk_rows(ROWS)

    def kernel(x_ref, a_ref, d_ref, w1_ref, b1_ref, w2_ref, b2_ref, o_ref, xpad_sc):
        s = pl.program_id(1)

        # Build the zero-padded image in VMEM once per batch image (s == 0).
        # Only the halo border (and the H->H_pad tail) is zeroed explicitly; the
        # interior is fully overwritten by the single x copy.
        @pl.when(s == 0)
        def _():
            xpad_sc[0:1, :, :] = jnp.zeros((1, W + LP + 1, C), jnp.float32)
            xpad_sc[H + 1:H_pad + 2, :, :] = jnp.zeros(
                (H_pad + 1 - H, W + LP + 1, C), jnp.float32)
            xpad_sc[1:H + 1, 0:LP, :] = jnp.zeros((H, LP, C), jnp.float32)
            xpad_sc[1:H + 1, LP + W:LP + W + 1, :] = jnp.zeros((H, 1, C), jnp.float32)
            xpad_sc[1:H + 1, LP:LP + W, :] = x_ref[0]

        row0 = pl.multiple_of(s * TH, TH)

        # ---- token mixer: fully folded RepVGGDW -------------------------------
        # t = sum_{ki,kj} A[ki,kj] * xpad(shifted) + D   (1x1 dw conv + identity
        # folded into the centre tap; both BNs folded into A/D).
        acc = None
        for ki in range(3):
            for kj in range(3):
                tap = ki * 3 + kj
                sl = xpad_sc[pl.ds(row0 + ki, TH), LP - 1 + kj:LP - 1 + kj + W, :]
                term = sl * a_ref[tap:tap + 1, :]
                acc = term if acc is None else acc + term
        acc = acc + d_ref[...]                       # (TH, W, C)

        # (TH, W, C) -> (TH*W, C) in-register; layout preserving for W % 8 == 0.
        t2d = acc.reshape(ROWS, C)

        # ---- channel mixer: Conv1x1_BN -> GELU -> Conv1x1_BN, + residual ------
        # Row-chunked so MXU matmuls of one chunk overlap GELU of another and the
        # (rows, hidden) f32 temporaries stay bounded.
        for c0 in range(0, ROWS, CR):
            t_c = t2d[c0:c0 + CR, :]
            z = jnp.dot(t_c, w1_ref[...], preferred_element_type=jnp.float32) + b1_ref[...]
            z = _gelu_exact(z)
            y = jnp.dot(z, w2_ref[...], preferred_element_type=jnp.float32) + b2_ref[...]
            o_ref[0, c0:c0 + CR, :] = t_c + y

    return kernel


def repvit_block(x_nchw, params):
    N, C, H, W = x_nchw.shape
    hidden = 2 * C
    A, D, w1t, b1, w2t, b2 = fold_params(params, C, hidden)

    # Boundary layout change only: the surrounding PyTorch spec is NCHW; in a full
    # NHWC model these transposes disappear.
    x = jnp.transpose(x_nchw, (0, 2, 3, 1))          # NCHW -> NHWC

    # Lane packing: put P images side by side on the 128-lane channel axis so the
    # stencil / GELU / residual / stores run lane-dense when C < 128.
    P = _lane_pack_factor(N, C)
    Np, Cp, hiddenp = N // P, P * C, P * hidden
    if P > 1:
        x = x.reshape(Np, P, H, W, C).transpose(0, 2, 3, 1, 4).reshape(Np, H, W, Cp)
        A = jnp.tile(A, (1, P))
        D = jnp.tile(D, (1, P))
        eye = jnp.eye(P, dtype=jnp.float32)
        w1t = jnp.kron(eye, w1t)                     # (Cp, hiddenp) block-diagonal
        w2t = jnp.kron(eye, w2t)                     # (hiddenp, Cp) block-diagonal
        b1 = jnp.tile(b1, (1, P))
        b2 = jnp.tile(b2, (1, P))

    TH = _choose_strip_rows(H, W, max_rows=1024)     # 1024 keeps v7x (64 MiB) happy
    S = -(-H // TH)
    H_pad = S * TH
    kernel = _make_fused_kernel(H, H_pad, W, TH, Cp)

    M = Np * H_pad * W
    cost = pl.CostEstimate(
        flops=int(4 * M * Cp * hiddenp + 20 * M * Cp + 30 * M * hiddenp),
        transcendentals=int(2 * M * hiddenp),
        bytes_accessed=int(4 * (2 * M * Cp + 2 * Cp * hiddenp + 12 * Cp + 2 * hiddenp)),
    )

    out = pl.pallas_call(
        kernel,
        out_shape=jax.ShapeDtypeStruct((Np * S, TH * W, Cp), x.dtype),
        grid=(Np, S),
        in_specs=[
            pl.BlockSpec((1, H, W, Cp), lambda n, s: (n, 0, 0, 0)),   # x (resident per n)
            pl.BlockSpec((9, Cp), lambda n, s: (0, 0)),               # folded 3x3 taps
            pl.BlockSpec((1, Cp), lambda n, s: (0, 0)),               # folded bias
            pl.BlockSpec((Cp, hiddenp), lambda n, s: (0, 0)),         # w1 (resident)
            pl.BlockSpec((1, hiddenp), lambda n, s: (0, 0)),
            pl.BlockSpec((hiddenp, Cp), lambda n, s: (0, 0)),         # w2 (resident)
            pl.BlockSpec((1, Cp), lambda n, s: (0, 0)),
        ],
        out_specs=pl.BlockSpec((1, TH * W, Cp), lambda n, s: (n * S + s, 0, 0)),
        scratch_shapes=[
            pltpu.VMEM((H_pad + 2, W + _LPAD + 1, Cp), jnp.float32),  # padded image
        ],
        compiler_params=pltpu.CompilerParams(
            dimension_semantics=("parallel", "arbitrary")),
        cost_estimate=cost,
    )(x, A, D, w1t, b1, w2t, b2)

    out = out.reshape(Np, H_pad, W, Cp)[:, :H]       # free reshape; drop padded rows
    if P > 1:
        out = out.reshape(Np, H, W, P, C).transpose(0, 3, 1, 2, 4).reshape(N, H, W, C)
    return jnp.transpose(out, (0, 3, 1, 2))          # NHWC -> NCHW


# ----------------------------------------------------------------------------
# Parameter setup (plain-JAX glue): deterministic init + BN folding
# ----------------------------------------------------------------------------
def init_params(key, C, hidden):
    ks = jax.random.split(key, 21)
    n = lambda k, s: 0.2 * jax.random.normal(k, s, jnp.float32)
    u = lambda k, s: jax.random.uniform(k, s, jnp.float32, 0.5, 1.5)
    p = {}
    # RepVGGDW: depthwise 3x3 conv (no bias) + BN
    p['dw3_w'] = n(ks[0], (C, 3, 3))
    p['bn1_g'], p['bn1_b'] = u(ks[1], (C,)), n(ks[2], (C,))
    p['bn1_rm'], p['bn1_rv'] = n(ks[3], (C,)), u(ks[4], (C,))
    # RepVGGDW: depthwise 1x1 conv (with bias)
    p['dw1_w'], p['dw1_b'] = n(ks[5], (C,)), n(ks[6], (C,))
    # RepVGGDW: outer BN
    p['bn2_g'], p['bn2_b'] = u(ks[7], (C,)), n(ks[8], (C,))
    p['bn2_rm'], p['bn2_rv'] = n(ks[9], (C,)), u(ks[10], (C,))
    # channel mixer: Conv2d_BN(C, hidden, 1)
    p['w1'] = n(ks[11], (hidden, C))
    p['bnA_g'], p['bnA_b'] = u(ks[12], (hidden,)), n(ks[13], (hidden,))
    p['bnA_rm'], p['bnA_rv'] = n(ks[14], (hidden,)), u(ks[15], (hidden,))
    # channel mixer: Conv2d_BN(hidden, C, 1) (randomized so the branch is non-trivial)
    p['w2'] = n(ks[16], (C, hidden))
    p['bnB_g'], p['bnB_b'] = u(ks[17], (C,)), n(ks[18], (C,))
    p['bnB_rm'], p['bnB_rv'] = n(ks[19], (C,)), u(ks[20], (C,))
    return p


def fold_params(p, C, hidden):
    s1, t1 = _bn_scale_shift(p['bn1_g'], p['bn1_b'], p['bn1_rm'], p['bn1_rv'])
    s2, t2 = _bn_scale_shift(p['bn2_g'], p['bn2_b'], p['bn2_rm'], p['bn2_rv'])
    # Fully folded RepVGGDW (same algebra as RepVGGDW.fuse_self):
    #   t = sum_taps A[tap] * xpad_tap + D, with the 1x1 dw conv and the identity
    #   folded into the centre (1,1) tap and both BNs folded into A/D.
    A = (p['dw3_w'] * (s1 * s2)[:, None, None]).transpose(1, 2, 0).reshape(9, C)
    A = A.at[4, :].add(s2 * (p['dw1_w'] + 1.0))
    D = (s2 * (p['dw1_b'] + t1) + t2).reshape(1, C)

    sA, tA = _bn_scale_shift(p['bnA_g'], p['bnA_b'], p['bnA_rm'], p['bnA_rv'])
    sB, tB = _bn_scale_shift(p['bnB_g'], p['bnB_b'], p['bnB_rm'], p['bnB_rv'])
    w1t = (p['w1'] * sA[:, None]).T          # (C, hidden)
    b1 = tA.reshape(1, hidden)
    w2t = (p['w2'] * sB[:, None]).T          # (hidden, C)
    b2 = tB.reshape(1, C)
    return A, D, w1t, b1, w2t, b2


# ----------------------------------------------------------------------------
# Plain-JAX reference (un-fused, mirrors the PyTorch eval-mode forward)
# ----------------------------------------------------------------------------
def reference(x_nhwc, p):
    N, H, W, C = x_nhwc.shape
    xpad = jnp.pad(x_nhwc, ((0, 0), (1, 1), (1, 1), (0, 0)))
    y1 = jnp.zeros_like(x_nhwc)
    for i in range(3):
        for j in range(3):
            y1 = y1 + xpad[:, i:i + H, j:j + W, :] * p['dw3_w'][:, i, j]
    s1, t1 = _bn_scale_shift(p['bn1_g'], p['bn1_b'], p['bn1_rm'], p['bn1_rv'])
    y1 = y1 * s1 + t1
    y2 = x_nhwc * p['dw1_w'] + p['dw1_b']
    s2, t2 = _bn_scale_shift(p['bn2_g'], p['bn2_b'], p['bn2_rm'], p['bn2_rv'])
    t = (y1 + y2 + x_nhwc) * s2 + t2
    sA, tA = _bn_scale_shift(p['bnA_g'], p['bnA_b'], p['bnA_rm'], p['bnA_rv'])
    sB, tB = _bn_scale_shift(p['bnB_g'], p['bnB_b'], p['bnB_rm'], p['bnB_rv'])
    h = jnp.einsum('nhwc,oc->nhwo', t, p['w1']) * sA + tA
    h = jax.nn.gelu(h, approximate=False)
    y = jnp.einsum('nhwk,ok->nhwo', h, p['w2']) * sB + tB
    return t + y


if __name__ == "__main__":
    key = jax.random.PRNGKey(0)
    kx, kp = jax.random.split(key)
    N, C, H, W = 2, 64, 16, 16      # inp = oup = 64, hidden_dim = 128, stride = 1
    hidden = 2 * C

    x_nchw = jax.random.normal(kx, (N, C, H, W), jnp.float32)
    params = init_params(kp, C, hidden)

    fwd = jax.jit(repvit_block)
    out = jax.block_until_ready(fwd(x_nchw, params))

    ref = reference(jnp.transpose(x_nchw, (0, 2, 3, 1)), params)
    ref = jnp.transpose(ref, (0, 3, 1, 2))

    assert out.shape == x_nchw.shape and out.dtype == jnp.float32
    max_err = float(jnp.max(jnp.abs(out - ref)))
    if max_err < 1e-3:
        print("KERNEL_OK")
    else:
        raise SystemExit(f"mismatch vs reference: max_err={max_err}")
</pallas_src>

<mosaic_0001>
module attributes {stable_mosaic.version = 11 : i64} {
  func.func @kernel(%arg0: i32, %arg1: i32, %arg2: memref<1x16x16x128xf32, #tpu.memory_space<vmem>>, %arg3: memref<9x128xf32, #tpu.memory_space<vmem>>, %arg4: memref<1x128xf32, #tpu.memory_space<vmem>>, %arg5: memref<128x256xf32, #tpu.memory_space<vmem>>, %arg6: memref<1x256xf32, #tpu.memory_space<vmem>>, %arg7: memref<256x128xf32, #tpu.memory_space<vmem>>, %arg8: memref<1x128xf32, #tpu.memory_space<vmem>>, %arg9: memref<1x256x128xf32, #tpu.memory_space<vmem>>, %arg10: memref<18x25x128xf32, #tpu.memory_space<vmem>>) attributes {dimension_semantics = [#tpu.dimension_semantics<parallel>, #tpu.dimension_semantics<arbitrary>], iteration_bounds = array<i64: 1, 1>, scalar_prefetch = 0 : i64, scratch_operands = 1 : i64, tpu.core_type = #tpu.core_type<tc>, window_params = [{transform_indices = @transform_0, window_bounds = array<i64: 1, 16, 16, 128>}, {pipeline_mode = #tpu.pipeline_mode<synchronous>, transform_indices = @transform_1, window_bounds = array<i64: 9, 128>}, {pipeline_mode = #tpu.pipeline_mode<synchronous>, transform_indices = @transform_2, window_bounds = array<i64: 1, 128>}, {pipeline_mode = #tpu.pipeline_mode<synchronous>, transform_indices = @transform_3, window_bounds = array<i64: 128, 256>}, {pipeline_mode = #tpu.pipeline_mode<synchronous>, transform_indices = @transform_4, window_bounds = array<i64: 1, 256>}, {pipeline_mode = #tpu.pipeline_mode<synchronous>, transform_indices = @transform_5, window_bounds = array<i64: 256, 128>}, {pipeline_mode = #tpu.pipeline_mode<synchronous>, transform_indices = @transform_6, window_bounds = array<i64: 1, 128>}, {transform_indices = @transform_7, window_bounds = array<i64: 1, 256, 128>}]} {
    %c0_i32 = arith.constant 0 : i32
    %0 = arith.cmpi eq, %arg1, %c0_i32 : i32
    %1 = arith.extui %0 : i1 to i32
    %c0_i32_0 = arith.constant 0 : i32
    %2 = arith.cmpi ne, %1, %c0_i32_0 : i32
    scf.if %2 {
      %cst_68 = arith.constant 0.000000e+00 : f32
      %153 = vector.broadcast %cst_68 : f32 to vector<1x25x128xf32>
      %c0_69 = arith.constant 0 : index
      %c0_70 = arith.constant 0 : index
      %c0_71 = arith.constant 0 : index
      %154 = vector.load %arg10[%c0_69, %c0_70, %c0_71] : memref<18x25x128xf32, #tpu.memory_space<vmem>>, vector<1x25x128xf32>
      tpu.vector_store %arg10[%c0_69, %c0_70, %c0_71], %153 {strides = array<i32>} : memref<18x25x128xf32, #tpu.memory_space<vmem>>, vector<1x25x128xf32>,
      %cst_72 = arith.constant 0.000000e+00 : f32
      %155 = vector.broadcast %cst_72 : f32 to vector<1x25x128xf32>
      %c17 = arith.constant 17 : index
      %c0_73 = arith.constant 0 : index
      %c0_74 = arith.constant 0 : index
      %156 = vector.load %arg10[%c17, %c0_73, %c0_74] : memref<18x25x128xf32, #tpu.memory_space<vmem>>, vector<1x25x128xf32>
      tpu.vector_store %arg10[%c17, %c0_73, %c0_74], %155 {strides = array<i32>} : memref<18x25x128xf32, #tpu.memory_space<vmem>>, vector<1x25x128xf32>,
      %cst_75 = arith.constant 0.000000e+00 : f32
      %157 = vector.broadcast %cst_75 : f32 to vector<16x8x128xf32>
      %c1_76 = arith.constant 1 : index
      %c0_77 = arith.constant 0 : index
      %c0_78 = arith.constant 0 : index
      %158 = vector.load %arg10[%c1_76, %c0_77, %c0_78] : memref<18x25x128xf32, #tpu.memory_space<vmem>>, vector<16x8x128xf32>
      tpu.vector_store %arg10[%c1_76, %c0_77, %c0_78], %157 {strides = array<i32>} : memref<18x25x128xf32, #tpu.memory_space<vmem>>, vector<16x8x128xf32>,
      %cst_79 = arith.constant 0.000000e+00 : f32
      %159 = vector.broadcast %cst_79 : f32 to vector<16x1x128xf32>
      %c1_80 = arith.constant 1 : index
      %c24 = arith.constant 24 : index
      %c0_81 = arith.constant 0 : index
      %160 = vector.load %arg10[%c1_80, %c24, %c0_81] : memref<18x25x128xf32, #tpu.memory_space<vmem>>, vector<16x1x128xf32>
      tpu.vector_store %arg10[%c1_80, %c24, %c0_81], %159 {strides = array<i32>} : memref<18x25x128xf32, #tpu.memory_space<vmem>>, vector<16x1x128xf32>,
      %c0_82 = arith.constant 0 : index
      %c0_83 = arith.constant 0 : index
      %c0_84 = arith.constant 0 : index
      %c0_85 = arith.constant 0 : index
      %161 = vector.load %arg2[%c0_82, %c0_83, %c0_84, %c0_85] : memref<1x16x16x128xf32, #tpu.memory_space<vmem>>, vector<1x16x16x128xf32>
      %162 = vector.shape_cast %161 : vector<1x16x16x128xf32> to vector<16x16x128xf32>
      %c1_86 = arith.constant 1 : index
      %c8_87 = arith.constant 8 : index
      %c0_88 = arith.constant 0 : index
      %163 = vector.load %arg10[%c1_86, %c8_87, %c0_88] : memref<18x25x128xf32, #tpu.memory_space<vmem>>, vector<16x16x128xf32>
      tpu.vector_store %arg10[%c1_86, %c8_87, %c0_88], %162 {strides = array<i32>} : memref<18x25x128xf32, #tpu.memory_space<vmem>>, vector<16x16x128xf32>,
    } else {
    }
    %c16_i32 = arith.constant 16 : i32
    %3 = arith.muli %arg1, %c16_i32 : i32
    %4 = tpu.assume_multiple %3, 16 : i32
    %c0_i32_1 = arith.constant 0 : i32
    %5 = arith.addi %4, %c0_i32_1 : i32
    %6 = arith.index_cast %5 : i32 to index
    %c7 = arith.constant 7 : index
    %c0 = arith.constant 0 : index
    %7 = vector.load %arg10[%6, %c7, %c0] : memref<18x25x128xf32, #tpu.memory_space<vmem>>, vector<16x16x128xf32>
    %c0_2 = arith.constant 0 : index
    %c0_3 = arith.constant 0 : index
    %8 = vector.load %arg3[%c0_2, %c0_3] : memref<9x128xf32, #tpu.memory_space<vmem>>, vector<1x128xf32>
    %9 = vector.shape_cast %8 : vector<1x128xf32> to vector<1x1x128xf32>
    %10 = vector.broadcast %9 : vector<1x1x128xf32> to vector<16x16x128xf32>
    %11 = arith.mulf %7, %10 : vector<16x16x128xf32>
    %c0_i32_4 = arith.constant 0 : i32
    %12 = arith.addi %4, %c0_i32_4 : i32
    %13 = arith.index_cast %12 : i32 to index
    %c8 = arith.constant 8 : index
    %c0_5 = arith.constant 0 : index
    %14 = vector.load %arg10[%13, %c8, %c0_5] : memref<18x25x128xf32, #tpu.memory_space<vmem>>, vector<16x16x128xf32>
    %c1 = arith.constant 1 : index
    %c0_6 = arith.constant 0 : index
    %15 = vector.load %arg3[%c1, %c0_6] : memref<9x128xf32, #tpu.memory_space<vmem>>, vector<1x128xf32>
    %16 = vector.shape_cast %15 : vector<1x128xf32> to vector<1x1x128xf32>
    %17 = vector.broadcast %16 : vector<1x1x128xf32> to vector<16x16x128xf32>
    %18 = arith.mulf %14, %17 : vector<16x16x128xf32>
    %19 = arith.addf %11, %18 : vector<16x16x128xf32>
    %c0_i32_7 = arith.constant 0 : i32
    %20 = arith.addi %4, %c0_i32_7 : i32
    %21 = arith.index_cast %20 : i32 to index
    %c9 = arith.constant 9 : index
    %c0_8 = arith.constant 0 : index
    %22 = vector.load %arg10[%21, %c9, %c0_8] : memref<18x25x128xf32, #tpu.memory_space<vmem>>, vector<16x16x128xf32>
    %c2 = arith.constant 2 : index
    %c0_9 = arith.constant 0 : index
    %23 = vector.load %arg3[%c2, %c0_9] : memref<9x128xf32, #tpu.memory_space<vmem>>, vector<1x128xf32>
    %24 = vector.shape_cast %23 : vector<1x128xf32> to vector<1x1x128xf32>
    %25 = vector.broadcast %24 : vector<1x1x128xf32> to vector<16x16x128xf32>
    %26 = arith.mulf %22, %25 : vector<16x16x128xf32>
    %27 = arith.addf %19, %26 : vector<16x16x128xf32>
    %c1_i32 = arith.constant 1 : i32
    %28 = arith.addi %4, %c1_i32 : i32
    %29 = arith.index_cast %28 : i32 to index
    %c7_10 = arith.constant 7 : index
    %c0_11 = arith.constant 0 : index
    %30 = vector.load %arg10[%29, %c7_10, %c0_11] : memref<18x25x128xf32, #tpu.memory_space<vmem>>, vector<16x16x128xf32>
    %c3 = arith.constant 3 : index
    %c0_12 = arith.constant 0 : index
    %31 = vector.load %arg3[%c3, %c0_12] : memref<9x128xf32, #tpu.memory_space<vmem>>, vector<1x128xf32>
    %32 = vector.shape_cast %31 : vector<1x128xf32> to vector<1x1x128xf32>
    %33 = vector.broadcast %32 : vector<1x1x128xf32> to vector<16x16x128xf32>
    %34 = arith.mulf %30, %33 : vector<16x16x128xf32>
    %35 = arith.addf %27, %34 : vector<16x16x128xf32>
    %c1_i32_13 = arith.constant 1 : i32
    %36 = arith.addi %4, %c1_i32_13 : i32
    %37 = arith.index_cast %36 : i32 to index
    %c8_14 = arith.constant 8 : index
    %c0_15 = arith.constant 0 : index
    %38 = vector.load %arg10[%37, %c8_14, %c0_15] : memref<18x25x128xf32, #tpu.memory_space<vmem>>, vector<16x16x128xf32>
    %c4 = arith.constant 4 : index
    %c0_16 = arith.constant 0 : index
    %39 = vector.load %arg3[%c4, %c0_16] : memref<9x128xf32, #tpu.memory_space<vmem>>, vector<1x128xf32>
    %40 = vector.shape_cast %39 : vector<1x128xf32> to vector<1x1x128xf32>
    %41 = vector.broadcast %40 : vector<1x1x128xf32> to vector<16x16x128xf32>
    %42 = arith.mulf %38, %41 : vector<16x16x128xf32>
    %43 = arith.addf %35, %42 : vector<16x16x128xf32>
    %c1_i32_17 = arith.constant 1 : i32
    %44 = arith.addi %4, %c1_i32_17 : i32
    %45 = arith.index_cast %44 : i32 to index
    %c9_18 = arith.constant 9 : index
    %c0_19 = arith.constant 0 : index
    %46 = vector.load %arg10[%45, %c9_18, %c0_19] : memref<18x25x128xf32, #tpu.memory_space<vmem>>, vector<16x16x128xf32>
    %c5 = arith.constant 5 : index
    %c0_20 = arith.constant 0 : index
    %47 = vector.load %arg3[%c5, %c0_20] : memref<9x128xf32, #tpu.memory_space<vmem>>, vector<1x128xf32>
    %48 = vector.shape_cast %47 : vector<1x128xf32> to vector<1x1x128xf32>
    %49 = vector.broadcast %48 : vector<1x1x128xf32> to vector<16x16x128xf32>
    %50 = arith.mulf %46, %49 : vector<16x16x128xf32>
    %51 = arith.addf %43, %50 : vector<16x16x128xf32>
    %c2_i32 = arith.constant 2 : i32
    %52 = arith.addi %4, %c2_i32 : i32
    %53 = arith.index_cast %52 : i32 to index
    %c7_21 = arith.constant 7 : index
    %c0_22 = arith.constant 0 : index
    %54 = vector.load %arg10[%53, %c7_21, %c0_22] : memref<18x25x128xf32, #tpu.memory_space<vmem>>, vector<16x16x128xf32>
    %c6 = arith.constant 6 : index
    %c0_23 = arith.constant 0 : index
    %55 = vector.load %arg3[%c6, %c0_23] : memref<9x128xf32, #tpu.memory_space<vmem>>, vector<1x128xf32>
    %56 = vector.shape_cast %55 : vector<1x128xf32> to vector<1x1x128xf32>
    %57 = vector.broadcast %56 : vector<1x1x128xf32> to vector<16x16x128xf32>
    %58 = arith.mulf %54, %57 : vector<16x16x128xf32>
    %59 = arith.addf %51, %58 : vector<16x16x128xf32>
    %c2_i32_24 = arith.constant 2 : i32
    %60 = arith.addi %4, %c2_i32_24 : i32
    %61 = arith.index_cast %60 : i32 to index
    %c8_25 = arith.constant 8 : index
    %c0_26 = arith.constant 0 : index
    %62 = vector.load %arg10[%61, %c8_25, %c0_26] : memref<18x25x128xf32, #tpu.memory_space<vmem>>, vector<16x16x128xf32>
    %c7_27 = arith.constant 7 : index
    %c0_28 = arith.constant 0 : index
    %63 = vector.load %arg3[%c7_27, %c0_28] : memref<9x128xf32, #tpu.memory_space<vmem>>, vector<1x128xf32>
    %64 = vector.shape_cast %63 : vector<1x128xf32> to vector<1x1x128xf32>
    %65 = vector.broadcast %64 : vector<1x1x128xf32> to vector<16x16x128xf32>
    %66 = arith.mulf %62, %65 : vector<16x16x128xf32>
    %67 = arith.addf %59, %66 : vector<16x16x128xf32>
    %c2_i32_29 = arith.constant 2 : i32
    %68 = arith.addi %4, %c2_i32_29 : i32
    %69 = arith.index_cast %68 : i32 to index
    %c9_30 = arith.constant 9 : index
    %c0_31 = arith.constant 0 : index
    %70 = vector.load %arg10[%69, %c9_30, %c0_31] : memref<18x25x128xf32, #tpu.memory_space<vmem>>, vector<16x16x128xf32>
    %c8_32 = arith.constant 8 : index
    %c0_33 = arith.constant 0 : index
    %71 = vector.load %arg3[%c8_32, %c0_33] : memref<9x128xf32, #tpu.memory_space<vmem>>, vector<1x128xf32>
    %72 = vector.shape_cast %71 : vector<1x128xf32> to vector<1x1x128xf32>
    %73 = vector.broadcast %72 : vector<1x1x128xf32> to vector<16x16x128xf32>
    %74 = arith.mulf %70, %73 : vector<16x16x128xf32>
    %75 = arith.addf %67, %74 : vector<16x16x128xf32>
    %c0_34 = arith.constant 0 : index
    %c0_35 = arith.constant 0 : index
    %76 = vector.load %arg4[%c0_34, %c0_35] : memref<1x128xf32, #tpu.memory_space<vmem>>, vector<1x128xf32>
    %77 = vector.shape_cast %76 : vector<1x128xf32> to vector<1x1x128xf32>
    %78 = vector.broadcast %77 : vector<1x1x128xf32> to vector<16x16x128xf32>
    %79 = arith.addf %75, %78 : vector<16x16x128xf32>
    %80 = vector.shape_cast %79 : vector<16x16x128xf32> to vector<256x128xf32>
    %c0_36 = arith.constant 0 : index
    %c0_37 = arith.constant 0 : index
    %81 = vector.load %arg5[%c0_36, %c0_37] : memref<128x256xf32, #tpu.memory_space<vmem>>, vector<128x256xf32>
    %cst = arith.constant dense<0.000000e+00> : vector<256x256xf32>
    %82 = tpu.matmul %80, %81, %cst {dimension_numbers = #tpu.dot_dimension_numbers<[1], [0], [0], [1], [0, 0, 1, 1], [], []>} : vector<256x128xf32>, vector<128x256xf32>, vector<256x256xf32> -> vector<256x256xf32>
    %c0_38 = arith.constant 0 : index
    %c0_39 = arith.constant 0 : index
    %83 = vector.load %arg6[%c0_38, %c0_39] : memref<1x256xf32, #tpu.memory_space<vmem>>, vector<1x256xf32>
    %84 = vector.broadcast %83 : vector<1x256xf32> to vector<256x256xf32>
    %85 = arith.addf %82, %84 : vector<256x256xf32>
    %cst_40 = arith.constant 5.000000e-01 : f32
    %86 = vector.broadcast %cst_40 : f32 to vector<256x256xf32>
    %87 = arith.mulf %86, %85 : vector<256x256xf32>
    %cst_41 = arith.constant 0.707106769 : f32
    %88 = vector.broadcast %cst_41 : f32 to vector<256x256xf32>
    %89 = arith.mulf %85, %88 : vector<256x256xf32>
    %90 = math.absf %89 : vector<256x256xf32>
    %cst_42 = arith.constant 5.000000e-01 : f32
    %91 = vector.broadcast %cst_42 : f32 to vector<256x256xf32>
    %92 = arith.mulf %91, %90 : vector<256x256xf32>
    %cst_43 = arith.constant 1.000000e+00 : f32
    %93 = vector.broadcast %cst_43 : f32 to vector<256x256xf32>
    %94 = arith.addf %93, %92 : vector<256x256xf32>
    %95 = tpu.reciprocal %94 {approx = true} : vector<256x256xf32> -> vector<256x256xf32>
    %96 = arith.mulf %94, %95 : vector<256x256xf32>
    %cst_44 = arith.constant 2.000000e+00 : f32
    %97 = vector.broadcast %cst_44 : f32 to vector<256x256xf32>
    %98 = arith.subf %97, %96 : vector<256x256xf32>
    %99 = arith.mulf %95, %98 : vector<256x256xf32>
    %cst_45 = arith.constant 0.000000e+00 : f32
    %100 = vector.broadcast %cst_45 : f32 to vector<256x256xf32>
    %101 = arith.subf %100, %90 : vector<256x256xf32>
    %102 = arith.mulf %101, %90 : vector<256x256xf32>
    %cst_46 = arith.constant 1.26551223 : f32
    %103 = vector.broadcast %cst_46 : f32 to vector<256x256xf32>
    %104 = arith.subf %102, %103 : vector<256x256xf32>
    %cst_47 = arith.constant 0.170872763 : f32
    %105 = vector.broadcast %cst_47 : f32 to vector<256x256xf32>
    %106 = arith.mulf %99, %105 : vector<256x256xf32>
    %cst_48 = arith.constant -0.822152256 : f32
    %107 = vector.broadcast %cst_48 : f32 to vector<256x256xf32>
    %108 = arith.addf %107, %106 : vector<256x256xf32>
    %109 = arith.mulf %99, %108 : vector<256x256xf32>
    %cst_49 = arith.constant 1.48851585 : f32
    %110 = vector.broadcast %cst_49 : f32 to vector<256x256xf32>
    %111 = arith.addf %110, %109 : vector<256x256xf32>
    %112 = arith.mulf %99, %111 : vector<256x256xf32>
    %cst_50 = arith.constant -1.13520396 : f32
    %113 = vector.broadcast %cst_50 : f32 to vector<256x256xf32>
    %114 = arith.addf %113, %112 : vector<256x256xf32>
    %115 = arith.mulf %99, %114 : vector<256x256xf32>
    %cst_51 = arith.constant 0.278868079 : f32
    %116 = vector.broadcast %cst_51 : f32 to vector<256x256xf32>
    %117 = arith.addf %116, %115 : vector<256x256xf32>
    %118 = arith.mulf %99, %117 : vector<256x256xf32>
    %cst_52 = arith.constant -0.186288059 : f32
    %119 = vector.broadcast %cst_52 : f32 to vector<256x256xf32>
    %120 = arith.addf %119, %118 : vector<256x256xf32>
    %121 = arith.mulf %99, %120 : vector<256x256xf32>
    %cst_53 = arith.constant 0.0967841818 : f32
    %122 = vector.broadcast %cst_53 : f32 to vector<256x256xf32>
    %123 = arith.addf %122, %121 : vector<256x256xf32>
    %124 = arith.mulf %99, %123 : vector<256x256xf32>
    %cst_54 = arith.constant 0.374091953 : f32
    %125 = vector.broadcast %cst_54 : f32 to vector<256x256xf32>
    %126 = arith.addf %125, %124 : vector<256x256xf32>
    %127 = arith.mulf %99, %126 : vector<256x256xf32>
    %cst_55 = arith.constant 1.00002372 : f32
    %128 = vector.broadcast %cst_55 : f32 to vector<256x256xf32>
    %129 = arith.addf %128, %127 : vector<256x256xf32>
    %130 = arith.mulf %99, %129 : vector<256x256xf32>
    %131 = arith.addf %104, %130 : vector<256x256xf32>
    %132 = math.exp %131 : vector<256x256xf32>
    %133 = arith.mulf %99, %132 : vector<256x256xf32>
    %cst_56 = arith.constant 0.000000e+00 : f32
    %134 = vector.broadcast %cst_56 : f32 to vector<256x256xf32>
    %135 = arith.cmpf oge, %89, %134 : vector<256x256xf32>
    %cst_57 = arith.constant 1.000000e+00 : f32
    %136 = vector.broadcast %cst_57 : f32 to vector<256x256xf32>
    %137 = arith.subf %136, %133 : vector<256x256xf32>
    %cst_58 = arith.constant 1.000000e+00 : f32
    %138 = vector.broadcast %cst_58 : f32 to vector<256x256xf32>
    %139 = arith.subf %133, %138 : vector<256x256xf32>
    %140 = arith.select %135, %137, %139 : vector<256x256xi1>, vector<256x256xf32>
    %cst_59 = arith.constant 1.000000e+00 : f32
    %141 = vector.broadcast %cst_59 : f32 to vector<256x256xf32>
    %142 = arith.addf %141, %140 : vector<256x256xf32>
    %143 = arith.mulf %87, %142 : vector<256x256xf32>
    %c0_60 = arith.constant 0 : index
    %c0_61 = arith.constant 0 : index
    %144 = vector.load %arg7[%c0_60, %c0_61] : memref<256x128xf32, #tpu.memory_space<vmem>>, vector<256x128xf32>
    %cst_62 = arith.constant dense<0.000000e+00> : vector<256x128xf32>
    %145 = tpu.matmul %143, %144, %cst_62 {dimension_numbers = #tpu.dot_dimension_numbers<[1], [0], [0], [1], [0, 0, 1, 1], [], []>} : vector<256x256xf32>, vector<256x128xf32>, vector<256x128xf32> -> vector<256x128xf32>
    %c0_63 = arith.constant 0 : index
    %c0_64 = arith.constant 0 : index
    %146 = vector.load %arg8[%c0_63, %c0_64] : memref<1x128xf32, #tpu.memory_space<vmem>>, vector<1x128xf32>
    %147 = vector.broadcast %146 : vector<1x128xf32> to vector<256x128xf32>
    %148 = arith.addf %145, %147 : vector<256x128xf32>
    %149 = arith.addf %80, %148 : vector<256x128xf32>
    %c0_65 = arith.constant 0 : index
    %c0_66 = arith.constant 0 : index
    %c0_67 = arith.constant 0 : index
    %150 = vector.load %arg9[%c0_65, %c0_66, %c0_67] : memref<1x256x128xf32, #tpu.memory_space<vmem>>, vector<1x256x128xf32>
    %151 = vector.shape_cast %150 : vector<1x256x128xf32> to vector<256x128xf32>
    %152 = vector.shape_cast %149 : vector<256x128xf32> to vector<1x256x128xf32>
    tpu.vector_store %arg9[%c0_65, %c0_66, %c0_67], %152 {strides = array<i32>} : memref<1x256x128xf32, #tpu.memory_space<vmem>>, vector<1x256x128xf32>,
    return
  }
  func.func @transform_0(%arg0: i32, %arg1: i32) -> (i32, i32, i32, i32) {
    %c0_i32 = arith.constant 0 : i32
    %c0_i32_0 = arith.constant 0 : i32
    %c0_i32_1 = arith.constant 0 : i32
    %c0_i32_2 = arith.constant 0 : i32
    return %arg0, %c0_i32, %c0_i32_0, %c0_i32_1 : i32, i32, i32, i32
  }
  func.func @transform_1(%arg0: i32, %arg1: i32) -> (i32, i32) {
    %c0_i32 = arith.constant 0 : i32
    %c0_i32_0 = arith.constant 0 : i32
    %c0_i32_1 = arith.constant 0 : i32
    return %c0_i32, %c0_i32_0 : i32, i32
  }
  func.func @transform_2(%arg0: i32, %arg1: i32) -> (i32, i32) {
    %c0_i32 = arith.constant 0 : i32
    %c0_i32_0 = arith.constant 0 : i32
    %c0_i32_1 = arith.constant 0 : i32
    return %c0_i32, %c0_i32_0 : i32, i32
  }
  func.func @transform_3(%arg0: i32, %arg1: i32) -> (i32, i32) {
    %c0_i32 = arith.constant 0 : i32
    %c0_i32_0 = arith.constant 0 : i32
    %c0_i32_1 = arith.constant 0 : i32
    return %c0_i32, %c0_i32_0 : i32, i32
  }
  func.func @transform_4(%arg0: i32, %arg1: i32) -> (i32, i32) {
    %c0_i32 = arith.constant 0 : i32
    %c0_i32_0 = arith.constant 0 : i32
    %c0_i32_1 = arith.constant 0 : i32
    return %c0_i32, %c0_i32_0 : i32, i32
  }
  func.func @transform_5(%arg0: i32, %arg1: i32) -> (i32, i32) {
    %c0_i32 = arith.constant 0 : i32
    %c0_i32_0 = arith.constant 0 : i32
    %c0_i32_1 = arith.constant 0 : i32
    return %c0_i32, %c0_i32_0 : i32, i32
  }
  func.func @transform_6(%arg0: i32, %arg1: i32) -> (i32, i32) {
    %c0_i32 = arith.constant 0 : i32
    %c0_i32_0 = arith.constant 0 : i32
    %c0_i32_1 = arith.constant 0 : i32
    return %c0_i32, %c0_i32_0 : i32, i32
  }
  func.func @transform_7(%arg0: i32, %arg1: i32) -> (i32, i32, i32) {
    %c1_i32 = arith.constant 1 : i32
    %0 = arith.muli %arg0, %c1_i32 : i32
    %1 = arith.addi %0, %arg1 : i32
    %c0_i32 = arith.constant 0 : i32
    %c0_i32_0 = arith.constant 0 : i32
    %c0_i32_1 = arith.constant 0 : i32
    return %1, %c0_i32, %c0_i32_0 : i32, i32, i32
  }
}

</mosaic_0001>

<llo_original>
// kernel: tile.21
$region0: #{tile.21}
  %s0 = inlined_call_operand.vmem [shape: f32[9,2,64], index: 0, kind: input, shape index: {}]
  %s1 = inlined_call_operand.vmem [shape: f32[9,128], index: 1, kind: output, shape index: {}]
  $region1: #{tile.21} parent=0
    #allocation0 [shape = 'u8[36864]{0}', space=vmem, size = 0x9000, scoped, tag = 'scoped mem for input reshape']
    %s3 = sshllo.u32 0, 2
    %s4 = smul.addr 2, 8
    %s5 = scalar_lea.vmem %s0, %s4
    %v6 = vld [vmem:[%s5] sm:%s3]
    %s7 = scalar_lea.vmem [#allocation0], 64
    %8 = vst [vmem:[%s7] sm:%s3] %v6
    %s9 = smul.addr 2, 7
    %s10 = scalar_lea.vmem %s0, %s9
    %v11 = vld [vmem:[%s10] sm:%s3]
    %s12 = scalar_lea.vmem [#allocation0], 56
    %13 = vst [vmem:[%s12] sm:%s3] %v11
    %s14 = smul.addr 2, 6
    %s15 = scalar_lea.vmem %s0, %s14
    %v16 = vld [vmem:[%s15] sm:%s3]
    %s17 = scalar_lea.vmem [#allocation0], 48
    %18 = vst [vmem:[%s17] sm:%s3] %v16
    %s19 = smul.addr 2, 5
    %s20 = scalar_lea.vmem %s0, %s19
    %v21 = vld [vmem:[%s20] sm:%s3]
    %s22 = scalar_lea.vmem [#allocation0], 40
    %23 = vst [vmem:[%s22] sm:%s3] %v21
    %s24 = smul.addr 2, 4
    %s25 = scalar_lea.vmem %s0, %s24
    %v26 = vld [vmem:[%s25] sm:%s3]
    %s27 = scalar_lea.vmem [#allocation0], 32
    %28 = vst [vmem:[%s27] sm:%s3] %v26
    %s29 = smul.addr 2, 3
    %s30 = scalar_lea.vmem %s0, %s29
    %v31 = vld [vmem:[%s30] sm:%s3]
    %s32 = scalar_lea.vmem [#allocation0], 24
    %33 = vst [vmem:[%s32] sm:%s3] %v31
    %s34 = smul.addr 2, 2
    %s35 = scalar_lea.vmem %s0, %s34
    %v36 = vld [vmem:[%s35] sm:%s3]
    %s37 = scalar_lea.vmem [#allocation0], 16
    %38 = vst [vmem:[%s37] sm:%s3] %v36
    %s39 = scalar_lea.vmem %s0, 2
    %v40 = vld [vmem:[%s39] sm:%s3]
    %s41 = scalar_lea.vmem [#allocation0], 8
    %42 = vst [vmem:[%s41] sm:%s3] %v40
    %v43 = vld [vmem:[%s0] sm:%s3]
    %44 = vst [vmem:[#allocation0] sm:%s3] %v43
    %v45 = vld [vmem:[#allocation0] ss:$8 sm:$0xf]
    %v46 = vld [vmem:[#allocation0] ss:$8 sm:$0xf0]
    %vm47 = vcmask 1047556
    %v48 = vsel %vm47, %v46, %v45
    %vm49 = vcmask 523264
    %50 = vst.msk [vmem:[%s1] sm:$0xff] %vm49, %v48
    %s51 = scalar_lea.vmem [#allocation0], 64
    %v52 = vld [vmem:[%s51] sm:$0x1]
    %vm53 = vcmask 523264
    %s54 = scalar_lea.vmem %s1, 8
    %55 = vst.msk [vmem:[%s54] sm:$0x1] %vm53, %v52
    %s56 = scalar_lea.vmem [#allocation0], 1
    %v57 = vld [vmem:[%s56] ss:$8 sm:$0xf]
    %s58 = scalar_lea.vmem [#allocation0], 1
    %v59 = vld [vmem:[%s58] ss:$8 sm:$0xf0]
    %vm60 = vcmask 1047556
    %v61 = vsel %vm60, %v59, %v57
    %62 = vrot.lane.b32.xlu0 %v61, 64
    %v63 = vpop.permute.xlu0 %62
    %vm64 = vcmask 1048064
    %65 = vst.msk [vmem:[%s1] sm:$0xff] %vm64, %v63
    %s66 = scalar_lea.vmem [#allocation0], 65
    %v67 = vld [vmem:[%s66] sm:$0x1]
    %68 = vrot.lane.b32.xlu0 %v67, 64
    %v69 = vpop.permute.xlu0 %68
    %vm70 = vcmask 1048064
    %s71 = scalar_lea.vmem %s1, 8
    %72 = vst.msk [vmem:[%s71] sm:$0x1] %vm70, %v69

// kernel: repvit_block.1
$region0: #{repvit_block.1}
  #allocation0 [shape = 'u32[]', space=smem, size = 0x4, offset = 0x4, fixed_abs, tag = 'smem constant byte address 0x4 - core index']
  #allocation1 [shape = 'u32[144,128]{1,0:T(1,128)}', space=vmem, size = 0x12000, scoped, tag = 'internal scratch']
  #allocation2 [shape = 'f32[18,25,128]{2,1,0:T(8,128)}', space=vmem, size = 0x48000, scoped, tag = 'scratch operand']
  %s0 = inlined_call_operand.vmem [shape: f32[1,16,16,128], index: 0, kind: input, shape index: {}]
  %s1 = inlined_call_operand.vmem [shape: f32[9,128], index: 1, kind: input, shape index: {}]
  %s2 = inlined_call_operand.vmem [shape: f32[1,128], index: 2, kind: input, shape index: {}]
  %s3 = inlined_call_operand.vmem [shape: f32[128,256], index: 3, kind: input, shape index: {}]
  %s4 = inlined_call_operand.vmem [shape: f32[1,256], index: 4, kind: input, shape index: {}]
  %s5 = inlined_call_operand.vmem [shape: f32[256,128], index: 5, kind: input, shape index: {}]
  %s6 = inlined_call_operand.vmem [shape: f32[1,128], index: 6, kind: input, shape index: {}]
  %s7 = inlined_call_operand.vmem [shape: f32[1,256,128], index: 7, kind: output, shape index: {}]
  %s8 = sld [smem:[#allocation0]]
  $region42: #{repvit_block.1} parent=0
    _
  %s10 = ssub.s32 1, %s8
  %s11 = scalar_select 0, %s10, %s8
  // Predicated region
  $region2: #{repvit_block.1} parent=0 // pred_check
    _
  $region3: #{repvit_block.1} parent=0 // pred_check_branch
    %13 = sbr.rel (0) target = $region5
  $region4: #{repvit_block.1} parent=0 // pred_region
    _
  $region5: #{repvit_block.1} parent=0 // pred_fallthru
    _
  // Predicated region
  $region6: #{repvit_block.1} parent=0 // pred_check
    _
  $region7: #{repvit_block.1} parent=0 // pred_check_branch
    %15 = sbr.rel (0) target = $region9
  $region8: #{repvit_block.1} parent=0 // pred_region
    _
  $region9: #{repvit_block.1} parent=0 // pred_fallthru
    _
  // Predicated region
  $region10: #{repvit_block.1} parent=0 // pred_check
    _
  $region11: #{repvit_block.1} parent=0 // pred_check_branch
    %17 = sbr.rel (0) target = $region13
  $region12: #{repvit_block.1} parent=0 // pred_region
    _
  $region13: #{repvit_block.1} parent=0 // pred_fallthru
    _
  // Predicated region
  $region14: #{repvit_block.1} parent=0 // pred_check
    _
  $region15: #{repvit_block.1} parent=0 // pred_check_branch
    %19 = sbr.rel (0) target = $region17
  $region16: #{repvit_block.1} parent=0 // pred_region
    _
  $region17: #{repvit_block.1} parent=0 // pred_fallthru
    _
  // Predicated region
  $region18: #{repvit_block.1} parent=0 // pred_check
    _
  $region19: #{repvit_block.1} parent=0 // pred_check_branch
    %21 = sbr.rel (0) target = $region21
  $region20: #{repvit_block.1} parent=0 // pred_region
    _
  $region21: #{repvit_block.1} parent=0 // pred_fallthru
    _
  // Predicated region
  $region22: #{repvit_block.1} parent=0 // pred_check
    _
  $region23: #{repvit_block.1} parent=0 // pred_check_branch
    %23 = sbr.rel (0) target = $region25
  $region24: #{repvit_block.1} parent=0 // pred_region
    _
  $region25: #{repvit_block.1} parent=0 // pred_fallthru
    _
  // Predicated region
  $region26: #{repvit_block.1} parent=0 // pred_check
    _
  $region27: #{repvit_block.1} parent=0 // pred_check_branch
    %25 = sbr.rel (0) target = $region29
  $region28: #{repvit_block.1} parent=0 // pred_region
    _
  $region29: #{repvit_block.1} parent=0 // pred_fallthru
    _
  %s26 = sadd.s32 0, 0
  %p27 = scmp.lt.s32.totalorder %s26, 0
  %s28 = scalar_select %p27, %s26, 0
  %s29 = smul.addr %s28, 32
  %s30 = smul.addr %s29, 8
  %s31 = scalar_lea.vmem %s7, %s30
  %s32 = sadd.s32 0, 0
  %p33 = scmp.lt.s32.totalorder %s32, 0
  %s34 = scalar_select %p33, %s32, 0
  %s35 = smul.addr %s34, 32
  %s36 = smul.addr %s35, 8
  %s37 = scalar_lea.vmem %s7, %s36
  %s38 = sadd.s32 0, 0
  %p39 = scmp.eq.s32.totalorder 0, 0
  // Predicated region
  $region30: #{repvit_block.1} parent=0 // pred_check
    %p40 = pneg %p39
  $region31: #{repvit_block.1} parent=0 // pred_check_branch
    %42 = sbr.rel (%p40) target = $region33
  $region32: #{repvit_block.1} parent=0 // pred_region
    %43 = vst [vmem:[#allocation2] sm:$0xff] 0.0
    %44 = vst [vmem:[#allocation2 + $0x8] sm:$0xff] 0.0
    %45 = vst [vmem:[#allocation2 + $0x10] sm:$0xff] 0.0
    %46 = vst [vmem:[#allocation2 + $0x18] sm:$0x1] 0.0
    %s47 = scalar_lea.vmem [#allocation2], 544
    %48 = vst [vmem:[%s47] sm:$0xff] 0.0
    %49 = vst [vmem:[%s47 + $0x8] sm:$0xff] 0.0
    %50 = vst [vmem:[%s47 + $0x10] sm:$0xff] 0.0
    %51 = vst [vmem:[%s47 + $0x18] sm:$0x1] 0.0
    %s52 = scalar_lea.vmem [#allocation2], 32
    %53 = vst [vmem:[%s52] sm:$0xff] 0.0
    %54 = vst [vmem:[%s52 + $0x20] sm:$0xff] 0.0
    %55 = vst [vmem:[%s52 + $0x40] sm:$0xff] 0.0
    %56 = vst [vmem:[%s52 + $0x60] sm:$0xff] 0.0
    %57 = vst [vmem:[%s52 + $0x80] sm:$0xff] 0.0
    %58 = vst [vmem:[%s52 + $0xa0] sm:$0xff] 0.0
    %59 = vst [vmem:[%s52 + $0xc0] sm:$0xff] 0.0
    %60 = vst [vmem:[%s52 + $0xe0] sm:$0xff] 0.0
    %61 = vst [vmem:[%s52 + $0x100] sm:$0xff] 0.0
    %62 = vst [vmem:[%s52 + $0x120] sm:$0xff] 0.0
    %63 = vst [vmem:[%s52 + $0x140] sm:$0xff] 0.0
    %64 = vst [vmem:[%s52 + $0x160] sm:$0xff] 0.0
    %65 = vst [vmem:[%s52 + $0x180] sm:$0xff] 0.0
    %66 = vst [vmem:[%s52 + $0x1a0] sm:$0xff] 0.0
    %67 = vst [vmem:[%s52 + $0x1c0] sm:$0xff] 0.0
    %68 = vst [vmem:[%s52 + $0x1e0] sm:$0xff] 0.0
    %69 = vst [vmem:[%s52 + $0x18] sm:$0x1] 0.0
    %70 = vst [vmem:[%s52 + $0x38] sm:$0x1] 0.0
    %71 = vst [vmem:[%s52 + $0x58] sm:$0x1] 0.0
    %72 = vst [vmem:[%s52 + $0x78] sm:$0x1] 0.0
    %73 = vst [vmem:[%s52 + $0x98] sm:$0x1] 0.0
    %74 = vst [vmem:[%s52 + $0xb8] sm:$0x1] 0.0
    %75 = vst [vmem:[%s52 + $0xd8] sm:$0x1] 0.0
    %76 = vst [vmem:[%s52 + $0xf8] sm:$0x1] 0.0
    %77 = vst [vmem:[%s52 + $0x118] sm:$0x1] 0.0
    %78 = vst [vmem:[%s52 + $0x138] sm:$0x1] 0.0
    %79 = vst [vmem:[%s52 + $0x158] sm:$0x1] 0.0
    %80 = vst [vmem:[%s52 + $0x178] sm:$0x1] 0.0
    %81 = vst [vmem:[%s52 + $0x198] sm:$0x1] 0.0
    %82 = vst [vmem:[%s52 + $0x1b8] sm:$0x1] 0.0
    %83 = vst [vmem:[%s52 + $0x1d8] sm:$0x1] 0.0
    %84 = vst [vmem:[%s52 + $0x1f8] sm:$0x1] 0.0
    %v85 = vld [vmem:[%s0] sm:$0xff]
    %v86 = vld [vmem:[%s0 + $0x8] sm:$0xff]
    %v87 = vld [vmem:[%s0 + $0x10] sm:$0xff]
    %v88 = vld [vmem:[%s0 + $0x18] sm:$0xff]
    %v89 = vld [vmem:[%s0 + $0x20] sm:$0xff]
    %v90 = vld [vmem:[%s0 + $0x28] sm:$0xff]
    %v91 = vld [vmem:[%s0 + $0x30] sm:$0xff]
    %v92 = vld [vmem:[%s0 + $0x38] sm:$0xff]
    %v93 = vld [vmem:[%s0 + $0x40] sm:$0xff]
    %v94 = vld [vmem:[%s0 + $0x48] sm:$0xff]
    %v95 = vld [vmem:[%s0 + $0x50] sm:$0xff]
    %v96 = vld [vmem:[%s0 + $0x58] sm:$0xff]
    %v97 = vld [vmem:[%s0 + $0x60] sm:$0xff]
    %v98 = vld [vmem:[%s0 + $0x68] sm:$0xff]
    %v99 = vld [vmem:[%s0 + $0x70] sm:$0xff]
    %v100 = vld [vmem:[%s0 + $0x78] sm:$0xff]
    %v101 = vld [vmem:[%s0 + $0x80] sm:$0xff]
    %v102 = vld [vmem:[%s0 + $0x88] sm:$0xff]
    %v103 = vld [vmem:[%s0 + $0x90] sm:$0xff]
    %v104 = vld [vmem:[%s0 + $0x98] sm:$0xff]
    %v105 = vld [vmem:[%s0 + $0xa0] sm:$0xff]
    %v106 = vld [vmem:[%s0 + $0xa8] sm:$0xff]
    %v107 = vld [vmem:[%s0 + $0xb0] sm:$0xff]
    %v108 = vld [vmem:[%s0 + $0xb8] sm:$0xff]
    %v109 = vld [vmem:[%s0 + $0xc0] sm:$0xff]
    %v110 = vld [vmem:[%s0 + $0xc8] sm:$0xff]
    %v111 = vld [vmem:[%s0 + $0xd0] sm:$0xff]
    %v112 = vld [vmem:[%s0 + $0xd8] sm:$0xff]
    %v113 = vld [vmem:[%s0 + $0xe0] sm:$0xff]
    %v114 = vld [vmem:[%s0 + $0xe8] sm:$0xff]
    %v115 = vld [vmem:[%s0 + $0xf0] sm:$0xff]
    %v116 = vld [vmem:[%s0 + $0xf8] sm:$0xff]
    %117 = vst [vmem:[%s52 + $0x8] sm:$0xff] %v85
    %118 = vst [vmem:[%s52 + $0x10] sm:$0xff] %v86
    %119 = vst [vmem:[%s52 + $0x28] sm:$0xff] %v87
    %120 = vst [vmem:[%s52 + $0x30] sm:$0xff] %v88
    %121 = vst [vmem:[%s52 + $0x48] sm:$0xff] %v89
    %122 = vst [vmem:[%s52 + $0x50] sm:$0xff] %v90
    %123 = vst [vmem:[%s52 + $0x68] sm:$0xff] %v91
    %124 = vst [vmem:[%s52 + $0x70] sm:$0xff] %v92
    %125 = vst [vmem:[%s52 + $0x88] sm:$0xff] %v93
    %126 = vst [vmem:[%s52 + $0x90] sm:$0xff] %v94
    %127 = vst [vmem:[%s52 + $0xa8] sm:$0xff] %v95
    %128 = vst [vmem:[%s52 + $0xb0] sm:$0xff] %v96
    %129 = vst [vmem:[%s52 + $0xc8] sm:$0xff] %v97
    %130 = vst [vmem:[%s52 + $0xd0] sm:$0xff] %v98
    %131 = vst [vmem:[%s52 + $0xe8] sm:$0xff] %v99
    %132 = vst [vmem:[%s52 + $0xf0] sm:$0xff] %v100
    %133 = vst [vmem:[%s52 + $0x108] sm:$0xff] %v101
    %134 = vst [vmem:[%s52 + $0x110] sm:$0xff] %v102
    %135 = vst [vmem:[%s52 + $0x128] sm:$0xff] %v103
    %136 = vst [vmem:[%s52 + $0x130] sm:$0xff] %v104
    %137 = vst [vmem:[%s52 + $0x148] sm:$0xff] %v105
    %138 = vst [vmem:[%s52 + $0x150] sm:$0xff] %v106
    %139 = vst [vmem:[%s52 + $0x168] sm:$0xff] %v107
    %140 = vst [vmem:[%s52 + $0x170] sm:$0xff] %v108
    %141 = vst [vmem:[%s52 + $0x188] sm:$0xff] %v109
    %142 = vst [vmem:[%s52 + $0x190] sm:$0xff] %v110
    %143 = vst [vmem:[%s52 + $0x1a8] sm:$0xff] %v111
    %144 = vst [vmem:[%s52 + $0x1b0] sm:$0xff] %v112
    %145 = vst [vmem:[%s52 + $0x1c8] sm:$0xff] %v113
    %146 = vst [vmem:[%s52 + $0x1d0] sm:$0xff] %v114
    %147 = vst [vmem:[%s52 + $0x1e8] sm:$0xff] %v115
    %148 = vst [vmem:[%s52 + $0x1f0] sm:$0xff] %v116
  $region33: #{repvit_block.1} parent=0 // pred_fallthru
    _
  %s149 = smul.u32 0, 16
  %s150 = smul.u32 %s149, 32
  %s151 = scalar_lea.vmem [#allocation2], %s150
  %v152 = vld [vmem:[%s151 + $0x7] sm:$0xff]
  %v153 = vld [vmem:[%s151 + $0xf] sm:$0xff]
  %v154 = vld [vmem:[%s151 + $0x27] sm:$0xff]
  %v155 = vld [vmem:[%s151 + $0x2f] sm:$0xff]
  %v156 = vld [vmem:[%s151 + $0x47] sm:$0xff]
  %v157 = vld [vmem:[%s151 + $0x4f] sm:$0xff]
  %v158 = vld [vmem:[%s151 + $0x67] sm:$0xff]
  %v159 = vld [vmem:[%s151 + $0x6f] sm:$0xff]
  %v160 = vld [vmem:[%s151 + $0x87] sm:$0xff]
  %v161 = vld [vmem:[%s151 + $0x8f] sm:$0xff]
  %v162 = vld [vmem:[%s151 + $0xa7] sm:$0xff]
  %v163 = vld [vmem:[%s151 + $0xaf] sm:$0xff]
  %v164 = vld [vmem:[%s151 + $0xc7] sm:$0xff]
  %v165 = vld [vmem:[%s151 + $0xcf] sm:$0xff]
  %v166 = vld [vmem:[%s151 + $0xe7] sm:$0xff]
  %v167 = vld [vmem:[%s151 + $0xef] sm:$0xff]
  %v168 = vld [vmem:[%s151 + $0x107] sm:$0xff]
  %v169 = vld [vmem:[%s151 + $0x10f] sm:$0xff]
  %v170 = vld [vmem:[%s151 + $0x127] sm:$0xff]
  %v171 = vld [vmem:[%s151 + $0x12f] sm:$0xff]
  %v172 = vld [vmem:[%s151 + $0x147] sm:$0xff]
  %v173 = vld [vmem:[%s151 + $0x14f] sm:$0xff]
  %v174 = vld [vmem:[%s151 + $0x167] sm:$0xff]
  %v175 = vld [vmem:[%s151 + $0x16f] sm:$0xff]
  %v176 = vld [vmem:[%s151 + $0x187] sm:$0xff]
  %v177 = vld [vmem:[%s151 + $0x18f] sm:$0xff]
  %v178 = vld [vmem:[%s151 + $0x1a7] sm:$0xff]
  %v179 = vld [vmem:[%s151 + $0x1af] sm:$0xff]
  %v180 = vld [vmem:[%s151 + $0x1c7] sm:$0xff]
  %v181 = vld [vmem:[%s151 + $0x1cf] sm:$0xff]
  %v182 = vld [vmem:[%s151 + $0x1e7] sm:$0xff]
  %v183 = vld [vmem:[%s151 + $0x1ef] sm:$0xff]
  %v184 = vld [vmem:[%s1] sm:$0x1]
  %v185 = vlaneseq
  %v186 = vshrl.u32 %v185, 7
  %v187 = vsub.s32 0, %v186
  %v188 = vrot.slane %v184, %v187
  %v189 = vmul.f32 %v152, %v188
  %v190 = vmul.f32 %v153, %v188
  %v191 = vmul.f32 %v154, %v188
  %v192 = vmul.f32 %v155, %v188
  %v193 = vmul.f32 %v156, %v188
  %v194 = vmul.f32 %v157, %v188
  %v195 = vmul.f32 %v158, %v188
  %v196 = vmul.f32 %v159, %v188
  %v197 = vmul.f32 %v160, %v188
  %v198 = vmul.f32 %v161, %v188
  %v199 = vmul.f32 %v162, %v188
  %v200 = vmul.f32 %v163, %v188
  %v201 = vmul.f32 %v164, %v188
  %v202 = vmul.f32 %v165, %v188
  %v203 = vmul.f32 %v166, %v188
  %v204 = vmul.f32 %v167, %v188
  %v205 = vmul.f32 %v168, %v188
  %v206 = vmul.f32 %v169, %v188
  %v207 = vmul.f32 %v170, %v188
  %v208 = vmul.f32 %v171, %v188
  %v209 = vmul.f32 %v172, %v188
  %v210 = vmul.f32 %v173, %v188
  %v211 = vmul.f32 %v174, %v188
  %v212 = vmul.f32 %v175, %v188
  %v213 = vmul.f32 %v176, %v188
  %v214 = vmul.f32 %v177, %v188
  %v215 = vmul.f32 %v178, %v188
  %v216 = vmul.f32 %v179, %v188
  %v217 = vmul.f32 %v180, %v188
  %v218 = vmul.f32 %v181, %v188
  %v219 = vmul.f32 %v182, %v188
  %v220 = vmul.f32 %v183, %v188
  %v221 = vld [vmem:[%s151 + $0x8] sm:$0xff]
  %v222 = vld [vmem:[%s151 + $0x10] sm:$0xff]
  %v223 = vld [vmem:[%s151 + $0x28] sm:$0xff]
  %v224 = vld [vmem:[%s151 + $0x30] sm:$0xff]
  %v225 = vld [vmem:[%s151 + $0x48] sm:$0xff]
  %v226 = vld [vmem:[%s151 + $0x50] sm:$0xff]
  %v227 = vld [vmem:[%s151 + $0x68] sm:$0xff]
  %v228 = vld [vmem:[%s151 + $0x70] sm:$0xff]
  %v229 = vld [vmem:[%s151 + $0x88] sm:$0xff]
  %v230 = vld [vmem:[%s151 + $0x90] sm:$0xff]
  %v231 = vld [vmem:[%s151 + $0xa8] sm:$0xff]
  %v232 = vld [vmem:[%s151 + $0xb0] sm:$0xff]
  %v233 = vld [vmem:[%s151 + $0xc8] sm:$0xff]
  %v234 = vld [vmem:[%s151 + $0xd0] sm:$0xff]
  %v235 = vld [vmem:[%s151 + $0xe8] sm:$0xff]
  %v236 = vld [vmem:[%s151 + $0xf0] sm:$0xff]
  %v237 = vld [vmem:[%s151 + $0x108] sm:$0xff]
  %v238 = vld [vmem:[%s151 + $0x110] sm:$0xff]
  %v239 = vld [vmem:[%s151 + $0x128] sm:$0xff]
  %v240 = vld [vmem:[%s151 + $0x130] sm:$0xff]
  %v241 = vld [vmem:[%s151 + $0x148] sm:$0xff]
  %v242 = vld [vmem:[%s151 + $0x150] sm:$0xff]
  %v243 = vld [vmem:[%s151 + $0x168] sm:$0xff]
  %v244 = vld [vmem:[%s151 + $0x170] sm:$0xff]
  %v245 = vld [vmem:[%s151 + $0x188] sm:$0xff]
  %v246 = vld [vmem:[%s151 + $0x190] sm:$0xff]
  %v247 = vld [vmem:[%s151 + $0x1a8] sm:$0xff]
  %v248 = vld [vmem:[%s151 + $0x1b0] sm:$0xff]
  %v249 = vld [vmem:[%s151 + $0x1c8] sm:$0xff]
  %v250 = vld [vmem:[%s151 + $0x1d0] sm:$0xff]
  %v251 = vld [vmem:[%s151 + $0x1e8] sm:$0xff]
  %v252 = vld [vmem:[%s151 + $0x1f0] sm:$0xff]
  %v253 = vld [vmem:[%s1 + $0x1] sm:$0x1]
  %v254 = vlaneseq
  %v255 = vshrl.u32 %v254, 7
  %v256 = vsub.s32 0, %v255
  %v257 = vrot.slane %v253, %v256
  %v258 = vmul.f32 %v221, %v257
  %v259 = vmul.f32 %v222, %v257
  %v260 = vmul.f32 %v223, %v257
  %v261 = vmul.f32 %v224, %v257
  %v262 = vmul.f32 %v225, %v257
  %v263 = vmul.f32 %v226, %v257
  %v264 = vmul.f32 %v227, %v257
  %v265 = vmul.f32 %v228, %v257
  %v266 = vmul.f32 %v229, %v257
  %v267 = vmul.f32 %v230, %v257
  %v268 = vmul.f32 %v231, %v257
  %v269 = vmul.f32 %v232, %v257
  %v270 = vmul.f32 %v233, %v257
  %v271 = vmul.f32 %v234, %v257
  %v272 = vmul.f32 %v235, %v257
  %v273 = vmul.f32 %v236, %v257
  %v274 = vmul.f32 %v237, %v257
  %v275 = vmul.f32 %v238, %v257
  %v276 = vmul.f32 %v239, %v257
  %v277 = vmul.f32 %v240, %v257
  %v278 = vmul.f32 %v241, %v257
  %v279 = vmul.f32 %v242, %v257
  %v280 = vmul.f32 %v243, %v257
  %v281 = vmul.f32 %v244, %v257
  %v282 = vmul.f32 %v245, %v257
  %v283 = vmul.f32 %v246, %v257
  %v284 = vmul.f32 %v247, %v257
  %v285 = vmul.f32 %v248, %v257
  %v286 = vmul.f32 %v249, %v257
  %v287 = vmul.f32 %v250, %v257
  %v288 = vmul.f32 %v251, %v257
  %v289 = vmul.f32 %v252, %v257
  %v290 = vadd.f32 %v189, %v258
  %v291 = vadd.f32 %v190, %v259
  %v292 = vadd.f32 %v191, %v260
  %v293 = vadd.f32 %v192, %v261
  %v294 = vadd.f32 %v193, %v262
  %v295 = vadd.f32 %v194, %v263
  %v296 = vadd.f32 %v195, %v264
  %v297 = vadd.f32 %v196, %v265
  %v298 = vadd.f32 %v197, %v266
  %v299 = vadd.f32 %v198, %v267
  %v300 = vadd.f32 %v199, %v268
  %v301 = vadd.f32 %v200, %v269
  %v302 = vadd.f32 %v201, %v270
  %v303 = vadd.f32 %v202, %v271
  %v304 = vadd.f32 %v203, %v272
  %v305 = vadd.f32 %v204, %v273
  %v306 = vadd.f32 %v205, %v274
  %v307 = vadd.f32 %v206, %v275
  %v308 = vadd.f32 %v207, %v276
  %v309 = vadd.f32 %v208, %v277
  %v310 = vadd.f32 %v209, %v278
  %v311 = vadd.f32 %v210, %v279
  %v312 = vadd.f32 %v211, %v280
  %v313 = vadd.f32 %v212, %v281
  %v314 = vadd.f32 %v213, %v282
  %v315 = vadd.f32 %v214, %v283
  %v316 = vadd.f32 %v215, %v284
  %v317 = vadd.f32 %v216, %v285
  %v318 = vadd.f32 %v217, %v286
  %v319 = vadd.f32 %v218, %v287
  %v320 = vadd.f32 %v219, %v288
  %v321 = vadd.f32 %v220, %v289
  %v322 = vld [vmem:[%s151 + $0x9] sm:$0xff]
  %v323 = vld [vmem:[%s151 + $0x11] sm:$0xff]
  %v324 = vld [vmem:[%s151 + $0x29] sm:$0xff]
  %v325 = vld [vmem:[%s151 + $0x31] sm:$0xff]
  %v326 = vld [vmem:[%s151 + $0x49] sm:$0xff]
  %v327 = vld [vmem:[%s151 + $0x51] sm:$0xff]
  %v328 = vld [vmem:[%s151 + $0x69] sm:$0xff]
  %v329 = vld [vmem:[%s151 + $0x71] sm:$0xff]
  %v330 = vld [vmem:[%s151 + $0x89] sm:$0xff]
  %v331 = vld [vmem:[%s151 + $0x91] sm:$0xff]
  %v332 = vld [vmem:[%s151 + $0xa9] sm:$0xff]
  %v333 = vld [vmem:[%s151 + $0xb1] sm:$0xff]
  %v334 = vld [vmem:[%s151 + $0xc9] sm:$0xff]
  %v335 = vld [vmem:[%s151 + $0xd1] sm:$0xff]
  %v336 = vld [vmem:[%s151 + $0xe9] sm:$0xff]
  %v337 = vld [vmem:[%s151 + $0xf1] sm:$0xff]
  %v338 = vld [vmem:[%s151 + $0x109] sm:$0xff]
  %v339 = vld [vmem:[%s151 + $0x111] sm:$0xff]
  %v340 = vld [vmem:[%s151 + $0x129] sm:$0xff]
  %v341 = vld [vmem:[%s151 + $0x131] sm:$0xff]
  %v342 = vld [vmem:[%s151 + $0x149] sm:$0xff]
  %v343 = vld [vmem:[%s151 + $0x151] sm:$0xff]
  %v344 = vld [vmem:[%s151 + $0x169] sm:$0xff]
  %v345 = vld [vmem:[%s151 + $0x171] sm:$0xff]
  %v346 = vld [vmem:[%s151 + $0x189] sm:$0xff]
  %v347 = vld [vmem:[%s151 + $0x191] sm:$0xff]
  %v348 = vld [vmem:[%s151 + $0x1a9] sm:$0xff]
  %v349 = vld [vmem:[%s151 + $0x1b1] sm:$0xff]
  %v350 = vld [vmem:[%s151 + $0x1c9] sm:$0xff]
  %v351 = vld [vmem:[%s151 + $0x1d1] sm:$0xff]
  %v352 = vld [vmem:[%s151 + $0x1e9] sm:$0xff]
  %v353 = vld [vmem:[%s151 + $0x1f1] sm:$0xff]
  %v354 = vld [vmem:[%s1 + $0x2] sm:$0x1]
  %v355 = vlaneseq
  %v356 = vshrl.u32 %v355, 7
  %v357 = vsub.s32 0, %v356
  %v358 = vrot.slane %v354, %v357
  %v359 = vmul.f32 %v322, %v358
  %v360 = vmul.f32 %v323, %v358
  %v361 = vmul.f32 %v324, %v358
  %v362 = vmul.f32 %v325, %v358
  %v363 = vmul.f32 %v326, %v358
  %v364 = vmul.f32 %v327, %v358
  %v365 = vmul.f32 %v328, %v358
  %v366 = vmul.f32 %v329, %v358
  %v367 = vmul.f32 %v330, %v358
  %v368 = vmul.f32 %v331, %v358
  %v369 = vmul.f32 %v332, %v358
  %v370 = vmul.f32 %v333, %v358
  %v371 = vmul.f32 %v334, %v358
  %v372 = vmul.f32 %v335, %v358
  %v373 = vmul.f32 %v336, %v358
  %v374 = vmul.f32 %v337, %v358
  %v375 = vmul.f32 %v338, %v358
  %v376 = vmul.f32 %v339, %v358
  %v377 = vmul.f32 %v340, %v358
  %v378 = vmul.f32 %v341, %v358
  %v379 = vmul.f32 %v342, %v358
  %v380 = vmul.f32 %v343, %v358
  %v381 = vmul.f32 %v344, %v358
  %v382 = vmul.f32 %v345, %v358
  %v383 = vmul.f32 %v346, %v358
  %v384 = vmul.f32 %v347, %v358
  %v385 = vmul.f32 %v348, %v358
  %v386 = vmul.f32 %v349, %v358
  %v387 = vmul.f32 %v350, %v358
  %v388 = vmul.f32 %v351, %v358
  %v389 = vmul.f32 %v352, %v358
  %v390 = vmul.f32 %v353, %v358
  %v391 = vadd.f32 %v290, %v359
  %v392 = vadd.f32 %v291, %v360
  %v393 = vadd.f32 %v292, %v361
  %v394 = vadd.f32 %v293, %v362
  %v395 = vadd.f32 %v294, %v363
  %v396 = vadd.f32 %v295, %v364
  %v397 = vadd.f32 %v296, %v365
  %v398 = vadd.f32 %v297, %v366
  %v399 = vadd.f32 %v298, %v367
  %v400 = vadd.f32 %v299, %v368
  %v401 = vadd.f32 %v300, %v369
  %v402 = vadd.f32 %v301, %v370
  %v403 = vadd.f32 %v302, %v371
  %v404 = vadd.f32 %v303, %v372
  %v405 = vadd.f32 %v304, %v373
  %v406 = vadd.f32 %v305, %v374
  %v407 = vadd.f32 %v306, %v375
  %v408 = vadd.f32 %v307, %v376
  %v409 = vadd.f32 %v308, %v377
  %v410 = vadd.f32 %v309, %v378
  %v411 = vadd.f32 %v310, %v379
  %v412 = vadd.f32 %v311, %v380
  %v413 = vadd.f32 %v312, %v381
  %v414 = vadd.f32 %v313, %v382
  %v415 = vadd.f32 %v314, %v383
  %v416 = vadd.f32 %v315, %v384
  %v417 = vadd.f32 %v316, %v385
  %v418 = vadd.f32 %v317, %v386
  %v419 = vadd.f32 %v318, %v387
  %v420 = vadd.f32 %v319, %v388
  %v421 = vadd.f32 %v320, %v389
  %v422 = vadd.f32 %v321, %v390
  %s423 = sadd.s32 %s149, 1
  %s424 = smul.u32 %s423, 32
  %s425 = scalar_lea.vmem [#allocation2], %s424
  %v426 = vld [vmem:[%s425 + $0x7] sm:$0xff]
  %v427 = vld [vmem:[%s425 + $0xf] sm:$0xff]
  %v428 = vld [vmem:[%s425 + $0x27] sm:$0xff]
  %v429 = vld [vmem:[%s425 + $0x2f] sm:$0xff]
  %v430 = vld [vmem:[%s425 + $0x47] sm:$0xff]
  %v431 = vld [vmem:[%s425 + $0x4f] sm:$0xff]
  %v432 = vld [vmem:[%s425 + $0x67] sm:$0xff]
  %v433 = vld [vmem:[%s425 + $0x6f] sm:$0xff]
  %v434 = vld [vmem:[%s425 + $0x87] sm:$0xff]
  %v435 = vld [vmem:[%s425 + $0x8f] sm:$0xff]
  %v436 = vld [vmem:[%s425 + $0xa7] sm:$0xff]
  %v437 = vld [vmem:[%s425 + $0xaf] sm:$0xff]
  %v438 = vld [vmem:[%s425 + $0xc7] sm:$0xff]
  %v439 = vld [vmem:[%s425 + $0xcf] sm:$0xff]
  %v440 = vld [vmem:[%s425 + $0xe7] sm:$0xff]
  %v441 = vld [vmem:[%s425 + $0xef] sm:$0xff]
  %v442 = vld [vmem:[%s425 + $0x107] sm:$0xff]
  %v443 = vld [vmem:[%s425 + $0x10f] sm:$0xff]
  %v444 = vld [vmem:[%s425 + $0x127] sm:$0xff]
  %v445 = vld [vmem:[%s425 + $0x12f] sm:$0xff]
  %v446 = vld [vmem:[%s425 + $0x147] sm:$0xff]
  %v447 = vld [vmem:[%s425 + $0x14f] sm:$0xff]
  %v448 = vld [vmem:[%s425 + $0x167] sm:$0xff]
  %v449 = vld [vmem:[%s425 + $0x16f] sm:$0xff]
  %v450 = vld [vmem:[%s425 + $0x187] sm:$0xff]
  %v451 = vld [vmem:[%s425 + $0x18f] sm:$0xff]
  %v452 = vld [vmem:[%s425 + $0x1a7] sm:$0xff]
  %v453 = vld [vmem:[%s425 + $0x1af] sm:$0xff]
  %v454 = vld [vmem:[%s425 + $0x1c7] sm:$0xff]
  %v455 = vld [vmem:[%s425 + $0x1cf] sm:$0xff]
  %v456 = vld [vmem:[%s425 + $0x1e7] sm:$0xff]
  %v457 = vld [vmem:[%s425 + $0x1ef] sm:$0xff]
  %v458 = vld [vmem:[%s1 + $0x3] sm:$0x1]
  %v459 = vlaneseq
  %v460 = vshrl.u32 %v459, 7
  %v461 = vsub.s32 0, %v460
  %v462 = vrot.slane %v458, %v461
  %v463 = vmul.f32 %v426, %v462
  %v464 = vmul.f32 %v427, %v462
  %v465 = vmul.f32 %v428, %v462
  %v466 = vmul.f32 %v429, %v462
  %v467 = vmul.f32 %v430, %v462
  %v468 = vmul.f32 %v431, %v462
  %v469 = vmul.f32 %v432, %v462
  %v470 = vmul.f32 %v433, %v462
  %v471 = vmul.f32 %v434, %v462
  %v472 = vmul.f32 %v435, %v462
  %v473 = vmul.f32 %v436, %v462
  %v474 = vmul.f32 %v437, %v462
  %v475 = vmul.f32 %v438, %v462
  %v476 = vmul.f32 %v439, %v462
  %v477 = vmul.f32 %v440, %v462
  %v478 = vmul.f32 %v441, %v462
  %v479 = vmul.f32 %v442, %v462
  %v480 = vmul.f32 %v443, %v462
  %v481 = vmul.f32 %v444, %v462
  %v482 = vmul.f32 %v445, %v462
  %v483 = vmul.f32 %v446, %v462
  %v484 = vmul.f32 %v447, %v462
  %v485 = vmul.f32 %v448, %v462
  %v486 = vmul.f32 %v449, %v462
  %v487 = vmul.f32 %v450, %v462
  %v488 = vmul.f32 %v451, %v462
  %v489 = vmul.f32 %v452, %v462
  %v490 = vmul.f32 %v453, %v462
  %v491 = vmul.f32 %v454, %v462
  %v492 = vmul.f32 %v455, %v462
  %v493 = vmul.f32 %v456, %v462
  %v494 = vmul.f32 %v457, %v462
  %v495 = vadd.f32 %v391, %v463
  %v496 = vadd.f32 %v392, %v464
  %v497 = vadd.f32 %v393, %v465
  %v498 = vadd.f32 %v394, %v466
  %v499 = vadd.f32 %v395, %v467
  %v500 = vadd.f32 %v396, %v468
  %v501 = vadd.f32 %v397, %v469
  %v502 = vadd.f32 %v398, %v470
  %v503 = vadd.f32 %v399, %v471
  %v504 = vadd.f32 %v400, %v472
  %v505 = vadd.f32 %v401, %v473
  %v506 = vadd.f32 %v402, %v474
  %v507 = vadd.f32 %v403, %v475
  %v508 = vadd.f32 %v404, %v476
  %v509 = vadd.f32 %v405, %v477
  %v510 = vadd.f32 %v406, %v478
  %v511 = vadd.f32 %v407, %v479
  %v512 = vadd.f32 %v408, %v480
  %v513 = vadd.f32 %v409, %v481
  %v514 = vadd.f32 %v410, %v482
  %v515 = vadd.f32 %v411, %v483
  %v516 = vadd.f32 %v412, %v484
  %v517 = vadd.f32 %v413, %v485
  %v518 = vadd.f32 %v414, %v486
  %v519 = vadd.f32 %v415, %v487
  %v520 = vadd.f32 %v416, %v488
  %v521 = vadd.f32 %v417, %v489
  %v522 = vadd.f32 %v418, %v490
  %v523 = vadd.f32 %v419, %v491
  %v524 = vadd.f32 %v420, %v492
  %v525 = vadd.f32 %v421, %v493
  %v526 = vadd.f32 %v422, %v494
  %v527 = vld [vmem:[%s425 + $0x8] sm:$0xff]
  %v528 = vld [vmem:[%s425 + $0x10] sm:$0xff]
  %v529 = vld [vmem:[%s425 + $0x28] sm:$0xff]
  %v530 = vld [vmem:[%s425 + $0x30] sm:$0xff]
  %v531 = vld [vmem:[%s425 + $0x48] sm:$0xff]
  %v532 = vld [vmem:[%s425 + $0x50] sm:$0xff]
  %v533 = vld [vmem:[%s425 + $0x68] sm:$0xff]
  %v534 = vld [vmem:[%s425 + $0x70] sm:$0xff]
  %v535 = vld [vmem:[%s425 + $0x88] sm:$0xff]
  %v536 = vld [vmem:[%s425 + $0x90] sm:$0xff]
  %v537 = vld [vmem:[%s425 + $0xa8] sm:$0xff]
  %v538 = vld [vmem:[%s425 + $0xb0] sm:$0xff]
  %v539 = vld [vmem:[%s425 + $0xc8] sm:$0xff]
  %v540 = vld [vmem:[%s425 + $0xd0] sm:$0xff]
  %v541 = vld [vmem:[%s425 + $0xe8] sm:$0xff]
  %v542 = vld [vmem:[%s425 + $0xf0] sm:$0xff]
  %v543 = vld [vmem:[%s425 + $0x108] sm:$0xff]
  %v544 = vld [vmem:[%s425 + $0x110] sm:$0xff]
  %v545 = vld [vmem:[%s425 + $0x128] sm:$0xff]
  %v546 = vld [vmem:[%s425 + $0x130] sm:$0xff]
  %v547 = vld [vmem:[%s425 + $0x148] sm:$0xff]
  %v548 = vld [vmem:[%s425 + $0x150] sm:$0xff]
  %v549 = vld [vmem:[%s425 + $0x168] sm:$0xff]
  %v550 = vld [vmem:[%s425 + $0x170] sm:$0xff]
  %v551 = vld [vmem:[%s425 + $0x188] sm:$0xff]
  %v552 = vld [vmem:[%s425 + $0x190] sm:$0xff]
  %v553 = vld [vmem:[%s425 + $0x1a8] sm:$0xff]
  %v554 = vld [vmem:[%s425 + $0x1b0] sm:$0xff]
  %v555 = vld [vmem:[%s425 + $0x1c8] sm:$0xff]
  %v556 = vld [vmem:[%s425 + $0x1d0] sm:$0xff]
  %v557 = vld [vmem:[%s425 + $0x1e8] sm:$0xff]
  %v558 = vld [vmem:[%s425 + $0x1f0] sm:$0xff]
  %v559 = vld [vmem:[%s1 + $0x4] sm:$0x1]
  %v560 = vlaneseq
  %v561 = vshrl.u32 %v560, 7
  %v562 = vsub.s32 0, %v561
  %v563 = vrot.slane %v559, %v562
  %v564 = vmul.f32 %v527, %v563
  %v565 = vmul.f32 %v528, %v563
  %v566 = vmul.f32 %v529, %v563
  %v567 = vmul.f32 %v530, %v563
  %v568 = vmul.f32 %v531, %v563
  %v569 = vmul.f32 %v532, %v563
  %v570 = vmul.f32 %v533, %v563
  %v571 = vmul.f32 %v534, %v563
  %v572 = vmul.f32 %v535, %v563
  %v573 = vmul.f32 %v536, %v563
  %v574 = vmul.f32 %v537, %v563
  %v575 = vmul.f32 %v538, %v563
  %v576 = vmul.f32 %v539, %v563
  %v577 = vmul.f32 %v540, %v563
  %v578 = vmul.f32 %v541, %v563
  %v579 = vmul.f32 %v542, %v563
  %v580 = vmul.f32 %v543, %v563
  %v581 = vmul.f32 %v544, %v563
  %v582 = vmul.f32 %v545, %v563
  %v583 = vmul.f32 %v546, %v563
  %v584 = vmul.f32 %v547, %v563
  %v585 = vmul.f32 %v548, %v563
  %v586 = vmul.f32 %v549, %v563
  %v587 = vmul.f32 %v550, %v563
  %v588 = vmul.f32 %v551, %v563
  %v589 = vmul.f32 %v552, %v563
  %v590 = vmul.f32 %v553, %v563
  %v591 = vmul.f32 %v554, %v563
  %v592 = vmul.f32 %v555, %v563
  %v593 = vmul.f32 %v556, %v563
  %v594 = vmul.f32 %v557, %v563
  %v595 = vmul.f32 %v558, %v563
  %v596 = vadd.f32 %v495, %v564
  %v597 = vadd.f32 %v496, %v565
  %v598 = vadd.f32 %v497, %v566
  %v599 = vadd.f32 %v498, %v567
  %v600 = vadd.f32 %v499, %v568
  %v601 = vadd.f32 %v500, %v569
  %v602 = vadd.f32 %v501, %v570
  %v603 = vadd.f32 %v502, %v571
  %v604 = vadd.f32 %v503, %v572
  %v605 = vadd.f32 %v504, %v573
  %v606 = vadd.f32 %v505, %v574
  %v607 = vadd.f32 %v506, %v575
  %v608 = vadd.f32 %v507, %v576
  %v609 = vadd.f32 %v508, %v577
  %v610 = vadd.f32 %v509, %v578
  %v611 = vadd.f32 %v510, %v579
  %v612 = vadd.f32 %v511, %v580
  %v613 = vadd.f32 %v512, %v581
  %v614 = vadd.f32 %v513, %v582
  %v615 = vadd.f32 %v514, %v583
  %v616 = vadd.f32 %v515, %v584
  %v617 = vadd.f32 %v516, %v585
  %v618 = vadd.f32 %v517, %v586
  %v619 = vadd.f32 %v518, %v587
  %v620 = vadd.f32 %v519, %v588
  %v621 = vadd.f32 %v520, %v589
  %v622 = vadd.f32 %v521, %v590
  %v623 = vadd.f32 %v522, %v591
  %v624 = vadd.f32 %v523, %v592
  %v625 = vadd.f32 %v524, %v593
  %v626 = vadd.f32 %v525, %v594
  %v627 = vadd.f32 %v526, %v595
  %v628 = vld [vmem:[%s425 + $0x9] sm:$0xff]
  %v629 = vld [vmem:[%s425 + $0x11] sm:$0xff]
  %v630 = vld [vmem:[%s425 + $0x29] sm:$0xff]
  %v631 = vld [vmem:[%s425 + $0x31] sm:$0xff]
  %v632 = vld [vmem:[%s425 + $0x49] sm:$0xff]
  %v633 = vld [vmem:[%s425 + $0x51] sm:$0xff]
  %v634 = vld [vmem:[%s425 + $0x69] sm:$0xff]
  %v635 = vld [vmem:[%s425 + $0x71] sm:$0xff]
  %v636 = vld [vmem:[%s425 + $0x89] sm:$0xff]
  %v637 = vld [vmem:[%s425 + $0x91] sm:$0xff]
  %v638 = vld [vmem:[%s425 + $0xa9] sm:$0xff]
  %v639 = vld [vmem:[%s425 + $0xb1] sm:$0xff]
  %v640 = vld [vmem:[%s425 + $0xc9] sm:$0xff]
  %v641 = vld [vmem:[%s425 + $0xd1] sm:$0xff]
  %v642 = vld [vmem:[%s425 + $0xe9] sm:$0xff]
  %v643 = vld [vmem:[%s425 + $0xf1] sm:$0xff]
  %v644 = vld [vmem:[%s425 + $0x109] sm:$0xff]
  %v645 = vld [vmem:[%s425 + $0x111] sm:$0xff]
  %v646 = vld [vmem:[%s425 + $0x129] sm:$0xff]
  %v647 = vld [vmem:[%s425 + $0x131] sm:$0xff]
  %v648 = vld [vmem:[%s425 + $0x149] sm:$0xff]
  %v649 = vld [vmem:[%s425 + $0x151] sm:$0xff]
  %v650 = vld [vmem:[%s425 + $0x169] sm:$0xff]
  %v651 = vld [vmem:[%s425 + $0x171] sm:$0xff]
  %v652 = vld [vmem:[%s425 + $0x189] sm:$0xff]
  %v653 = vld [vmem:[%s425 + $0x191] sm:$0xff]
  %v654 = vld [vmem:[%s425 + $0x1a9] sm:$0xff]
  %v655 = vld [vmem:[%s425 + $0x1b1] sm:$0xff]
  %v656 = vld [vmem:[%s425 + $0x1c9] sm:$0xff]
  %v657 = vld [vmem:[%s425 + $0x1d1] sm:$0xff]
  %v658 = vld [vmem:[%s425 + $0x1e9] sm:$0xff]
  %v659 = vld [vmem:[%s425 + $0x1f1] sm:$0xff]
  %v660 = vld [vmem:[%s1 + $0x5] sm:$0x1]
  %v661 = vlaneseq
  %v662 = vshrl.u32 %v661, 7
  %v663 = vsub.s32 0, %v662
  %v664 = vrot.slane %v660, %v663
  %v665 = vmul.f32 %v628, %v664
  %v666 = vmul.f32 %v629, %v664
  %v667 = vmul.f32 %v630, %v664
  %v668 = vmul.f32 %v631, %v664
  %v669 = vmul.f32 %v632, %v664
  %v670 = vmul.f32 %v633, %v664
  %v671 = vmul.f32 %v634, %v664
  %v672 = vmul.f32 %v635, %v664
  %v673 = vmul.f32 %v636, %v664
  %v674 = vmul.f32 %v637, %v664
  %v675 = vmul.f32 %v638, %v664
  %v676 = vmul.f32 %v639, %v664
  %v677 = vmul.f32 %v640, %v664
  %v678 = vmul.f32 %v641, %v664
  %v679 = vmul.f32 %v642, %v664
  %v680 = vmul.f32 %v643, %v664
  %v681 = vmul.f32 %v644, %v664
  %v682 = vmul.f32 %v645, %v664
  %v683 = vmul.f32 %v646, %v664
  %v684 = vmul.f32 %v647, %v664
  %v685 = vmul.f32 %v648, %v664
  %v686 = vmul.f32 %v649, %v664
  %v687 = vmul.f32 %v650, %v664
  %v688 = vmul.f32 %v651, %v664
  %v689 = vmul.f32 %v652, %v664
  %v690 = vmul.f32 %v653, %v664
  %v691 = vmul.f32 %v654, %v664
  %v692 = vmul.f32 %v655, %v664
  %v693 = vmul.f32 %v656, %v664
  %v694 = vmul.f32 %v657, %v664
  %v695 = vmul.f32 %v658, %v664
  %v696 = vmul.f32 %v659, %v664
  %v697 = vadd.f32 %v596, %v665
  %v698 = vadd.f32 %v597, %v666
  %v699 = vadd.f32 %v598, %v667
  %v700 = vadd.f32 %v599, %v668
  %v701 = vadd.f32 %v600, %v669
  %v702 = vadd.f32 %v601, %v670
  %v703 = vadd.f32 %v602, %v671
  %v704 = vadd.f32 %v603, %v672
  %v705 = vadd.f32 %v604, %v673
  %v706 = vadd.f32 %v605, %v674
  %v707 = vadd.f32 %v606, %v675
  %v708 = vadd.f32 %v607, %v676
  %v709 = vadd.f32 %v608, %v677
  %v710 = vadd.f32 %v609, %v678
  %v711 = vadd.f32 %v610, %v679
  %v712 = vadd.f32 %v611, %v680
  %v713 = vadd.f32 %v612, %v681
  %v714 = vadd.f32 %v613, %v682
  %v715 = vadd.f32 %v614, %v683
  %v716 = vadd.f32 %v615, %v684
  %v717 = vadd.f32 %v616, %v685
  %v718 = vadd.f32 %v617, %v686
  %v719 = vadd.f32 %v618, %v687
  %v720 = vadd.f32 %v619, %v688
  %v721 = vadd.f32 %v620, %v689
  %v722 = vadd.f32 %v621, %v690
  %v723 = vadd.f32 %v622, %v691
  %v724 = vadd.f32 %v623, %v692
  %v725 = vadd.f32 %v624, %v693
  %v726 = vadd.f32 %v625, %v694
  %v727 = vadd.f32 %v626, %v695
  %v728 = vadd.f32 %v627, %v696
  %s729 = sadd.s32 %s149, 2
  %s730 = smul.u32 %s729, 32
  %s731 = scalar_lea.vmem [#allocation2], %s730
  %v732 = vld [vmem:[%s731 + $0x7] sm:$0xff]
  %v733 = vld [vmem:[%s731 + $0xf] sm:$0xff]
  %v734 = vld [vmem:[%s731 + $0x27] sm:$0xff]
  %v735 = vld [vmem:[%s731 + $0x2f] sm:$0xff]
  %v736 = vld [vmem:[%s731 + $0x47] sm:$0xff]
  %v737 = vld [vmem:[%s731 + $0x4f] sm:$0xff]
  %v738 = vld [vmem:[%s731 + $0x67] sm:$0xff]
  %v739 = vld [vmem:[%s731 + $0x6f] sm:$0xff]
  %v740 = vld [vmem:[%s731 + $0x87] sm:$0xff]
  %v741 = vld [vmem:[%s731 + $0x8f] sm:$0xff]
  %v742 = vld [vmem:[%s731 + $0xa7] sm:$0xff]
  %v743 = vld [vmem:[%s731 + $0xaf] sm:$0xff]
  %v744 = vld [vmem:[%s731 + $0xc7] sm:$0xff]
  %v745 = vld [vmem:[%s731 + $0xcf] sm:$0xff]
  %v746 = vld [vmem:[%s731 + $0xe7] sm:$0xff]
  %v747 = vld [vmem:[%s731 + $0xef] sm:$0xff]
  %v748 = vld [vmem:[%s731 + $0x107] sm:$0xff]
  %v749 = vld [vmem:[%s731 + $0x10f] sm:$0xff]
  %v750 = vld [vmem:[%s731 + $0x127] sm:$0xff]
  %v751 = vld [vmem:[%s731 + $0x12f] sm:$0xff]
  %v752 = vld [vmem:[%s731 + $0x147] sm:$0xff]
  %v753 = vld [vmem:[%s731 + $0x14f] sm:$0xff]
  %v754 = vld [vmem:[%s731 + $0x167] sm:$0xff]
  %v755 = vld [vmem:[%s731 + $0x16f] sm:$0xff]
  %v756 = vld [vmem:[%s731 + $0x187] sm:$0xff]
  %v757 = vld [vmem:[%s731 + $0x18f] sm:$0xff]
  %v758 = vld [vmem:[%s731 + $0x1a7] sm:$0xff]
  %v759 = vld [vmem:[%s731 + $0x1af] sm:$0xff]
  %v760 = vld [vmem:[%s731 + $0x1c7] sm:$0xff]
  %v761 = vld [vmem:[%s731 + $0x1cf] sm:$0xff]
  %v762 = vld [vmem:[%s731 + $0x1e7] sm:$0xff]
  %v763 = vld [vmem:[%s731 + $0x1ef] sm:$0xff]
  %v764 = vld [vmem:[%s1 + $0x6] sm:$0x1]
  %v765 = vlaneseq
  %v766 = vshrl.u32 %v765, 7
  %v767 = vsub.s32 0, %v766
  %v768 = vrot.slane %v764, %v767
  %v769 = vmul.f32 %v732, %v768
  %v770 = vmul.f32 %v733, %v768
  %v771 = vmul.f32 %v734, %v768
  %v772 = vmul.f32 %v735, %v768
  %v773 = vmul.f32 %v736, %v768
  %v774 = vmul.f32 %v737, %v768
  %v775 = vmul.f32 %v738, %v768
  %v776 = vmul.f32 %v739, %v768
  %v777 = vmul.f32 %v740, %v768
  %v778 = vmul.f32 %v741, %v768
  %v779 = vmul.f32 %v742, %v768
  %v780 = vmul.f32 %v743, %v768
  %v781 = vmul.f32 %v744, %v768
  %v782 = vmul.f32 %v745, %v768
  %v783 = vmul.f32 %v746, %v768
  %v784 = vmul.f32 %v747, %v768
  %v785 = vmul.f32 %v748, %v768
  %v786 = vmul.f32 %v749, %v768
  %v787 = vmul.f32 %v750, %v768
  %v788 = vmul.f32 %v751, %v768
  %v789 = vmul.f32 %v752, %v768
  %v790 = vmul.f32 %v753, %v768
  %v791 = vmul.f32 %v754, %v768
  %v792 = vmul.f32 %v755, %v768
  %v793 = vmul.f32 %v756, %v768
  %v794 = vmul.f32 %v757, %v768
  %v795 = vmul.f32 %v758, %v768
  %v796 = vmul.f32 %v759, %v768
  %v797 = vmul.f32 %v760, %v768
  %v798 = vmul.f32 %v761, %v768
  %v799 = vmul.f32 %v762, %v768
  %v800 = vmul.f32 %v763, %v768
  %v801 = vadd.f32 %v697, %v769
  %v802 = vadd.f32 %v698, %v770
  %v803 = vadd.f32 %v699, %v771
  %v804 = vadd.f32 %v700, %v772
  %v805 = vadd.f32 %v701, %v773
  %v806 = vadd.f32 %v702, %v774
  %v807 = vadd.f32 %v703, %v775
  %v808 = vadd.f32 %v704, %v776
  %v809 = vadd.f32 %v705, %v777
  %v810 = vadd.f32 %v706, %v778
  %v811 = vadd.f32 %v707, %v779
  %v812 = vadd.f32 %v708, %v780
  %v813 = vadd.f32 %v709, %v781
  %v814 = vadd.f32 %v710, %v782
  %v815 = vadd.f32 %v711, %v783
  %v816 = vadd.f32 %v712, %v784
  %v817 = vadd.f32 %v713, %v785
  %v818 = vadd.f32 %v714, %v786
  %v819 = vadd.f32 %v715, %v787
  %v820 = vadd.f32 %v716, %v788
  %v821 = vadd.f32 %v717, %v789
  %v822 = vadd.f32 %v718, %v790
  %v823 = vadd.f32 %v719, %v791
  %v824 = vadd.f32 %v720, %v792
  %v825 = vadd.f32 %v721, %v793
  %v826 = vadd.f32 %v722, %v794
  %v827 = vadd.f32 %v723, %v795
  %v828 = vadd.f32 %v724, %v796
  %v829 = vadd.f32 %v725, %v797
  %v830 = vadd.f32 %v726, %v798
  %v831 = vadd.f32 %v727, %v799
  %v832 = vadd.f32 %v728, %v800
  %v833 = vld [vmem:[%s731 + $0x8] sm:$0xff]
  %v834 = vld [vmem:[%s731 + $0x10] sm:$0xff]
  %v835 = vld [vmem:[%s731 + $0x28] sm:$0xff]
  %v836 = vld [vmem:[%s731 + $0x30] sm:$0xff]
  %v837 = vld [vmem:[%s731 + $0x48] sm:$0xff]
  %v838 = vld [vmem:[%s731 + $0x50] sm:$0xff]
  %v839 = vld [vmem:[%s731 + $0x68] sm:$0xff]
  %v840 = vld [vmem:[%s731 + $0x70] sm:$0xff]
  %v841 = vld [vmem:[%s731 + $0x88] sm:$0xff]
  %v842 = vld [vmem:[%s731 + $0x90] sm:$0xff]
  %v843 = vld [vmem:[%s731 + $0xa8] sm:$0xff]
  %v844 = vld [vmem:[%s731 + $0xb0] sm:$0xff]
  %v845 = vld [vmem:[%s731 + $0xc8] sm:$0xff]
  %v846 = vld [vmem:[%s731 + $0xd0] sm:$0xff]
  %v847 = vld [vmem:[%s731 + $0xe8] sm:$0xff]
  %v848 = vld [vmem:[%s731 + $0xf0] sm:$0xff]
  %v849 = vld [vmem:[%s731 + $0x108] sm:$0xff]
  %v850 = vld [vmem:[%s731 + $0x110] sm:$0xff]
  %v851 = vld [vmem:[%s731 + $0x128] sm:$0xff]
  %v852 = vld [vmem:[%s731 + $0x130] sm:$0xff]
  %v853 = vld [vmem:[%s731 + $0x148] sm:$0xff]
  %v854 = vld [vmem:[%s731 + $0x150] sm:$0xff]
  %v855 = vld [vmem:[%s731 + $0x168] sm:$0xff]
  %v856 = vld [vmem:[%s731 + $0x170] sm:$0xff]
  %v857 = vld [vmem:[%s731 + $0x188] sm:$0xff]
  %v858 = vld [vmem:[%s731 + $0x190] sm:$0xff]
  %v859 = vld [vmem:[%s731 + $0x1a8] sm:$0xff]
  %v860 = vld [vmem:[%s731 + $0x1b0] sm:$0xff]
  %v861 = vld [vmem:[%s731 + $0x1c8] sm:$0xff]
  %v862 = vld [vmem:[%s731 + $0x1d0] sm:$0xff]
  %v863 = vld [vmem:[%s731 + $0x1e8] sm:$0xff]
  %v864 = vld [vmem:[%s731 + $0x1f0] sm:$0xff]
  %v865 = vld [vmem:[%s1 + $0x7] sm:$0x1]
  %v866 = vlaneseq
  %v867 = vshrl.u32 %v866, 7
  %v868 = vsub.s32 0, %v867
  %v869 = vrot.slane %v865, %v868
  %v870 = vmul.f32 %v833, %v869
  %v871 = vmul.f32 %v834, %v869
  %v872 = vmul.f32 %v835, %v869
  %v873 = vmul.f32 %v836, %v869
  %v874 = vmul.f32 %v837, %v869
  %v875 = vmul.f32 %v838, %v869
  %v876 = vmul.f32 %v839, %v869
  %v877 = vmul.f32 %v840, %v869
  %v878 = vmul.f32 %v841, %v869
  %v879 = vmul.f32 %v842, %v869
  %v880 = vmul.f32 %v843, %v869
  %v881 = vmul.f32 %v844, %v869
  %v882 = vmul.f32 %v845, %v869
  %v883 = vmul.f32 %v846, %v869
  %v884 = vmul.f32 %v847, %v869
  %v885 = vmul.f32 %v848, %v869
  %v886 = vmul.f32 %v849, %v869
  %v887 = vmul.f32 %v850, %v869
  %v888 = vmul.f32 %v851, %v869
  %v889 = vmul.f32 %v852, %v869
  %v890 = vmul.f32 %v853, %v869
  %v891 = vmul.f32 %v854, %v869
  %v892 = vmul.f32 %v855, %v869
  %v893 = vmul.f32 %v856, %v869
  %v894 = vmul.f32 %v857, %v869
  %v895 = vmul.f32 %v858, %v869
  %v896 = vmul.f32 %v859, %v869
  %v897 = vmul.f32 %v860, %v869
  %v898 = vmul.f32 %v861, %v869
  %v899 = vmul.f32 %v862, %v869
  %v900 = vmul.f32 %v863, %v869
  %v901 = vmul.f32 %v864, %v869
  %v902 = vadd.f32 %v801, %v870
  %v903 = vadd.f32 %v802, %v871
  %v904 = vadd.f32 %v803, %v872
  %v905 = vadd.f32 %v804, %v873
  %v906 = vadd.f32 %v805, %v874
  %v907 = vadd.f32 %v806, %v875
  %v908 = vadd.f32 %v807, %v876
  %v909 = vadd.f32 %v808, %v877
  %v910 = vadd.f32 %v809, %v878
  %v911 = vadd.f32 %v810, %v879
  %v912 = vadd.f32 %v811, %v880
  %v913 = vadd.f32 %v812, %v881
  %v914 = vadd.f32 %v813, %v882
  %v915 = vadd.f32 %v814, %v883
  %v916 = vadd.f32 %v815, %v884
  %v917 = vadd.f32 %v816, %v885
  %v918 = vadd.f32 %v817, %v886
  %v919 = vadd.f32 %v818, %v887
  %v920 = vadd.f32 %v819, %v888
  %v921 = vadd.f32 %v820, %v889
  %v922 = vadd.f32 %v821, %v890
  %v923 = vadd.f32 %v822, %v891
  %v924 = vadd.f32 %v823, %v892
  %v925 = vadd.f32 %v824, %v893
  %v926 = vadd.f32 %v825, %v894
  %v927 = vadd.f32 %v826, %v895
  %v928 = vadd.f32 %v827, %v896
  %v929 = vadd.f32 %v828, %v897
  %v930 = vadd.f32 %v829, %v898
  %v931 = vadd.f32 %v830, %v899
  %v932 = vadd.f32 %v831, %v900
  %v933 = vadd.f32 %v832, %v901
  %v934 = vld [vmem:[%s731 + $0x9] sm:$0xff]
  %v935 = vld [vmem:[%s731 + $0x11] sm:$0xff]
  %v936 = vld [vmem:[%s731 + $0x29] sm:$0xff]
  %v937 = vld [vmem:[%s731 + $0x31] sm:$0xff]
  %v938 = vld [vmem:[%s731 + $0x49] sm:$0xff]
  %v939 = vld [vmem:[%s731 + $0x51] sm:$0xff]
  %v940 = vld [vmem:[%s731 + $0x69] sm:$0xff]
  %v941 = vld [vmem:[%s731 + $0x71] sm:$0xff]
  %v942 = vld [vmem:[%s731 + $0x89] sm:$0xff]
  %v943 = vld [vmem:[%s731 + $0x91] sm:$0xff]
  %v944 = vld [vmem:[%s731 + $0xa9] sm:$0xff]
  %v945 = vld [vmem:[%s731 + $0xb1] sm:$0xff]
  %v946 = vld [vmem:[%s731 + $0xc9] sm:$0xff]
  %v947 = vld [vmem:[%s731 + $0xd1] sm:$0xff]
  %v948 = vld [vmem:[%s731 + $0xe9] sm:$0xff]
  %v949 = vld [vmem:[%s731 + $0xf1] sm:$0xff]
  %v950 = vld [vmem:[%s731 + $0x109] sm:$0xff]
  %v951 = vld [vmem:[%s731 + $0x111] sm:$0xff]
  %v952 = vld [vmem:[%s731 + $0x129] sm:$0xff]
  %v953 = vld [vmem:[%s731 + $0x131] sm:$0xff]
  %v954 = vld [vmem:[%s731 + $0x149] sm:$0xff]
  %v955 = vld [vmem:[%s731 + $0x151] sm:$0xff]
  %v956 = vld [vmem:[%s731 + $0x169] sm:$0xff]
  %v957 = vld [vmem:[%s731 + $0x171] sm:$0xff]
  %v958 = vld [vmem:[%s731 + $0x189] sm:$0xff]
  %v959 = vld [vmem:[%s731 + $0x191] sm:$0xff]
  %v960 = vld [vmem:[%s731 + $0x1a9] sm:$0xff]
  %v961 = vld [vmem:[%s731 + $0x1b1] sm:$0xff]
  %v962 = vld [vmem:[%s731 + $0x1c9] sm:$0xff]
  %v963 = vld [vmem:[%s731 + $0x1d1] sm:$0xff]
  %v964 = vld [vmem:[%s731 + $0x1e9] sm:$0xff]
  %v965 = vld [vmem:[%s731 + $0x1f1] sm:$0xff]
  %v966 = vld [vmem:[%s1 + $0x8] sm:$0x1]
  %v967 = vlaneseq
  %v968 = vshrl.u32 %v967, 7
  %v969 = vsub.s32 0, %v968
  %v970 = vrot.slane %v966, %v969
  %v971 = vmul.f32 %v934, %v970
  %v972 = vmul.f32 %v935, %v970
  %v973 = vmul.f32 %v936, %v970
  %v974 = vmul.f32 %v937, %v970
  %v975 = vmul.f32 %v938, %v970
  %v976 = vmul.f32 %v939, %v970
  %v977 = vmul.f32 %v940, %v970
  %v978 = vmul.f32 %v941, %v970
  %v979 = vmul.f32 %v942, %v970
  %v980 = vmul.f32 %v943, %v970
  %v981 = vmul.f32 %v944, %v970
  %v982 = vmul.f32 %v945, %v970
  %v983 = vmul.f32 %v946, %v970
  %v984 = vmul.f32 %v947, %v970
  %v985 = vmul.f32 %v948, %v970
  %v986 = vmul.f32 %v949, %v970
  %v987 = vmul.f32 %v950, %v970
  %v988 = vmul.f32 %v951, %v970
  %v989 = vmul.f32 %v952, %v970
  %v990 = vmul.f32 %v953, %v970
  %v991 = vmul.f32 %v954, %v970
  %v992 = vmul.f32 %v955, %v970
  %v993 = vmul.f32 %v956, %v970
  %v994 = vmul.f32 %v957, %v970
  %v995 = vmul.f32 %v958, %v970
  %v996 = vmul.f32 %v959, %v970
  %v997 = vmul.f32 %v960, %v970
  %v998 = vmul.f32 %v961, %v970
  %v999 = vmul.f32 %v962, %v970
  %v1000 = vmul.f32 %v963, %v970
  %v1001 = vmul.f32 %v964, %v970
  %v1002 = vmul.f32 %v965, %v970
  %v1003 = vadd.f32 %v902, %v971
  %v1004 = vadd.f32 %v903, %v972
  %v1005 = vadd.f32 %v904, %v973
  %v1006 = vadd.f32 %v905, %v974
  %v1007 = vadd.f32 %v906, %v975
  %v1008 = vadd.f32 %v907, %v976
  %v1009 = vadd.f32 %v908, %v977
  %v1010 = vadd.f32 %v909, %v978
  %v1011 = vadd.f32 %v910, %v979
  %v1012 = vadd.f32 %v911, %v980
  %v1013 = vadd.f32 %v912, %v981
  %v1014 = vadd.f32 %v913, %v982
  %v1015 = vadd.f32 %v914, %v983
  %v1016 = vadd.f32 %v915, %v984
  %v1017 = vadd.f32 %v916, %v985
  %v1018 = vadd.f32 %v917, %v986
  %v1019 = vadd.f32 %v918, %v987
  %v1020 = vadd.f32 %v919, %v988
  %v1021 = vadd.f32 %v920, %v989
  %v1022 = vadd.f32 %v921, %v990
  %v1023 = vadd.f32 %v922, %v991
  %v1024 = vadd.f32 %v923, %v992
  %v1025 = vadd.f32 %v924, %v993
  %v1026 = vadd.f32 %v925, %v994
  %v1027 = vadd.f32 %v926, %v995
  %v1028 = vadd.f32 %v927, %v996
  %v1029 = vadd.f32 %v928, %v997
  %v1030 = vadd.f32 %v929, %v998
  %v1031 = vadd.f32 %v930, %v999
  %v1032 = vadd.f32 %v931, %v1000
  %v1033 = vadd.f32 %v932, %v1001
  %v1034 = vadd.f32 %v933, %v1002
  %v1035 = vld [vmem:[%s2] sm:$0x1]
  %v1037 = vlaneseq
  %v1038 = vshrl.u32 %v1037, 7
  %v1039 = vsub.s32 0, %v1038
  %v1040 = vrot.slane %v1035, %v1039
  %v1042 = vadd.f32 %v1003, %v1040
  %v1043 = vadd.f32 %v1004, %v1040
  %v1044 = vadd.f32 %v1005, %v1040
  %v1045 = vadd.f32 %v1006, %v1040
  %v1046 = vadd.f32 %v1007, %v1040
  %v1047 = vadd.f32 %v1008, %v1040
  %v1048 = vadd.f32 %v1009, %v1040
  %v1049 = vadd.f32 %v1010, %v1040
  %v1050 = vadd.f32 %v1011, %v1040
  %v1051 = vadd.f32 %v1012, %v1040
  %v1052 = vadd.f32 %v1013, %v1040
  %v1053 = vadd.f32 %v1014, %v1040
  %v1054 = vadd.f32 %v1015, %v1040
  %v1055 = vadd.f32 %v1016, %v1040
  %v1056 = vadd.f32 %v1017, %v1040
  %v1057 = vadd.f32 %v1018, %v1040
  %v1058 = vadd.f32 %v1019, %v1040
  %v1059 = vadd.f32 %v1020, %v1040
  %v1060 = vadd.f32 %v1021, %v1040
  %v1061 = vadd.f32 %v1022, %v1040
  %v1062 = vadd.f32 %v1023, %v1040
  %v1063 = vadd.f32 %v1024, %v1040
  %v1064 = vadd.f32 %v1025, %v1040
  %v1065 = vadd.f32 %v1026, %v1040
  %v1066 = vadd.f32 %v1027, %v1040
  %v1067 = vadd.f32 %v1028, %v1040
  %v1068 = vadd.f32 %v1029, %v1040
  %v1069 = vadd.f32 %v1030, %v1040
  %v1070 = vadd.f32 %v1031, %v1040
  %v1071 = vadd.f32 %v1032, %v1040
  %v1072 = vadd.f32 %v1033, %v1040
  %v1073 = vadd.f32 %v1034, %v1040
  %v1074 = vld [vmem:[%s3] sm:$0xff]
  %v1075 = vld [vmem:[%s3 + $0x8] sm:$0xff]
  %v1076 = vld [vmem:[%s3 + $0x10] sm:$0xff]
  %v1077 = vld [vmem:[%s3 + $0x18] sm:$0xff]
  %v1078 = vld [vmem:[%s3 + $0x20] sm:$0xff]
  %v1079 = vld [vmem:[%s3 + $0x28] sm:$0xff]
  %v1080 = vld [vmem:[%s3 + $0x30] sm:$0xff]
  %v1081 = vld [vmem:[%s3 + $0x38] sm:$0xff]
  %v1082 = vld [vmem:[%s3 + $0x40] sm:$0xff]
  %v1083 = vld [vmem:[%s3 + $0x48] sm:$0xff]
  %v1084 = vld [vmem:[%s3 + $0x50] sm:$0xff]
  %v1085 = vld [vmem:[%s3 + $0x58] sm:$0xff]
  %v1086 = vld [vmem:[%s3 + $0x60] sm:$0xff]
  %v1087 = vld [vmem:[%s3 + $0x68] sm:$0xff]
  %v1088 = vld [vmem:[%s3 + $0x70] sm:$0xff]
  %v1089 = vld [vmem:[%s3 + $0x78] sm:$0xff]
  %v1090 = vld [vmem:[%s3 + $0x80] sm:$0xff]
  %v1091 = vld [vmem:[%s3 + $0x88] sm:$0xff]
  %v1092 = vld [vmem:[%s3 + $0x90] sm:$0xff]
  %v1093 = vld [vmem:[%s3 + $0x98] sm:$0xff]
  %v1094 = vld [vmem:[%s3 + $0xa0] sm:$0xff]
  %v1095 = vld [vmem:[%s3 + $0xa8] sm:$0xff]
  %v1096 = vld [vmem:[%s3 + $0xb0] sm:$0xff]
  %v1097 = vld [vmem:[%s3 + $0xb8] sm:$0xff]
  %v1098 = vld [vmem:[%s3 + $0xc0] sm:$0xff]
  %v1099 = vld [vmem:[%s3 + $0xc8] sm:$0xff]
  %v1100 = vld [vmem:[%s3 + $0xd0] sm:$0xff]
  %v1101 = vld [vmem:[%s3 + $0xd8] sm:$0xff]
  %v1102 = vld [vmem:[%s3 + $0xe0] sm:$0xff]
  %v1103 = vld [vmem:[%s3 + $0xe8] sm:$0xff]
  %v1104 = vld [vmem:[%s3 + $0xf0] sm:$0xff]
  %v1105 = vld [vmem:[%s3 + $0xf8] sm:$0xff]
  %v1106 = vld [vmem:[%s4] sm:$0x3]
  %v1108 = vlaneseq
  %v1109 = vshrl.u32 %v1108, 7
  %v1110 = vsub.s32 0, %v1109
  %v1111 = vrot.slane %v1106, %v1110
  %v1112 = vlaneseq
  %v1113 = vshrl.u32 %v1112, 7
  %v1114 = vsub.s32 1, %v1113
  %v1115 = vrot.slane %v1106, %v1114
  %1118 = vmatprep.subr.mxu0 %v1075
  %1119 = vmatpush1.msra.mxu0 %v1074
  %1120 = vmatprep.subr.mxu0 %v1077
  %1121 = vmatpush1.msra.mxu0 %v1076
  %1122 = vmatprep.subr.mxu0 %v1079
  %1123 = vmatpush1.msra.mxu0 %v1078
  %1124 = vmatprep.subr.mxu0 %v1081
  %1125 = vmatpush1.msra.mxu0 %v1080
  %1126 = vmatprep.subr.mxu0 %v1083
  %1127 = vmatpush1.msra.mxu0 %v1082
  %1128 = vmatprep.subr.mxu0 %v1085
  %1129 = vmatpush1.msra.mxu0 %v1084
  %1130 = vmatprep.subr.mxu0 %v1087
  %1131 = vmatpush1.msra.mxu0 %v1086
  %1132 = vmatprep.subr.mxu0 %v1089
  %1133 = vmatpush1.msra.mxu0 %v1088
  %1134 = vmatprep.subr.mxu0 %v1091
  %1135 = vmatpush1.msra.mxu0 %v1090
  %1136 = vmatprep.subr.mxu0 %v1093
  %1137 = vmatpush1.msra.mxu0 %v1092
  %1138 = vmatprep.subr.mxu0 %v1095
  %1139 = vmatpush1.msra.mxu0 %v1094
  %1140 = vmatprep.subr.mxu0 %v1097
  %1141 = vmatpush1.msra.mxu0 %v1096
  %1142 = vmatprep.subr.mxu0 %v1099
  %1143 = vmatpush1.msra.mxu0 %v1098
  %1144 = vmatprep.subr.mxu0 %v1101
  %1145 = vmatpush1.msra.mxu0 %v1100
  %1146 = vmatprep.subr.mxu0 %v1103
  %1147 = vmatpush1.msra.mxu0 %v1102
  %1148 = vmatprep.subr.mxu0 %v1105
  %1149 = vmatpush1.msra.mxu0 %v1104
  %1150 = vmatprep.subr.mxu0 0.0
  %1151 = vmatpush1.msra.mxu0 0.0
  %1152 = vmatprep.subr.mxu0 0.0
  %1153 = vmatpush1.msra.mxu0 0.0
  %1154 = vmatprep.subr.mxu0 0.0
  %1155 = vmatpush1.msra.mxu0 0.0
  %1156 = vmatprep.subr.mxu0 0.0
  %1157 = vmatpush1.msra.mxu0 0.0
  %1158 = vmatprep.subr.mxu0 0.0
  %1159 = vmatpush1.msra.mxu0 0.0
  %1160 = vmatprep.subr.mxu0 0.0
  %1161 = vmatpush1.msra.mxu0 0.0
  %1162 = vmatprep.subr.mxu0 0.0
  %1163 = vmatpush1.msra.mxu0 0.0
  %1164 = vmatprep.subr.mxu0 0.0
  %1165 = vmatpush1.msra.mxu0 0.0
  %1166 = vmatprep.subr.mxu0 0.0
  %1167 = vmatpush1.msra.mxu0 0.0
  %1168 = vmatprep.subr.mxu0 0.0
  %1169 = vmatpush1.msra.mxu0 0.0
  %1170 = vmatprep.subr.mxu0 0.0
  %1171 = vmatpush1.msra.mxu0 0.0
  %1172 = vmatprep.subr.mxu0 0.0
  %1173 = vmatpush1.msra.mxu0 0.0
  %1174 = vmatprep.subr.mxu0 0.0
  %1175 = vmatpush1.msra.mxu0 0.0
  %1176 = vmatprep.subr.mxu0 0.0
  %1177 = vmatpush1.msra.mxu0 0.0
  %1178 = vmatprep.subr.mxu0 0.0
  %1179 = vmatpush1.msra.mxu0 0.0
  %1180 = vmatprep.subr.mxu0 0.0
  %1181 = vmatpush1.msra.mxu0 0.0
  %1182 = vmatprep.mubr.f32.mxu0 0.0
  %1183 = vmatmul.mubr.f32.gmra.mrb[0].mxu0 %v1042
  %v1184 = vpop.f32.mrb[0].mxu0
  %v1185 = vadd.f32 %v1111, %v1184
  %v1186 = vpop.f32.mrb[0].mxu0
  %v1187 = vadd.f32 %v1115, %v1186
  %1188 = vmatprep.mubr.f32.mxu0 0.0
  %1189 = vmatmul.mubr.f32.gmra.mrb[0].mxu0 %v1043
  %v1190 = vpop.f32.mrb[0].mxu0
  %v1191 = vadd.f32 %v1111, %v1190
  %v1192 = vpop.f32.mrb[0].mxu0
  %v1193 = vadd.f32 %v1115, %v1192
  %1194 = vmatprep.mubr.f32.mxu0 0.0
  %1195 = vmatmul.mubr.f32.gmra.mrb[0].mxu0 %v1044
  %v1196 = vpop.f32.mrb[0].mxu0
  %v1197 = vadd.f32 %v1111, %v1196
  %v1198 = vpop.f32.mrb[0].mxu0
  %v1199 = vadd.f32 %v1115, %v1198
  %1200 = vmatprep.mubr.f32.mxu0 0.0
  %1201 = vmatmul.mubr.f32.gmra.mrb[0].mxu0 %v1045
  %v1202 = vpop.f32.mrb[0].mxu0
  %v1203 = vadd.f32 %v1111, %v1202
  %v1204 = vpop.f32.mrb[0].mxu0
  %v1205 = vadd.f32 %v1115, %v1204
  %1206 = vmatprep.mubr.f32.mxu0 0.0
  %1207 = vmatmul.mubr.f32.gmra.mrb[0].mxu0 %v1046
  %v1208 = vpop.f32.mrb[0].mxu0
  %v1209 = vadd.f32 %v1111, %v1208
  %v1210 = vpop.f32.mrb[0].mxu0
  %v1211 = vadd.f32 %v1115, %v1210
  %1212 = vmatprep.mubr.f32.mxu0 0.0
  %1213 = vmatmul.mubr.f32.gmra.mrb[0].mxu0 %v1047
  %v1214 = vpop.f32.mrb[0].mxu0
  %v1215 = vadd.f32 %v1111, %v1214
  %v1216 = vpop.f32.mrb[0].mxu0
  %v1217 = vadd.f32 %v1115, %v1216
  %1218 = vmatprep.mubr.f32.mxu0 0.0
  %1219 = vmatmul.mubr.f32.gmra.mrb[0].mxu0 %v1048
  %v1220 = vpop.f32.mrb[0].mxu0
  %v1221 = vadd.f32 %v1111, %v1220
  %v1222 = vpop.f32.mrb[0].mxu0
  %v1223 = vadd.f32 %v1115, %v1222
  %1224 = vmatprep.mubr.f32.mxu0 0.0
  %1225 = vmatmul.mubr.f32.gmra.mrb[0].mxu0 %v1049
  %v1226 = vpop.f32.mrb[0].mxu0
  %v1227 = vadd.f32 %v1111, %v1226
  %v1228 = vpop.f32.mrb[0].mxu0
  %v1229 = vadd.f32 %v1115, %v1228
  %1230 = vmatprep.mubr.f32.mxu0 0.0
  %1231 = vmatmul.mubr.f32.gmra.mrb[0].mxu0 %v1050
  %v1232 = vpop.f32.mrb[0].mxu0
  %v1233 = vadd.f32 %v1111, %v1232
  %v1234 = vpop.f32.mrb[0].mxu0
  %v1235 = vadd.f32 %v1115, %v1234
  %1236 = vmatprep.mubr.f32.mxu0 0.0
  %1237 = vmatmul.mubr.f32.gmra.mrb[0].mxu0 %v1051
  %v1238 = vpop.f32.mrb[0].mxu0
  %v1239 = vadd.f32 %v1111, %v1238
  %v1240 = vpop.f32.mrb[0].mxu0
  %v1241 = vadd.f32 %v1115, %v1240
  %1242 = vmatprep.mubr.f32.mxu0 0.0
  %1243 = vmatmul.mubr.f32.gmra.mrb[0].mxu0 %v1052
  %v1244 = vpop.f32.mrb[0].mxu0
  %v1245 = vadd.f32 %v1111, %v1244
  %v1246 = vpop.f32.mrb[0].mxu0
  %v1247 = vadd.f32 %v1115, %v1246
  %1248 = vmatprep.mubr.f32.mxu0 0.0
  %1249 = vmatmul.mubr.f32.gmra.mrb[0].mxu0 %v1053
  %v1250 = vpop.f32.mrb[0].mxu0
  %v1251 = vadd.f32 %v1111, %v1250
  %v1252 = vpop.f32.mrb[0].mxu0
  %v1253 = vadd.f32 %v1115, %v1252
  %1254 = vmatprep.mubr.f32.mxu0 0.0
  %1255 = vmatmul.mubr.f32.gmra.mrb[0].mxu0 %v1054
  %v1256 = vpop.f32.mrb[0].mxu0
  %v1257 = vadd.f32 %v1111, %v1256
  %v1258 = vpop.f32.mrb[0].mxu0
  %v1259 = vadd.f32 %v1115, %v1258
  %1260 = vmatprep.mubr.f32.mxu0 0.0
  %1261 = vmatmul.mubr.f32.gmra.mrb[0].mxu0 %v1055
  %v1262 = vpop.f32.mrb[0].mxu0
  %v1263 = vadd.f32 %v1111, %v1262
  %v1264 = vpop.f32.mrb[0].mxu0
  %v1265 = vadd.f32 %v1115, %v1264
  %1266 = vmatprep.mubr.f32.mxu0 0.0
  %1267 = vmatmul.mubr.f32.gmra.mrb[0].mxu0 %v1056
  %v1268 = vpop.f32.mrb[0].mxu0
  %v1269 = vadd.f32 %v1111, %v1268
  %v1270 = vpop.f32.mrb[0].mxu0
  %v1271 = vadd.f32 %v1115, %v1270
  %1272 = vmatprep.mubr.f32.mxu0 0.0
  %1273 = vmatmul.mubr.f32.gmra.mrb[0].mxu0 %v1057
  %v1274 = vpop.f32.mrb[0].mxu0
  %v1275 = vadd.f32 %v1111, %v1274
  %v1276 = vpop.f32.mrb[0].mxu0
  %v1277 = vadd.f32 %v1115, %v1276
  %1278 = vmatprep.mubr.f32.mxu0 0.0
  %1279 = vmatmul.mubr.f32.gmra.mrb[0].mxu0 %v1058
  %v1280 = vpop.f32.mrb[0].mxu0
  %v1281 = vadd.f32 %v1111, %v1280
  %v1282 = vpop.f32.mrb[0].mxu0
  %v1283 = vadd.f32 %v1115, %v1282
  %1284 = vmatprep.mubr.f32.mxu0 0.0
  %1285 = vmatmul.mubr.f32.gmra.mrb[0].mxu0 %v1059
  %v1286 = vpop.f32.mrb[0].mxu0
  %v1287 = vadd.f32 %v1111, %v1286
  %v1288 = vpop.f32.mrb[0].mxu0
  %v1289 = vadd.f32 %v1115, %v1288
  %1290 = vmatprep.mubr.f32.mxu0 0.0
  %1291 = vmatmul.mubr.f32.gmra.mrb[0].mxu0 %v1060
  %v1292 = vpop.f32.mrb[0].mxu0
  %v1293 = vadd.f32 %v1111, %v1292
  %v1294 = vpop.f32.mrb[0].mxu0
  %v1295 = vadd.f32 %v1115, %v1294
  %1296 = vmatprep.mubr.f32.mxu0 0.0
  %1297 = vmatmul.mubr.f32.gmra.mrb[0].mxu0 %v1061
  %v1298 = vpop.f32.mrb[0].mxu0
  %v1299 = vadd.f32 %v1111, %v1298
  %v1300 = vpop.f32.mrb[0].mxu0
  %v1301 = vadd.f32 %v1115, %v1300
  %1302 = vmatprep.mubr.f32.mxu0 0.0
  %1303 = vmatmul.mubr.f32.gmra.mrb[0].mxu0 %v1062
  %v1304 = vpop.f32.mrb[0].mxu0
  %v1305 = vadd.f32 %v1111, %v1304
  %v1306 = vpop.f32.mrb[0].mxu0
  %v1307 = vadd.f32 %v1115, %v1306
  %1308 = vmatprep.mubr.f32.mxu0 0.0
  %1309 = vmatmul.mubr.f32.gmra.mrb[0].mxu0 %v1063
  %v1310 = vpop.f32.mrb[0].mxu0
  %v1311 = vadd.f32 %v1111, %v1310
  %v1312 = vpop.f32.mrb[0].mxu0
  %v1313 = vadd.f32 %v1115, %v1312
  %1314 = vmatprep.mubr.f32.mxu0 0.0
  %1315 = vmatmul.mubr.f32.gmra.mrb[0].mxu0 %v1064
  %v1316 = vpop.f32.mrb[0].mxu0
  %v1317 = vadd.f32 %v1111, %v1316
  %v1318 = vpop.f32.mrb[0].mxu0
  %v1319 = vadd.f32 %v1115, %v1318
  %1320 = vmatprep.mubr.f32.mxu0 0.0
  %1321 = vmatmul.mubr.f32.gmra.mrb[0].mxu0 %v1065
  %v1322 = vpop.f32.mrb[0].mxu0
  %v1323 = vadd.f32 %v1111, %v1322
  %v1324 = vpop.f32.mrb[0].mxu0
  %v1325 = vadd.f32 %v1115, %v1324
  %1326 = vmatprep.mubr.f32.mxu0 0.0
  %1327 = vmatmul.mubr.f32.gmra.mrb[0].mxu0 %v1066
  %v1328 = vpop.f32.mrb[0].mxu0
  %v1329 = vadd.f32 %v1111, %v1328
  %v1330 = vpop.f32.mrb[0].mxu0
  %v1331 = vadd.f32 %v1115, %v1330
  %1332 = vmatprep.mubr.f32.mxu0 0.0
  %1333 = vmatmul.mubr.f32.gmra.mrb[0].mxu0 %v1067
  %v1334 = vpop.f32.mrb[0].mxu0
  %v1335 = vadd.f32 %v1111, %v1334
  %v1336 = vpop.f32.mrb[0].mxu0
  %v1337 = vadd.f32 %v1115, %v1336
  %1338 = vmatprep.mubr.f32.mxu0 0.0
  %1339 = vmatmul.mubr.f32.gmra.mrb[0].mxu0 %v1068
  %v1340 = vpop.f32.mrb[0].mxu0
  %v1341 = vadd.f32 %v1111, %v1340
  %v1342 = vpop.f32.mrb[0].mxu0
  %v1343 = vadd.f32 %v1115, %v1342
  %1344 = vmatprep.mubr.f32.mxu0 0.0
  %1345 = vmatmul.mubr.f32.gmra.mrb[0].mxu0 %v1069
  %v1346 = vpop.f32.mrb[0].mxu0
  %v1347 = vadd.f32 %v1111, %v1346
  %v1348 = vpop.f32.mrb[0].mxu0
  %v1349 = vadd.f32 %v1115, %v1348
  %1350 = vmatprep.mubr.f32.mxu0 0.0
  %1351 = vmatmul.mubr.f32.gmra.mrb[0].mxu0 %v1070
  %v1352 = vpop.f32.mrb[0].mxu0
  %v1353 = vadd.f32 %v1111, %v1352
  %v1354 = vpop.f32.mrb[0].mxu0
  %v1355 = vadd.f32 %v1115, %v1354
  %1356 = vmatprep.mubr.f32.mxu0 0.0
  %1357 = vmatmul.mubr.f32.gmra.mrb[0].mxu0 %v1071
  %v1358 = vpop.f32.mrb[0].mxu0
  %v1359 = vadd.f32 %v1111, %v1358
  %v1360 = vpop.f32.mrb[0].mxu0
  %v1361 = vadd.f32 %v1115, %v1360
  %1362 = vmatprep.mubr.f32.mxu0 0.0
  %1363 = vmatmul.mubr.f32.gmra.mrb[0].mxu0 %v1072
  %v1364 = vpop.f32.mrb[0].mxu0
  %v1365 = vadd.f32 %v1111, %v1364
  %v1366 = vpop.f32.mrb[0].mxu0
  %v1367 = vadd.f32 %v1115, %v1366
  %1368 = vmatprep.mubr.f32.mxu0 0.0
  %1369 = vmatmul.mubr.f32.gmra.mrb[0].mxu0 %v1073
  %v1370 = vpop.f32.mrb[0].mxu0
  %v1371 = vadd.f32 %v1111, %v1370
  %v1372 = vpop.f32.mrb[0].mxu0
  %v1373 = vadd.f32 %v1115, %v1372
  %1374 = vdwg.mxu0
  %v1375 = vmul.f32 %v1185, 0.5
  %v1376 = vmul.f32 %v1187, 0.5
  %v1377 = vmul.f32 %v1191, 0.5
  %v1378 = vmul.f32 %v1193, 0.5
  %v1379 = vmul.f32 %v1197, 0.5
  %v1380 = vmul.f32 %v1199, 0.5
  %v1381 = vmul.f32 %v1203, 0.5
  %v1382 = vmul.f32 %v1205, 0.5
  %v1383 = vmul.f32 %v1209, 0.5
  %v1384 = vmul.f32 %v1211, 0.5
  %v1385 = vmul.f32 %v1215, 0.5
  %v1386 = vmul.f32 %v1217, 0.5
  %v1387 = vmul.f32 %v1221, 0.5
  %v1388 = vmul.f32 %v1223, 0.5
  %v1389 = vmul.f32 %v1227, 0.5
  %v1390 = vmul.f32 %v1229, 0.5
  %v1391 = vmul.f32 %v1233, 0.5
  %v1392 = vmul.f32 %v1235, 0.5
  %v1393 = vmul.f32 %v1239, 0.5
  %v1394 = vmul.f32 %v1241, 0.5
  %v1395 = vmul.f32 %v1245, 0.5
  %v1396 = vmul.f32 %v1247, 0.5
  %v1397 = vmul.f32 %v1251, 0.5
  %v1398 = vmul.f32 %v1253, 0.5
  %v1399 = vmul.f32 %v1257, 0.5
  %v1400 = vmul.f32 %v1259, 0.5
  %v1401 = vmul.f32 %v1263, 0.5
  %v1402 = vmul.f32 %v1265, 0.5
  %v1403 = vmul.f32 %v1269, 0.5
  %v1404 = vmul.f32 %v1271, 0.5
  %v1405 = vmul.f32 %v1275, 0.5
  %v1406 = vmul.f32 %v1277, 0.5
  %v1407 = vmul.f32 %v1281, 0.5
  %v1408 = vmul.f32 %v1283, 0.5
  %v1409 = vmul.f32 %v1287, 0.5
  %v1410 = vmul.f32 %v1289, 0.5
  %v1411 = vmul.f32 %v1293, 0.5
  %v1412 = vmul.f32 %v1295, 0.5
  %v1413 = vmul.f32 %v1299, 0.5
  %v1414 = vmul.f32 %v1301, 0.5
  %v1415 = vmul.f32 %v1305, 0.5
  %v1416 = vmul.f32 %v1307, 0.5
  %v1417 = vmul.f32 %v1311, 0.5
  %v1418 = vmul.f32 %v1313, 0.5
  %v1419 = vmul.f32 %v1317, 0.5
  %v1420 = vmul.f32 %v1319, 0.5
  %v1421 = vmul.f32 %v1323, 0.5
  %v1422 = vmul.f32 %v1325, 0.5
  %v1423 = vmul.f32 %v1329, 0.5
  %v1424 = vmul.f32 %v1331, 0.5
  %v1425 = vmul.f32 %v1335, 0.5
  %v1426 = vmul.f32 %v1337, 0.5
  %v1427 = vmul.f32 %v1341, 0.5
  %v1428 = vmul.f32 %v1343, 0.5
  %v1429 = vmul.f32 %v1347, 0.5
  %v1430 = vmul.f32 %v1349, 0.5
  %v1431 = vmul.f32 %v1353, 0.5
  %v1432 = vmul.f32 %v1355, 0.5
  %v1433 = vmul.f32 %v1359, 0.5
  %v1434 = vmul.f32 %v1361, 0.5
  %v1435 = vmul.f32 %v1365, 0.5
  %v1436 = vmul.f32 %v1367, 0.5
  %v1437 = vmul.f32 %v1371, 0.5
  %v1438 = vmul.f32 %v1373, 0.5
  %v1439 = vmul.f32 %v1185, 0.70710677
  %v1440 = vmul.f32 %v1187, 0.70710677
  %v1441 = vmul.f32 %v1191, 0.70710677
  %v1442 = vmul.f32 %v1193, 0.70710677
  %v1443 = vmul.f32 %v1197, 0.70710677
  %v1444 = vmul.f32 %v1199, 0.70710677
  %v1445 = vmul.f32 %v1203, 0.70710677
  %v1446 = vmul.f32 %v1205, 0.70710677
  %v1447 = vmul.f32 %v1209, 0.70710677
  %v1448 = vmul.f32 %v1211, 0.70710677
  %v1449 = vmul.f32 %v1215, 0.70710677
  %v1450 = vmul.f32 %v1217, 0.70710677
  %v1451 = vmul.f32 %v1221, 0.70710677
  %v1452 = vmul.f32 %v1223, 0.70710677
  %v1453 = vmul.f32 %v1227, 0.70710677
  %v1454 = vmul.f32 %v1229, 0.70710677
  %v1455 = vmul.f32 %v1233, 0.70710677
  %v1456 = vmul.f32 %v1235, 0.70710677
  %v1457 = vmul.f32 %v1239, 0.70710677
  %v1458 = vmul.f32 %v1241, 0.70710677
  %v1459 = vmul.f32 %v1245, 0.70710677
  %v1460 = vmul.f32 %v1247, 0.70710677
  %v1461 = vmul.f32 %v1251, 0.70710677
  %v1462 = vmul.f32 %v1253, 0.70710677
  %v1463 = vmul.f32 %v1257, 0.70710677
  %v1464 = vmul.f32 %v1259, 0.70710677
  %v1465 = vmul.f32 %v1263, 0.70710677
  %v1466 = vmul.f32 %v1265, 0.70710677
  %v1467 = vmul.f32 %v1269, 0.70710677
  %v1468 = vmul.f32 %v1271, 0.70710677
  %v1469 = vmul.f32 %v1275, 0.70710677
  %v1470 = vmul.f32 %v1277, 0.70710677
  %v1471 = vmul.f32 %v1281, 0.70710677
  %v1472 = vmul.f32 %v1283, 0.70710677
  %v1473 = vmul.f32 %v1287, 0.70710677
  %v1474 = vmul.f32 %v1289, 0.70710677
  %v1475 = vmul.f32 %v1293, 0.70710677
  %v1476 = vmul.f32 %v1295, 0.70710677
  %v1477 = vmul.f32 %v1299, 0.70710677
  %v1478 = vmul.f32 %v1301, 0.70710677
  %v1479 = vmul.f32 %v1305, 0.70710677
  %v1480 = vmul.f32 %v1307, 0.70710677
  %v1481 = vmul.f32 %v1311, 0.70710677
  %v1482 = vmul.f32 %v1313, 0.70710677
  %v1483 = vmul.f32 %v1317, 0.70710677
  %v1484 = vmul.f32 %v1319, 0.70710677
  %v1485 = vmul.f32 %v1323, 0.70710677
  %v1486 = vmul.f32 %v1325, 0.70710677
  %v1487 = vmul.f32 %v1329, 0.70710677
  %v1488 = vmul.f32 %v1331, 0.70710677
  %v1489 = vmul.f32 %v1335, 0.70710677
  %v1490 = vmul.f32 %v1337, 0.70710677
  %v1491 = vmul.f32 %v1341, 0.70710677
  %v1492 = vmul.f32 %v1343, 0.70710677
  %v1493 = vmul.f32 %v1347, 0.70710677
  %v1494 = vmul.f32 %v1349, 0.70710677
  %v1495 = vmul.f32 %v1353, 0.70710677
  %v1496 = vmul.f32 %v1355, 0.70710677
  %v1497 = vmul.f32 %v1359, 0.70710677
  %v1498 = vmul.f32 %v1361, 0.70710677
  %v1499 = vmul.f32 %v1365, 0.70710677
  %v1500 = vmul.f32 %v1367, 0.70710677
  %v1501 = vmul.f32 %v1371, 0.70710677
  %v1502 = vmul.f32 %v1373, 0.70710677
  %v1503 = vand.u32 2147483647, %v1439
  %v1504 = vand.u32 2147483647, %v1440
  %v1505 = vand.u32 2147483647, %v1441
  %v1506 = vand.u32 2147483647, %v1442
  %v1507 = vand.u32 2147483647, %v1443
  %v1508 = vand.u32 2147483647, %v1444
  %v1509 = vand.u32 2147483647, %v1445
  %v1510 = vand.u32 2147483647, %v1446
  %v1511 = vand.u32 2147483647, %v1447
  %v1512 = vand.u32 2147483647, %v1448
  %v1513 = vand.u32 2147483647, %v1449
  %v1514 = vand.u32 2147483647, %v1450
  %v1515 = vand.u32 2147483647, %v1451
  %v1516 = vand.u32 2147483647, %v1452
  %v1517 = vand.u32 2147483647, %v1453
  %v1518 = vand.u32 2147483647, %v1454
  %v1519 = vand.u32 2147483647, %v1455
  %v1520 = vand.u32 2147483647, %v1456
  %v1521 = vand.u32 2147483647, %v1457
  %v1522 = vand.u32 2147483647, %v1458
  %v1523 = vand.u32 2147483647, %v1459
  %v1524 = vand.u32 2147483647, %v1460
  %v1525 = vand.u32 2147483647, %v1461
  %v1526 = vand.u32 2147483647, %v1462
  %v1527 = vand.u32 2147483647, %v1463
  %v1528 = vand.u32 2147483647, %v1464
  %v1529 = vand.u32 2147483647, %v1465
  %v1530 = vand.u32 2147483647, %v1466
  %v1531 = vand.u32 2147483647, %v1467
  %v1532 = vand.u32 2147483647, %v1468
  %v1533 = vand.u32 2147483647, %v1469
  %v1534 = vand.u32 2147483647, %v1470
  %v1535 = vand.u32 2147483647, %v1471
  %v1536 = vand.u32 2147483647, %v1472
  %v1537 = vand.u32 2147483647, %v1473
  %v1538 = vand.u32 2147483647, %v1474
  %v1539 = vand.u32 2147483647, %v1475
  %v1540 = vand.u32 2147483647, %v1476
  %v1541 = vand.u32 2147483647, %v1477
  %v1542 = vand.u32 2147483647, %v1478
  %v1543 = vand.u32 2147483647, %v1479
  %v1544 = vand.u32 2147483647, %v1480
  %v1545 = vand.u32 2147483647, %v1481
  %v1546 = vand.u32 2147483647, %v1482
  %v1547 = vand.u32 2147483647, %v1483
  %v1548 = vand.u32 2147483647, %v1484
  %v1549 = vand.u32 2147483647, %v1485
  %v1550 = vand.u32 2147483647, %v1486
  %v1551 = vand.u32 2147483647, %v1487
  %v1552 = vand.u32 2147483647, %v1488
  %v1553 = vand.u32 2147483647, %v1489
  %v1554 = vand.u32 2147483647, %v1490
  %v1555 = vand.u32 2147483647, %v1491
  %v1556 = vand.u32 2147483647, %v1492
  %v1557 = vand.u32 2147483647, %v1493
  %v1558 = vand.u32 2147483647, %v1494
  %v1559 = vand.u32 2147483647, %v1495
  %v1560 = vand.u32 2147483647, %v1496
  %v1561 = vand.u32 2147483647, %v1497
  %v1562 = vand.u32 2147483647, %v1498
  %v1563 = vand.u32 2147483647, %v1499
  %v1564 = vand.u32 2147483647, %v1500
  %v1565 = vand.u32 2147483647, %v1501
  %v1566 = vand.u32 2147483647, %v1502
  %v1567 = vmul.f32 %v1503, 0.5
  %v1568 = vmul.f32 %v1504, 0.5
  %v1569 = vmul.f32 %v1505, 0.5
  %v1570 = vmul.f32 %v1506, 0.5
  %v1571 = vmul.f32 %v1507, 0.5
  %v1572 = vmul.f32 %v1508, 0.5
  %v1573 = vmul.f32 %v1509, 0.5
  %v1574 = vmul.f32 %v1510, 0.5
  %v1575 = vmul.f32 %v1511, 0.5
  %v1576 = vmul.f32 %v1512, 0.5
  %v1577 = vmul.f32 %v1513, 0.5
  %v1578 = vmul.f32 %v1514, 0.5
  %v1579 = vmul.f32 %v1515, 0.5
  %v1580 = vmul.f32 %v1516, 0.5
  %v1581 = vmul.f32 %v1517, 0.5
  %v1582 = vmul.f32 %v1518, 0.5
  %v1583 = vmul.f32 %v1519, 0.5
  %v1584 = vmul.f32 %v1520, 0.5
  %v1585 = vmul.f32 %v1521, 0.5
  %v1586 = vmul.f32 %v1522, 0.5
  %v1587 = vmul.f32 %v1523, 0.5
  %v1588 = vmul.f32 %v1524, 0.5
  %v1589 = vmul.f32 %v1525, 0.5
  %v1590 = vmul.f32 %v1526, 0.5
  %v1591 = vmul.f32 %v1527, 0.5
  %v1592 = vmul.f32 %v1528, 0.5
  %v1593 = vmul.f32 %v1529, 0.5
  %v1594 = vmul.f32 %v1530, 0.5
  %v1595 = vmul.f32 %v1531, 0.5
  %v1596 = vmul.f32 %v1532, 0.5
  %v1597 = vmul.f32 %v1533, 0.5
  %v1598 = vmul.f32 %v1534, 0.5
  %v1599 = vmul.f32 %v1535, 0.5
  %v1600 = vmul.f32 %v1536, 0.5
  %v1601 = vmul.f32 %v1537, 0.5
  %v1602 = vmul.f32 %v1538, 0.5
  %v1603 = vmul.f32 %v1539, 0.5
  %v1604 = vmul.f32 %v1540, 0.5
  %v1605 = vmul.f32 %v1541, 0.5
  %v1606 = vmul.f32 %v1542, 0.5
  %v1607 = vmul.f32 %v1543, 0.5
  %v1608 = vmul.f32 %v1544, 0.5
  %v1609 = vmul.f32 %v1545, 0.5
  %v1610 = vmul.f32 %v1546, 0.5
  %v1611 = vmul.f32 %v1547, 0.5
  %v1612 = vmul.f32 %v1548, 0.5
  %v1613 = vmul.f32 %v1549, 0.5
  %v1614 = vmul.f32 %v1550, 0.5
  %v1615 = vmul.f32 %v1551, 0.5
  %v1616 = vmul.f32 %v1552, 0.5
  %v1617 = vmul.f32 %v1553, 0.5
  %v1618 = vmul.f32 %v1554, 0.5
  %v1619 = vmul.f32 %v1555, 0.5
  %v1620 = vmul.f32 %v1556, 0.5
  %v1621 = vmul.f32 %v1557, 0.5
  %v1622 = vmul.f32 %v1558, 0.5
  %v1623 = vmul.f32 %v1559, 0.5
  %v1624 = vmul.f32 %v1560, 0.5
  %v1625 = vmul.f32 %v1561, 0.5
  %v1626 = vmul.f32 %v1562, 0.5
  %v1627 = vmul.f32 %v1563, 0.5
  %v1628 = vmul.f32 %v1564, 0.5
  %v1629 = vmul.f32 %v1565, 0.5
  %v1630 = vmul.f32 %v1566, 0.5
  %v1631 = vadd.f32 %v1567, 1.0
  %v1632 = vadd.f32 %v1568, 1.0
  %v1633 = vadd.f32 %v1569, 1.0
  %v1634 = vadd.f32 %v1570, 1.0
  %v1635 = vadd.f32 %v1571, 1.0
  %v1636 = vadd.f32 %v1572, 1.0
  %v1637 = vadd.f32 %v1573, 1.0
  %v1638 = vadd.f32 %v1574, 1.0
  %v1639 = vadd.f32 %v1575, 1.0
  %v1640 = vadd.f32 %v1576, 1.0
  %v1641 = vadd.f32 %v1577, 1.0
  %v1642 = vadd.f32 %v1578, 1.0
  %v1643 = vadd.f32 %v1579, 1.0
  %v1644 = vadd.f32 %v1580, 1.0
  %v1645 = vadd.f32 %v1581, 1.0
  %v1646 = vadd.f32 %v1582, 1.0
  %v1647 = vadd.f32 %v1583, 1.0
  %v1648 = vadd.f32 %v1584, 1.0
  %v1649 = vadd.f32 %v1585, 1.0
  %v1650 = vadd.f32 %v1586, 1.0
  %v1651 = vadd.f32 %v1587, 1.0
  %v1652 = vadd.f32 %v1588, 1.0
  %v1653 = vadd.f32 %v1589, 1.0
  %v1654 = vadd.f32 %v1590, 1.0
  %v1655 = vadd.f32 %v1591, 1.0
  %v1656 = vadd.f32 %v1592, 1.0
  %v1657 = vadd.f32 %v1593, 1.0
  %v1658 = vadd.f32 %v1594, 1.0
  %v1659 = vadd.f32 %v1595, 1.0
  %v1660 = vadd.f32 %v1596, 1.0
  %v1661 = vadd.f32 %v1597, 1.0
  %v1662 = vadd.f32 %v1598, 1.0
  %v1663 = vadd.f32 %v1599, 1.0
  %v1664 = vadd.f32 %v1600, 1.0
  %v1665 = vadd.f32 %v1601, 1.0
  %v1666 = vadd.f32 %v1602, 1.0
  %v1667 = vadd.f32 %v1603, 1.0
  %v1668 = vadd.f32 %v1604, 1.0
  %v1669 = vadd.f32 %v1605, 1.0
  %v1670 = vadd.f32 %v1606, 1.0
  %v1671 = vadd.f32 %v1607, 1.0
  %v1672 = vadd.f32 %v1608, 1.0
  %v1673 = vadd.f32 %v1609, 1.0
  %v1674 = vadd.f32 %v1610, 1.0
  %v1675 = vadd.f32 %v1611, 1.0
  %v1676 = vadd.f32 %v1612, 1.0
  %v1677 = vadd.f32 %v1613, 1.0
  %v1678 = vadd.f32 %v1614, 1.0
  %v1679 = vadd.f32 %v1615, 1.0
  %v1680 = vadd.f32 %v1616, 1.0
  %v1681 = vadd.f32 %v1617, 1.0
  %v1682 = vadd.f32 %v1618, 1.0
  %v1683 = vadd.f32 %v1619, 1.0
  %v1684 = vadd.f32 %v1620, 1.0
  %v1685 = vadd.f32 %v1621, 1.0
  %v1686 = vadd.f32 %v1622, 1.0
  %v1687 = vadd.f32 %v1623, 1.0
  %v1688 = vadd.f32 %v1624, 1.0
  %v1689 = vadd.f32 %v1625, 1.0
  %v1690 = vadd.f32 %v1626, 1.0
  %v1691 = vadd.f32 %v1627, 1.0
  %v1692 = vadd.f32 %v1628, 1.0
  %v1693 = vadd.f32 %v1629, 1.0
  %v1694 = vadd.f32 %v1630, 1.0
  %v1695 = vrcp.pop %v1631
  %v1696 = vrcp.pop %v1632
  %v1697 = vrcp.pop %v1633
  %v1698 = vrcp.pop %v1634
  %v1699 = vrcp.pop %v1635
  %v1700 = vrcp.pop %v1636
  %v1701 = vrcp.pop %v1637
  %v1702 = vrcp.pop %v1638
  %v1703 = vrcp.pop %v1639
  %v1704 = vrcp.pop %v1640
  %v1705 = vrcp.pop %v1641
  %v1706 = vrcp.pop %v1642
  %v1707 = vrcp.pop %v1643
  %v1708 = vrcp.pop %v1644
  %v1709 = vrcp.pop %v1645
  %v1710 = vrcp.pop %v1646
  %v1711 = vrcp.pop %v1647
  %v1712 = vrcp.pop %v1648
  %v1713 = vrcp.pop %v1649
  %v1714 = vrcp.pop %v1650
  %v1715 = vrcp.pop %v1651
  %v1716 = vrcp.pop %v1652
  %v1717 = vrcp.pop %v1653
  %v1718 = vrcp.pop %v1654
  %v1719 = vrcp.pop %v1655
  %v1720 = vrcp.pop %v1656
  %v1721 = vrcp.pop %v1657
  %v1722 = vrcp.pop %v1658
  %v1723 = vrcp.pop %v1659
  %v1724 = vrcp.pop %v1660
  %v1725 = vrcp.pop %v1661
  %v1726 = vrcp.pop %v1662
  %v1727 = vrcp.pop %v1663
  %v1728 = vrcp.pop %v1664
  %v1729 = vrcp.pop %v1665
  %v1730 = vrcp.pop %v1666
  %v1731 = vrcp.pop %v1667
  %v1732 = vrcp.pop %v1668
  %v1733 = vrcp.pop %v1669
  %v1734 = vrcp.pop %v1670
  %v1735 = vrcp.pop %v1671
  %v1736 = vrcp.pop %v1672
  %v1737 = vrcp.pop %v1673
  %v1738 = vrcp.pop %v1674
  %v1739 = vrcp.pop %v1675
  %v1740 = vrcp.pop %v1676
  %v1741 = vrcp.pop %v1677
  %v1742 = vrcp.pop %v1678
  %v1743 = vrcp.pop %v1679
  %v1744 = vrcp.pop %v1680
  %v1745 = vrcp.pop %v1681
  %v1746 = vrcp.pop %v1682
  %v1747 = vrcp.pop %v1683
  %v1748 = vrcp.pop %v1684
  %v1749 = vrcp.pop %v1685
  %v1750 = vrcp.pop %v1686
  %v1751 = vrcp.pop %v1687
  %v1752 = vrcp.pop %v1688
  %v1753 = vrcp.pop %v1689
  %v1754 = vrcp.pop %v1690
  %v1755 = vrcp.pop %v1691
  %v1756 = vrcp.pop %v1692
  %v1757 = vrcp.pop %v1693
  %v1758 = vrcp.pop %v1694
  %v1759 = vmul.f32 %v1631, %v1695
  %v1760 = vmul.f32 %v1632, %v1696
  %v1761 = vmul.f32 %v1633, %v1697
  %v1762 = vmul.f32 %v1634, %v1698
  %v1763 = vmul.f32 %v1635, %v1699
  %v1764 = vmul.f32 %v1636, %v1700
  %v1765 = vmul.f32 %v1637, %v1701
  %v1766 = vmul.f32 %v1638, %v1702
  %v1767 = vmul.f32 %v1639, %v1703
  %v1768 = vmul.f32 %v1640, %v1704
  %v1769 = vmul.f32 %v1641, %v1705
  %v1770 = vmul.f32 %v1642, %v1706
  %v1771 = vmul.f32 %v1643, %v1707
  %v1772 = vmul.f32 %v1644, %v1708
  %v1773 = vmul.f32 %v1645, %v1709
  %v1774 = vmul.f32 %v1646, %v1710
  %v1775 = vmul.f32 %v1647, %v1711
  %v1776 = vmul.f32 %v1648, %v1712
  %v1777 = vmul.f32 %v1649, %v1713
  %v1778 = vmul.f32 %v1650, %v1714
  %v1779 = vmul.f32 %v1651, %v1715
  %v1780 = vmul.f32 %v1652, %v1716
  %v1781 = vmul.f32 %v1653, %v1717
  %v1782 = vmul.f32 %v1654, %v1718
  %v1783 = vmul.f32 %v1655, %v1719
  %v1784 = vmul.f32 %v1656, %v1720
  %v1785 = vmul.f32 %v1657, %v1721
  %v1786 = vmul.f32 %v1658, %v1722
  %v1787 = vmul.f32 %v1659, %v1723
  %v1788 = vmul.f32 %v1660, %v1724
  %v1789 = vmul.f32 %v1661, %v1725
  %v1790 = vmul.f32 %v1662, %v1726
  %v1791 = vmul.f32 %v1663, %v1727
  %v1792 = vmul.f32 %v1664, %v1728
  %v1793 = vmul.f32 %v1665, %v1729
  %v1794 = vmul.f32 %v1666, %v1730
  %v1795 = vmul.f32 %v1667, %v1731
  %v1796 = vmul.f32 %v1668, %v1732
  %v1797 = vmul.f32 %v1669, %v1733
  %v1798 = vmul.f32 %v1670, %v1734
  %v1799 = vmul.f32 %v1671, %v1735
  %v1800 = vmul.f32 %v1672, %v1736
  %v1801 = vmul.f32 %v1673, %v1737
  %v1802 = vmul.f32 %v1674, %v1738
  %v1803 = vmul.f32 %v1675, %v1739
  %v1804 = vmul.f32 %v1676, %v1740
  %v1805 = vmul.f32 %v1677, %v1741
  %v1806 = vmul.f32 %v1678, %v1742
  %v1807 = vmul.f32 %v1679, %v1743
  %v1808 = vmul.f32 %v1680, %v1744
  %v1809 = vmul.f32 %v1681, %v1745
  %v1810 = vmul.f32 %v1682, %v1746
  %v1811 = vmul.f32 %v1683, %v1747
  %v1812 = vmul.f32 %v1684, %v1748
  %v1813 = vmul.f32 %v1685, %v1749
  %v1814 = vmul.f32 %v1686, %v1750
  %v1815 = vmul.f32 %v1687, %v1751
  %v1816 = vmul.f32 %v1688, %v1752
  %v1817 = vmul.f32 %v1689, %v1753
  %v1818 = vmul.f32 %v1690, %v1754
  %v1819 = vmul.f32 %v1691, %v1755
  %v1820 = vmul.f32 %v1692, %v1756
  %v1821 = vmul.f32 %v1693, %v1757
  %v1822 = vmul.f32 %v1694, %v1758
  %v1823 = vsub.f32 2.0, %v1759
  %v1824 = vsub.f32 2.0, %v1760
  %v1825 = vsub.f32 2.0, %v1761
  %v1826 = vsub.f32 2.0, %v1762
  %v1827 = vsub.f32 2.0, %v1763
  %v1828 = vsub.f32 2.0, %v1764
  %v1829 = vsub.f32 2.0, %v1765
  %v1830 = vsub.f32 2.0, %v1766
  %v1831 = vsub.f32 2.0, %v1767
  %v1832 = vsub.f32 2.0, %v1768
  %v1833 = vsub.f32 2.0, %v1769
  %v1834 = vsub.f32 2.0, %v1770
  %v1835 = vsub.f32 2.0, %v1771
  %v1836 = vsub.f32 2.0, %v1772
  %v1837 = vsub.f32 2.0, %v1773
  %v1838 = vsub.f32 2.0, %v1774
  %v1839 = vsub.f32 2.0, %v1775
  %v1840 = vsub.f32 2.0, %v1776
  %v1841 = vsub.f32 2.0, %v1777
  %v1842 = vsub.f32 2.0, %v1778
  %v1843 = vsub.f32 2.0, %v1779
  %v1844 = vsub.f32 2.0, %v1780
  %v1845 = vsub.f32 2.0, %v1781
  %v1846 = vsub.f32 2.0, %v1782
  %v1847 = vsub.f32 2.0, %v1783
  %v1848 = vsub.f32 2.0, %v1784
  %v1849 = vsub.f32 2.0, %v1785
  %v1850 = vsub.f32 2.0, %v1786
  %v1851 = vsub.f32 2.0, %v1787
  %v1852 = vsub.f32 2.0, %v1788
  %v1853 = vsub.f32 2.0, %v1789
  %v1854 = vsub.f32 2.0, %v1790
  %v1855 = vsub.f32 2.0, %v1791
  %v1856 = vsub.f32 2.0, %v1792
  %v1857 = vsub.f32 2.0, %v1793
  %v1858 = vsub.f32 2.0, %v1794
  %v1859 = vsub.f32 2.0, %v1795
  %v1860 = vsub.f32 2.0, %v1796
  %v1861 = vsub.f32 2.0, %v1797
  %v1862 = vsub.f32 2.0, %v1798
  %v1863 = vsub.f32 2.0, %v1799
  %v1864 = vsub.f32 2.0, %v1800
  %v1865 = vsub.f32 2.0, %v1801
  %v1866 = vsub.f32 2.0, %v1802
  %v1867 = vsub.f32 2.0, %v1803
  %v1868 = vsub.f32 2.0, %v1804
  %v1869 = vsub.f32 2.0, %v1805
  %v1870 = vsub.f32 2.0, %v1806
  %v1871 = vsub.f32 2.0, %v1807
  %v1872 = vsub.f32 2.0, %v1808
  %v1873 = vsub.f32 2.0, %v1809
  %v1874 = vsub.f32 2.0, %v1810
  %v1875 = vsub.f32 2.0, %v1811
  %v1876 = vsub.f32 2.0, %v1812
  %v1877 = vsub.f32 2.0, %v1813
  %v1878 = vsub.f32 2.0, %v1814
  %v1879 = vsub.f32 2.0, %v1815
  %v1880 = vsub.f32 2.0, %v1816
  %v1881 = vsub.f32 2.0, %v1817
  %v1882 = vsub.f32 2.0, %v1818
  %v1883 = vsub.f32 2.0, %v1819
  %v1884 = vsub.f32 2.0, %v1820
  %v1885 = vsub.f32 2.0, %v1821
  %v1886 = vsub.f32 2.0, %v1822
  %v1887 = vmul.f32 %v1695, %v1823
  %v1888 = vmul.f32 %v1696, %v1824
  %v1889 = vmul.f32 %v1697, %v1825
  %v1890 = vmul.f32 %v1698, %v1826
  %v1891 = vmul.f32 %v1699, %v1827
  %v1892 = vmul.f32 %v1700, %v1828
  %v1893 = vmul.f32 %v1701, %v1829
  %v1894 = vmul.f32 %v1702, %v1830
  %v1895 = vmul.f32 %v1703, %v1831
  %v1896 = vmul.f32 %v1704, %v1832
  %v1897 = vmul.f32 %v1705, %v1833
  %v1898 = vmul.f32 %v1706, %v1834
  %v1899 = vmul.f32 %v1707, %v1835
  %v1900 = vmul.f32 %v1708, %v1836
  %v1901 = vmul.f32 %v1709, %v1837
  %v1902 = vmul.f32 %v1710, %v1838
  %v1903 = vmul.f32 %v1711, %v1839
  %v1904 = vmul.f32 %v1712, %v1840
  %v1905 = vmul.f32 %v1713, %v1841
  %v1906 = vmul.f32 %v1714, %v1842
  %v1907 = vmul.f32 %v1715, %v1843
  %v1908 = vmul.f32 %v1716, %v1844
  %v1909 = vmul.f32 %v1717, %v1845
  %v1910 = vmul.f32 %v1718, %v1846
  %v1911 = vmul.f32 %v1719, %v1847
  %v1912 = vmul.f32 %v1720, %v1848
  %v1913 = vmul.f32 %v1721, %v1849
  %v1914 = vmul.f32 %v1722, %v1850
  %v1915 = vmul.f32 %v1723, %v1851
  %v1916 = vmul.f32 %v1724, %v1852
  %v1917 = vmul.f32 %v1725, %v1853
  %v1918 = vmul.f32 %v1726, %v1854
  %v1919 = vmul.f32 %v1727, %v1855
  %v1920 = vmul.f32 %v1728, %v1856
  %v1921 = vmul.f32 %v1729, %v1857
  %v1922 = vmul.f32 %v1730, %v1858
  %v1923 = vmul.f32 %v1731, %v1859
  %v1924 = vmul.f32 %v1732, %v1860
  %v1925 = vmul.f32 %v1733, %v1861
  %v1926 = vmul.f32 %v1734, %v1862
  %v1927 = vmul.f32 %v1735, %v1863
  %v1928 = vmul.f32 %v1736, %v1864
  %v1929 = vmul.f32 %v1737, %v1865
  %v1930 = vmul.f32 %v1738, %v1866
  %v1931 = vmul.f32 %v1739, %v1867
  %v1932 = vmul.f32 %v1740, %v1868
  %v1933 = vmul.f32 %v1741, %v1869
  %v1934 = vmul.f32 %v1742, %v1870
  %v1935 = vmul.f32 %v1743, %v1871
  %v1936 = vmul.f32 %v1744, %v1872
  %v1937 = vmul.f32 %v1745, %v1873
  %v1938 = vmul.f32 %v1746, %v1874
  %v1939 = vmul.f32 %v1747, %v1875
  %v1940 = vmul.f32 %v1748, %v1876
  %v1941 = vmul.f32 %v1749, %v1877
  %v1942 = vmul.f32 %v1750, %v1878
  %v1943 = vmul.f32 %v1751, %v1879
  %v1944 = vmul.f32 %v1752, %v1880
  %v1945 = vmul.f32 %v1753, %v1881
  %v1946 = vmul.f32 %v1754, %v1882
  %v1947 = vmul.f32 %v1755, %v1883
  %v1948 = vmul.f32 %v1756, %v1884
  %v1949 = vmul.f32 %v1757, %v1885
  %v1950 = vmul.f32 %v1758, %v1886
  %v1951 = vsub.f32 0.0, %v1503
  %v1952 = vsub.f32 0.0, %v1504
  %v1953 = vsub.f32 0.0, %v1505
  %v1954 = vsub.f32 0.0, %v1506
  %v1955 = vsub.f32 0.0, %v1507
  %v1956 = vsub.f32 0.0, %v1508
  %v1957 = vsub.f32 0.0, %v1509
  %v1958 = vsub.f32 0.0, %v1510
  %v1959 = vsub.f32 0.0, %v1511
  %v1960 = vsub.f32 0.0, %v1512
  %v1961 = vsub.f32 0.0, %v1513
  %v1962 = vsub.f32 0.0, %v1514
  %v1963 = vsub.f32 0.0, %v1515
  %v1964 = vsub.f32 0.0, %v1516
  %v1965 = vsub.f32 0.0, %v1517
  %v1966 = vsub.f32 0.0, %v1518
  %v1967 = vsub.f32 0.0, %v1519
  %v1968 = vsub.f32 0.0, %v1520
  %v1969 = vsub.f32 0.0, %v1521
  %v1970 = vsub.f32 0.0, %v1522
  %v1971 = vsub.f32 0.0, %v1523
  %v1972 = vsub.f32 0.0, %v1524
  %v1973 = vsub.f32 0.0, %v1525
  %v1974 = vsub.f32 0.0, %v1526
  %v1975 = vsub.f32 0.0, %v1527
  %v1976 = vsub.f32 0.0, %v1528
  %v1977 = vsub.f32 0.0, %v1529
  %v1978 = vsub.f32 0.0, %v1530
  %v1979 = vsub.f32 0.0, %v1531
  %v1980 = vsub.f32 0.0, %v1532
  %v1981 = vsub.f32 0.0, %v1533
  %v1982 = vsub.f32 0.0, %v1534
  %v1983 = vsub.f32 0.0, %v1535
  %v1984 = vsub.f32 0.0, %v1536
  %v1985 = vsub.f32 0.0, %v1537
  %v1986 = vsub.f32 0.0, %v1538
  %v1987 = vsub.f32 0.0, %v1539
  %v1988 = vsub.f32 0.0, %v1540
  %v1989 = vsub.f32 0.0, %v1541
  %v1990 = vsub.f32 0.0, %v1542
  %v1991 = vsub.f32 0.0, %v1543
  %v1992 = vsub.f32 0.0, %v1544
  %v1993 = vsub.f32 0.0, %v1545
  %v1994 = vsub.f32 0.0, %v1546
  %v1995 = vsub.f32 0.0, %v1547
  %v1996 = vsub.f32 0.0, %v1548
  %v1997 = vsub.f32 0.0, %v1549
  %v1998 = vsub.f32 0.0, %v1550
  %v1999 = vsub.f32 0.0, %v1551
  %v2000 = vsub.f32 0.0, %v1552
  %v2001 = vsub.f32 0.0, %v1553
  %v2002 = vsub.f32 0.0, %v1554
  %v2003 = vsub.f32 0.0, %v1555
  %v2004 = vsub.f32 0.0, %v1556
  %v2005 = vsub.f32 0.0, %v1557
  %v2006 = vsub.f32 0.0, %v1558
  %v2007 = vsub.f32 0.0, %v1559
  %v2008 = vsub.f32 0.0, %v1560
  %v2009 = vsub.f32 0.0, %v1561
  %v2010 = vsub.f32 0.0, %v1562
  %v2011 = vsub.f32 0.0, %v1563
  %v2012 = vsub.f32 0.0, %v1564
  %v2013 = vsub.f32 0.0, %v1565
  %v2014 = vsub.f32 0.0, %v1566
  %v2015 = vmul.f32 %v1951, %v1503
  %v2016 = vmul.f32 %v1952, %v1504
  %v2017 = vmul.f32 %v1953, %v1505
  %v2018 = vmul.f32 %v1954, %v1506
  %v2019 = vmul.f32 %v1955, %v1507
  %v2020 = vmul.f32 %v1956, %v1508
  %v2021 = vmul.f32 %v1957, %v1509
  %v2022 = vmul.f32 %v1958, %v1510
  %v2023 = vmul.f32 %v1959, %v1511
  %v2024 = vmul.f32 %v1960, %v1512
  %v2025 = vmul.f32 %v1961, %v1513
  %v2026 = vmul.f32 %v1962, %v1514
  %v2027 = vmul.f32 %v1963, %v1515
  %v2028 = vmul.f32 %v1964, %v1516
  %v2029 = vmul.f32 %v1965, %v1517
  %v2030 = vmul.f32 %v1966, %v1518
  %v2031 = vmul.f32 %v1967, %v1519
  %v2032 = vmul.f32 %v1968, %v1520
  %v2033 = vmul.f32 %v1969, %v1521
  %v2034 = vmul.f32 %v1970, %v1522
  %v2035 = vmul.f32 %v1971, %v1523
  %v2036 = vmul.f32 %v1972, %v1524
  %v2037 = vmul.f32 %v1973, %v1525
  %v2038 = vmul.f32 %v1974, %v1526
  %v2039 = vmul.f32 %v1975, %v1527
  %v2040 = vmul.f32 %v1976, %v1528
  %v2041 = vmul.f32 %v1977, %v1529
  %v2042 = vmul.f32 %v1978, %v1530
  %v2043 = vmul.f32 %v1979, %v1531
  %v2044 = vmul.f32 %v1980, %v1532
  %v2045 = vmul.f32 %v1981, %v1533
  %v2046 = vmul.f32 %v1982, %v1534
  %v2047 = vmul.f32 %v1983, %v1535
  %v2048 = vmul.f32 %v1984, %v1536
  %v2049 = vmul.f32 %v1985, %v1537
  %v2050 = vmul.f32 %v1986, %v1538
  %v2051 = vmul.f32 %v1987, %v1539
  %v2052 = vmul.f32 %v1988, %v1540
  %v2053 = vmul.f32 %v1989, %v1541
  %v2054 = vmul.f32 %v1990, %v1542
  %v2055 = vmul.f32 %v1991, %v1543
  %v2056 = vmul.f32 %v1992, %v1544
  %v2057 = vmul.f32 %v1993, %v1545
  %v2058 = vmul.f32 %v1994, %v1546
  %v2059 = vmul.f32 %v1995, %v1547
  %v2060 = vmul.f32 %v1996, %v1548
  %v2061 = vmul.f32 %v1997, %v1549
  %v2062 = vmul.f32 %v1998, %v1550
  %v2063 = vmul.f32 %v1999, %v1551
  %v2064 = vmul.f32 %v2000, %v1552
  %v2065 = vmul.f32 %v2001, %v1553
  %v2066 = vmul.f32 %v2002, %v1554
  %v2067 = vmul.f32 %v2003, %v1555
  %v2068 = vmul.f32 %v2004, %v1556
  %v2069 = vmul.f32 %v2005, %v1557
  %v2070 = vmul.f32 %v2006, %v1558
  %v2071 = vmul.f32 %v2007, %v1559
  %v2072 = vmul.f32 %v2008, %v1560
  %v2073 = vmul.f32 %v2009, %v1561
  %v2074 = vmul.f32 %v2010, %v1562
  %v2075 = vmul.f32 %v2011, %v1563
  %v2076 = vmul.f32 %v2012, %v1564
  %v2077 = vmul.f32 %v2013, %v1565
  %v2078 = vmul.f32 %v2014, %v1566
  %v2079 = vsub.f32 %v2015, 1.2655122
  %v2080 = vsub.f32 %v2016, 1.2655122
  %v2081 = vsub.f32 %v2017, 1.2655122
  %v2082 = vsub.f32 %v2018, 1.2655122
  %v2083 = vsub.f32 %v2019, 1.2655122
  %v2084 = vsub.f32 %v2020, 1.2655122
  %v2085 = vsub.f32 %v2021, 1.2655122
  %v2086 = vsub.f32 %v2022, 1.2655122
  %v2087 = vsub.f32 %v2023, 1.2655122
  %v2088 = vsub.f32 %v2024, 1.2655122
  %v2089 = vsub.f32 %v2025, 1.2655122
  %v2090 = vsub.f32 %v2026, 1.2655122
  %v2091 = vsub.f32 %v2027, 1.2655122
  %v2092 = vsub.f32 %v2028, 1.2655122
  %v2093 = vsub.f32 %v2029, 1.2655122
  %v2094 = vsub.f32 %v2030, 1.2655122
  %v2095 = vsub.f32 %v2031, 1.2655122
  %v2096 = vsub.f32 %v2032, 1.2655122
  %v2097 = vsub.f32 %v2033, 1.2655122
  %v2098 = vsub.f32 %v2034, 1.2655122
  %v2099 = vsub.f32 %v2035, 1.2655122
  %v2100 = vsub.f32 %v2036, 1.2655122
  %v2101 = vsub.f32 %v2037, 1.2655122
  %v2102 = vsub.f32 %v2038, 1.2655122
  %v2103 = vsub.f32 %v2039, 1.2655122
  %v2104 = vsub.f32 %v2040, 1.2655122
  %v2105 = vsub.f32 %v2041, 1.2655122
  %v2106 = vsub.f32 %v2042, 1.2655122
  %v2107 = vsub.f32 %v2043, 1.2655122
  %v2108 = vsub.f32 %v2044, 1.2655122
  %v2109 = vsub.f32 %v2045, 1.2655122
  %v2110 = vsub.f32 %v2046, 1.2655122
  %v2111 = vsub.f32 %v2047, 1.2655122
  %v2112 = vsub.f32 %v2048, 1.2655122
  %v2113 = vsub.f32 %v2049, 1.2655122
  %v2114 = vsub.f32 %v2050, 1.2655122
  %v2115 = vsub.f32 %v2051, 1.2655122
  %v2116 = vsub.f32 %v2052, 1.2655122
  %v2117 = vsub.f32 %v2053, 1.2655122
  %v2118 = vsub.f32 %v2054, 1.2655122
  %v2119 = vsub.f32 %v2055, 1.2655122
  %v2120 = vsub.f32 %v2056, 1.2655122
  %v2121 = vsub.f32 %v2057, 1.2655122
  %v2122 = vsub.f32 %v2058, 1.2655122
  %v2123 = vsub.f32 %v2059, 1.2655122
  %v2124 = vsub.f32 %v2060, 1.2655122
  %v2125 = vsub.f32 %v2061, 1.2655122
  %v2126 = vsub.f32 %v2062, 1.2655122
  %v2127 = vsub.f32 %v2063, 1.2655122
  %v2128 = vsub.f32 %v2064, 1.2655122
  %v2129 = vsub.f32 %v2065, 1.2655122
  %v2130 = vsub.f32 %v2066, 1.2655122
  %v2131 = vsub.f32 %v2067, 1.2655122
  %v2132 = vsub.f32 %v2068, 1.2655122
  %v2133 = vsub.f32 %v2069, 1.2655122
  %v2134 = vsub.f32 %v2070, 1.2655122
  %v2135 = vsub.f32 %v2071, 1.2655122
  %v2136 = vsub.f32 %v2072, 1.2655122
  %v2137 = vsub.f32 %v2073, 1.2655122
  %v2138 = vsub.f32 %v2074, 1.2655122
  %v2139 = vsub.f32 %v2075, 1.2655122
  %v2140 = vsub.f32 %v2076, 1.2655122
  %v2141 = vsub.f32 %v2077, 1.2655122
  %v2142 = vsub.f32 %v2078, 1.2655122
  %v2143 = vmul.f32 %v1887, 0.17087276
  %v2144 = vmul.f32 %v1888, 0.17087276
  %v2145 = vmul.f32 %v1889, 0.17087276
  %v2146 = vmul.f32 %v1890, 0.17087276
  %v2147 = vmul.f32 %v1891, 0.17087276
  %v2148 = vmul.f32 %v1892, 0.17087276
  %v2149 = vmul.f32 %v1893, 0.17087276
  %v2150 = vmul.f32 %v1894, 0.17087276
  %v2151 = vmul.f32 %v1895, 0.17087276
  %v2152 = vmul.f32 %v1896, 0.17087276
  %v2153 = vmul.f32 %v1897, 0.17087276
  %v2154 = vmul.f32 %v1898, 0.17087276
  %v2155 = vmul.f32 %v1899, 0.17087276
  %v2156 = vmul.f32 %v1900, 0.17087276
  %v2157 = vmul.f32 %v1901, 0.17087276
  %v2158 = vmul.f32 %v1902, 0.17087276
  %v2159 = vmul.f32 %v1903, 0.17087276
  %v2160 = vmul.f32 %v1904, 0.17087276
  %v2161 = vmul.f32 %v1905, 0.17087276
  %v2162 = vmul.f32 %v1906, 0.17087276
  %v2163 = vmul.f32 %v1907, 0.17087276
  %v2164 = vmul.f32 %v1908, 0.17087276
  %v2165 = vmul.f32 %v1909, 0.17087276
  %v2166 = vmul.f32 %v1910, 0.17087276
  %v2167 = vmul.f32 %v1911, 0.17087276
  %v2168 = vmul.f32 %v1912, 0.17087276
  %v2169 = vmul.f32 %v1913, 0.17087276
  %v2170 = vmul.f32 %v1914, 0.17087276
  %v2171 = vmul.f32 %v1915, 0.17087276
  %v2172 = vmul.f32 %v1916, 0.17087276
  %v2173 = vmul.f32 %v1917, 0.17087276
  %v2174 = vmul.f32 %v1918, 0.17087276
  %v2175 = vmul.f32 %v1919, 0.17087276
  %v2176 = vmul.f32 %v1920, 0.17087276
  %v2177 = vmul.f32 %v1921, 0.17087276
  %v2178 = vmul.f32 %v1922, 0.17087276
  %v2179 = vmul.f32 %v1923, 0.17087276
  %v2180 = vmul.f32 %v1924, 0.17087276
  %v2181 = vmul.f32 %v1925, 0.17087276
  %v2182 = vmul.f32 %v1926, 0.17087276
  %v2183 = vmul.f32 %v1927, 0.17087276
  %v2184 = vmul.f32 %v1928, 0.17087276
  %v2185 = vmul.f32 %v1929, 0.17087276
  %v2186 = vmul.f32 %v1930, 0.17087276
  %v2187 = vmul.f32 %v1931, 0.17087276
  %v2188 = vmul.f32 %v1932, 0.17087276
  %v2189 = vmul.f32 %v1933, 0.17087276
  %v2190 = vmul.f32 %v1934, 0.17087276
  %v2191 = vmul.f32 %v1935, 0.17087276
  %v2192 = vmul.f32 %v1936, 0.17087276
  %v2193 = vmul.f32 %v1937, 0.17087276
  %v2194 = vmul.f32 %v1938, 0.17087276
  %v2195 = vmul.f32 %v1939, 0.17087276
  %v2196 = vmul.f32 %v1940, 0.17087276
  %v2197 = vmul.f32 %v1941, 0.17087276
  %v2198 = vmul.f32 %v1942, 0.17087276
  %v2199 = vmul.f32 %v1943, 0.17087276
  %v2200 = vmul.f32 %v1944, 0.17087276
  %v2201 = vmul.f32 %v1945, 0.17087276
  %v2202 = vmul.f32 %v1946, 0.17087276
  %v2203 = vmul.f32 %v1947, 0.17087276
  %v2204 = vmul.f32 %v1948, 0.17087276
  %v2205 = vmul.f32 %v1949, 0.17087276
  %v2206 = vmul.f32 %v1950, 0.17087276
  %v2207 = vadd.f32 %v2143, -0.82215226
  %v2208 = vadd.f32 %v2144, -0.82215226
  %v2209 = vadd.f32 %v2145, -0.82215226
  %v2210 = vadd.f32 %v2146, -0.82215226
  %v2211 = vadd.f32 %v2147, -0.82215226
  %v2212 = vadd.f32 %v2148, -0.82215226
  %v2213 = vadd.f32 %v2149, -0.82215226
  %v2214 = vadd.f32 %v2150, -0.82215226
  %v2215 = vadd.f32 %v2151, -0.82215226
  %v2216 = vadd.f32 %v2152, -0.82215226
  %v2217 = vadd.f32 %v2153, -0.82215226
  %v2218 = vadd.f32 %v2154, -0.82215226
  %v2219 = vadd.f32 %v2155, -0.82215226
  %v2220 = vadd.f32 %v2156, -0.82215226
  %v2221 = vadd.f32 %v2157, -0.82215226
  %v2222 = vadd.f32 %v2158, -0.82215226
  %v2223 = vadd.f32 %v2159, -0.82215226
  %v2224 = vadd.f32 %v2160, -0.82215226
  %v2225 = vadd.f32 %v2161, -0.82215226
  %v2226 = vadd.f32 %v2162, -0.82215226
  %v2227 = vadd.f32 %v2163, -0.82215226
  %v2228 = vadd.f32 %v2164, -0.82215226
  %v2229 = vadd.f32 %v2165, -0.82215226
  %v2230 = vadd.f32 %v2166, -0.82215226
  %v2231 = vadd.f32 %v2167, -0.82215226
  %v2232 = vadd.f32 %v2168, -0.82215226
  %v2233 = vadd.f32 %v2169, -0.82215226
  %v2234 = vadd.f32 %v2170, -0.82215226
  %v2235 = vadd.f32 %v2171, -0.82215226
  %v2236 = vadd.f32 %v2172, -0.82215226
  %v2237 = vadd.f32 %v2173, -0.82215226
  %v2238 = vadd.f32 %v2174, -0.82215226
  %v2239 = vadd.f32 %v2175, -0.82215226
  %v2240 = vadd.f32 %v2176, -0.82215226
  %v2241 = vadd.f32 %v2177, -0.82215226
  %v2242 = vadd.f32 %v2178, -0.82215226
  %v2243 = vadd.f32 %v2179, -0.82215226
  %v2244 = vadd.f32 %v2180, -0.82215226
  %v2245 = vadd.f32 %v2181, -0.82215226
  %v2246 = vadd.f32 %v2182, -0.82215226
  %v2247 = vadd.f32 %v2183, -0.82215226
  %v2248 = vadd.f32 %v2184, -0.82215226
  %v2249 = vadd.f32 %v2185, -0.82215226
  %v2250 = vadd.f32 %v2186, -0.82215226
  %v2251 = vadd.f32 %v2187, -0.82215226
  %v2252 = vadd.f32 %v2188, -0.82215226
  %v2253 = vadd.f32 %v2189, -0.82215226
  %v2254 = vadd.f32 %v2190, -0.82215226
  %v2255 = vadd.f32 %v2191, -0.82215226
  %v2256 = vadd.f32 %v2192, -0.82215226
  %v2257 = vadd.f32 %v2193, -0.82215226
  %v2258 = vadd.f32 %v2194, -0.82215226
  %v2259 = vadd.f32 %v2195, -0.82215226
  %v2260 = vadd.f32 %v2196, -0.82215226
  %v2261 = vadd.f32 %v2197, -0.82215226
  %v2262 = vadd.f32 %v2198, -0.82215226
  %v2263 = vadd.f32 %v2199, -0.82215226
  %v2264 = vadd.f32 %v2200, -0.82215226
  %v2265 = vadd.f32 %v2201, -0.82215226
  %v2266 = vadd.f32 %v2202, -0.82215226
  %v2267 = vadd.f32 %v2203, -0.82215226
  %v2268 = vadd.f32 %v2204, -0.82215226
  %v2269 = vadd.f32 %v2205, -0.82215226
  %v2270 = vadd.f32 %v2206, -0.82215226
  %v2271 = vmul.f32 %v1887, %v2207
  %v2272 = vmul.f32 %v1888, %v2208
  %v2273 = vmul.f32 %v1889, %v2209
  %v2274 = vmul.f32 %v1890, %v2210
  %v2275 = vmul.f32 %v1891, %v2211
  %v2276 = vmul.f32 %v1892, %v2212
  %v2277 = vmul.f32 %v1893, %v2213
  %v2278 = vmul.f32 %v1894, %v2214
  %v2279 = vmul.f32 %v1895, %v2215
  %v2280 = vmul.f32 %v1896, %v2216
  %v2281 = vmul.f32 %v1897, %v2217
  %v2282 = vmul.f32 %v1898, %v2218
  %v2283 = vmul.f32 %v1899, %v2219
  %v2284 = vmul.f32 %v1900, %v2220
  %v2285 = vmul.f32 %v1901, %v2221
  %v2286 = vmul.f32 %v1902, %v2222
  %v2287 = vmul.f32 %v1903, %v2223
  %v2288 = vmul.f32 %v1904, %v2224
  %v2289 = vmul.f32 %v1905, %v2225
  %v2290 = vmul.f32 %v1906, %v2226
  %v2291 = vmul.f32 %v1907, %v2227
  %v2292 = vmul.f32 %v1908, %v2228
  %v2293 = vmul.f32 %v1909, %v2229
  %v2294 = vmul.f32 %v1910, %v2230
  %v2295 = vmul.f32 %v1911, %v2231
  %v2296 = vmul.f32 %v1912, %v2232
  %v2297 = vmul.f32 %v1913, %v2233
  %v2298 = vmul.f32 %v1914, %v2234
  %v2299 = vmul.f32 %v1915, %v2235
  %v2300 = vmul.f32 %v1916, %v2236
  %v2301 = vmul.f32 %v1917, %v2237
  %v2302 = vmul.f32 %v1918, %v2238
  %v2303 = vmul.f32 %v1919, %v2239
  %v2304 = vmul.f32 %v1920, %v2240
  %v2305 = vmul.f32 %v1921, %v2241
  %v2306 = vmul.f32 %v1922, %v2242
  %v2307 = vmul.f32 %v1923, %v2243
  %v2308 = vmul.f32 %v1924, %v2244
  %v2309 = vmul.f32 %v1925, %v2245
  %v2310 = vmul.f32 %v1926, %v2246
  %v2311 = vmul.f32 %v1927, %v2247
  %v2312 = vmul.f32 %v1928, %v2248
  %v2313 = vmul.f32 %v1929, %v2249
  %v2314 = vmul.f32 %v1930, %v2250
  %v2315 = vmul.f32 %v1931, %v2251
  %v2316 = vmul.f32 %v1932, %v2252
  %v2317 = vmul.f32 %v1933, %v2253
  %v2318 = vmul.f32 %v1934, %v2254
  %v2319 = vmul.f32 %v1935, %v2255
  %v2320 = vmul.f32 %v1936, %v2256
  %v2321 = vmul.f32 %v1937, %v2257
  %v2322 = vmul.f32 %v1938, %v2258
  %v2323 = vmul.f32 %v1939, %v2259
  %v2324 = vmul.f32 %v1940, %v2260
  %v2325 = vmul.f32 %v1941, %v2261
  %v2326 = vmul.f32 %v1942, %v2262
  %v2327 = vmul.f32 %v1943, %v2263
  %v2328 = vmul.f32 %v1944, %v2264
  %v2329 = vmul.f32 %v1945, %v2265
  %v2330 = vmul.f32 %v1946, %v2266
  %v2331 = vmul.f32 %v1947, %v2267
  %v2332 = vmul.f32 %v1948, %v2268
  %v2333 = vmul.f32 %v1949, %v2269
  %v2334 = vmul.f32 %v1950, %v2270
  %v2335 = vadd.f32 %v2271, 1.4885159
  %v2336 = vadd.f32 %v2272, 1.4885159
  %v2337 = vadd.f32 %v2273, 1.4885159
  %v2338 = vadd.f32 %v2274, 1.4885159
  %v2339 = vadd.f32 %v2275, 1.4885159
  %v2340 = vadd.f32 %v2276, 1.4885159
  %v2341 = vadd.f32 %v2277, 1.4885159
  %v2342 = vadd.f32 %v2278, 1.4885159
  %v2343 = vadd.f32 %v2279, 1.4885159
  %v2344 = vadd.f32 %v2280, 1.4885159
  %v2345 = vadd.f32 %v2281, 1.4885159
  %v2346 = vadd.f32 %v2282, 1.4885159
  %v2347 = vadd.f32 %v2283, 1.4885159
  %v2348 = vadd.f32 %v2284, 1.4885159
  %v2349 = vadd.f32 %v2285, 1.4885159
  %v2350 = vadd.f32 %v2286, 1.4885159
  %v2351 = vadd.f32 %v2287, 1.4885159
  %v2352 = vadd.f32 %v2288, 1.4885159
  %v2353 = vadd.f32 %v2289, 1.4885159
  %v2354 = vadd.f32 %v2290, 1.4885159
  %v2355 = vadd.f32 %v2291, 1.4885159
  %v2356 = vadd.f32 %v2292, 1.4885159
  %v2357 = vadd.f32 %v2293, 1.4885159
  %v2358 = vadd.f32 %v2294, 1.4885159
  %v2359 = vadd.f32 %v2295, 1.4885159
  %v2360 = vadd.f32 %v2296, 1.4885159
  %v2361 = vadd.f32 %v2297, 1.4885159
  %v2362 = vadd.f32 %v2298, 1.4885159
  %v2363 = vadd.f32 %v2299, 1.4885159
  %v2364 = vadd.f32 %v2300, 1.4885159
  %v2365 = vadd.f32 %v2301, 1.4885159
  %v2366 = vadd.f32 %v2302, 1.4885159
  %v2367 = vadd.f32 %v2303, 1.4885159
  %v2368 = vadd.f32 %v2304, 1.4885159
  %v2369 = vadd.f32 %v2305, 1.4885159
  %v2370 = vadd.f32 %v2306, 1.4885159
  %v2371 = vadd.f32 %v2307, 1.4885159
  %v2372 = vadd.f32 %v2308, 1.4885159
  %v2373 = vadd.f32 %v2309, 1.4885159
  %v2374 = vadd.f32 %v2310, 1.4885159
  %v2375 = vadd.f32 %v2311, 1.4885159
  %v2376 = vadd.f32 %v2312, 1.4885159
  %v2377 = vadd.f32 %v2313, 1.4885159
  %v2378 = vadd.f32 %v2314, 1.4885159
  %v2379 = vadd.f32 %v2315, 1.4885159
  %v2380 = vadd.f32 %v2316, 1.4885159
  %v2381 = vadd.f32 %v2317, 1.4885159
  %v2382 = vadd.f32 %v2318, 1.4885159
  %v2383 = vadd.f32 %v2319, 1.4885159
  %v2384 = vadd.f32 %v2320, 1.4885159
  %v2385 = vadd.f32 %v2321, 1.4885159
  %v2386 = vadd.f32 %v2322, 1.4885159
  %v2387 = vadd.f32 %v2323, 1.4885159
  %v2388 = vadd.f32 %v2324, 1.4885159
  %v2389 = vadd.f32 %v2325, 1.4885159
  %v2390 = vadd.f32 %v2326, 1.4885159
  %v2391 = vadd.f32 %v2327, 1.4885159
  %v2392 = vadd.f32 %v2328, 1.4885159
  %v2393 = vadd.f32 %v2329, 1.4885159
  %v2394 = vadd.f32 %v2330, 1.4885159
  %v2395 = vadd.f32 %v2331, 1.4885159
  %v2396 = vadd.f32 %v2332, 1.4885159
  %v2397 = vadd.f32 %v2333, 1.4885159
  %v2398 = vadd.f32 %v2334, 1.4885159
  %v2399 = vmul.f32 %v1887, %v2335
  %v2400 = vmul.f32 %v1888, %v2336
  %v2401 = vmul.f32 %v1889, %v2337
  %v2402 = vmul.f32 %v1890, %v2338
  %v2403 = vmul.f32 %v1891, %v2339
  %v2404 = vmul.f32 %v1892, %v2340
  %v2405 = vmul.f32 %v1893, %v2341
  %v2406 = vmul.f32 %v1894, %v2342
  %v2407 = vmul.f32 %v1895, %v2343
  %v2408 = vmul.f32 %v1896, %v2344
  %v2409 = vmul.f32 %v1897, %v2345
  %v2410 = vmul.f32 %v1898, %v2346
  %v2411 = vmul.f32 %v1899, %v2347
  %v2412 = vmul.f32 %v1900, %v2348
  %v2413 = vmul.f32 %v1901, %v2349
  %v2414 = vmul.f32 %v1902, %v2350
  %v2415 = vmul.f32 %v1903, %v2351
  %v2416 = vmul.f32 %v1904, %v2352
  %v2417 = vmul.f32 %v1905, %v2353
  %v2418 = vmul.f32 %v1906, %v2354
  %v2419 = vmul.f32 %v1907, %v2355
  %v2420 = vmul.f32 %v1908, %v2356
  %v2421 = vmul.f32 %v1909, %v2357
  %v2422 = vmul.f32 %v1910, %v2358
  %v2423 = vmul.f32 %v1911, %v2359
  %v2424 = vmul.f32 %v1912, %v2360
  %v2425 = vmul.f32 %v1913, %v2361
  %v2426 = vmul.f32 %v1914, %v2362
  %v2427 = vmul.f32 %v1915, %v2363
  %v2428 = vmul.f32 %v1916, %v2364
  %v2429 = vmul.f32 %v1917, %v2365
  %v2430 = vmul.f32 %v1918, %v2366
  %v2431 = vmul.f32 %v1919, %v2367
  %v2432 = vmul.f32 %v1920, %v2368
  %v2433 = vmul.f32 %v1921, %v2369
  %v2434 = vmul.f32 %v1922, %v2370
  %v2435 = vmul.f32 %v1923, %v2371
  %v2436 = vmul.f32 %v1924, %v2372
  %v2437 = vmul.f32 %v1925, %v2373
  %v2438 = vmul.f32 %v1926, %v2374
  %v2439 = vmul.f32 %v1927, %v2375
  %v2440 = vmul.f32 %v1928, %v2376
  %v2441 = vmul.f32 %v1929, %v2377
  %v2442 = vmul.f32 %v1930, %v2378
  %v2443 = vmul.f32 %v1931, %v2379
  %v2444 = vmul.f32 %v1932, %v2380
  %v2445 = vmul.f32 %v1933, %v2381
  %v2446 = vmul.f32 %v1934, %v2382
  %v2447 = vmul.f32 %v1935, %v2383
  %v2448 = vmul.f32 %v1936, %v2384
  %v2449 = vmul.f32 %v1937, %v2385
  %v2450 = vmul.f32 %v1938, %v2386
  %v2451 = vmul.f32 %v1939, %v2387
  %v2452 = vmul.f32 %v1940, %v2388
  %v2453 = vmul.f32 %v1941, %v2389
  %v2454 = vmul.f32 %v1942, %v2390
  %v2455 = vmul.f32 %v1943, %v2391
  %v2456 = vmul.f32 %v1944, %v2392
  %v2457 = vmul.f32 %v1945, %v2393
  %v2458 = vmul.f32 %v1946, %v2394
  %v2459 = vmul.f32 %v1947, %v2395
  %v2460 = vmul.f32 %v1948, %v2396
  %v2461 = vmul.f32 %v1949, %v2397
  %v2462 = vmul.f32 %v1950, %v2398
  %v2463 = vadd.f32 %v2399, -1.135204
  %v2464 = vadd.f32 %v2400, -1.135204
  %v2465 = vadd.f32 %v2401, -1.135204
  %v2466 = vadd.f32 %v2402, -1.135204
  %v2467 = vadd.f32 %v2403, -1.135204
  %v2468 = vadd.f32 %v2404, -1.135204
  %v2469 = vadd.f32 %v2405, -1.135204
  %v2470 = vadd.f32 %v2406, -1.135204
  %v2471 = vadd.f32 %v2407, -1.135204
  %v2472 = vadd.f32 %v2408, -1.135204
  %v2473 = vadd.f32 %v2409, -1.135204
  %v2474 = vadd.f32 %v2410, -1.135204
  %v2475 = vadd.f32 %v2411, -1.135204
  %v2476 = vadd.f32 %v2412, -1.135204
  %v2477 = vadd.f32 %v2413, -1.135204
  %v2478 = vadd.f32 %v2414, -1.135204
  %v2479 = vadd.f32 %v2415, -1.135204
  %v2480 = vadd.f32 %v2416, -1.135204
  %v2481 = vadd.f32 %v2417, -1.135204
  %v2482 = vadd.f32 %v2418, -1.135204
  %v2483 = vadd.f32 %v2419, -1.135204
  %v2484 = vadd.f32 %v2420, -1.135204
  %v2485 = vadd.f32 %v2421, -1.135204
  %v2486 = vadd.f32 %v2422, -1.135204
  %v2487 = vadd.f32 %v2423, -1.135204
  %v2488 = vadd.f32 %v2424, -1.135204
  %v2489 = vadd.f32 %v2425, -1.135204
  %v2490 = vadd.f32 %v2426, -1.135204
  %v2491 = vadd.f32 %v2427, -1.135204
  %v2492 = vadd.f32 %v2428, -1.135204
  %v2493 = vadd.f32 %v2429, -1.135204
  %v2494 = vadd.f32 %v2430, -1.135204
  %v2495 = vadd.f32 %v2431, -1.135204
  %v2496 = vadd.f32 %v2432, -1.135204
  %v2497 = vadd.f32 %v2433, -1.135204
  %v2498 = vadd.f32 %v2434, -1.135204
  %v2499 = vadd.f32 %v2435, -1.135204
  %v2500 = vadd.f32 %v2436, -1.135204
  %v2501 = vadd.f32 %v2437, -1.135204
  %v2502 = vadd.f32 %v2438, -1.135204
  %v2503 = vadd.f32 %v2439, -1.135204
  %v2504 = vadd.f32 %v2440, -1.135204
  %v2505 = vadd.f32 %v2441, -1.135204
  %v2506 = vadd.f32 %v2442, -1.135204
  %v2507 = vadd.f32 %v2443, -1.135204
  %v2508 = vadd.f32 %v2444, -1.135204
  %v2509 = vadd.f32 %v2445, -1.135204
  %v2510 = vadd.f32 %v2446, -1.135204
  %v2511 = vadd.f32 %v2447, -1.135204
  %v2512 = vadd.f32 %v2448, -1.135204
  %v2513 = vadd.f32 %v2449, -1.135204
  %v2514 = vadd.f32 %v2450, -1.135204
  %v2515 = vadd.f32 %v2451, -1.135204
  %v2516 = vadd.f32 %v2452, -1.135204
  %v2517 = vadd.f32 %v2453, -1.135204
  %v2518 = vadd.f32 %v2454, -1.135204
  %v2519 = vadd.f32 %v2455, -1.135204
  %v2520 = vadd.f32 %v2456, -1.135204
  %v2521 = vadd.f32 %v2457, -1.135204
  %v2522 = vadd.f32 %v2458, -1.135204
  %v2523 = vadd.f32 %v2459, -1.135204
  %v2524 = vadd.f32 %v2460, -1.135204
  %v2525 = vadd.f32 %v2461, -1.135204
  %v2526 = vadd.f32 %v2462, -1.135204
  %v2527 = vmul.f32 %v1887, %v2463
  %v2528 = vmul.f32 %v1888, %v2464
  %v2529 = vmul.f32 %v1889, %v2465
  %v2530 = vmul.f32 %v1890, %v2466
  %v2531 = vmul.f32 %v1891, %v2467
  %v2532 = vmul.f32 %v1892, %v2468
  %v2533 = vmul.f32 %v1893, %v2469
  %v2534 = vmul.f32 %v1894, %v2470
  %v2535 = vmul.f32 %v1895, %v2471
  %v2536 = vmul.f32 %v1896, %v2472
  %v2537 = vmul.f32 %v1897, %v2473
  %v2538 = vmul.f32 %v1898, %v2474
  %v2539 = vmul.f32 %v1899, %v2475
  %v2540 = vmul.f32 %v1900, %v2476
  %v2541 = vmul.f32 %v1901, %v2477
  %v2542 = vmul.f32 %v1902, %v2478
  %v2543 = vmul.f32 %v1903, %v2479
  %v2544 = vmul.f32 %v1904, %v2480
  %v2545 = vmul.f32 %v1905, %v2481
  %v2546 = vmul.f32 %v1906, %v2482
  %v2547 = vmul.f32 %v1907, %v2483
  %v2548 = vmul.f32 %v1908, %v2484
  %v2549 = vmul.f32 %v1909, %v2485
  %v2550 = vmul.f32 %v1910, %v2486
  %v2551 = vmul.f32 %v1911, %v2487
  %v2552 = vmul.f32 %v1912, %v2488
  %v2553 = vmul.f32 %v1913, %v2489
  %v2554 = vmul.f32 %v1914, %v2490
  %v2555 = vmul.f32 %v1915, %v2491
  %v2556 = vmul.f32 %v1916, %v2492
  %v2557 = vmul.f32 %v1917, %v2493
  %v2558 = vmul.f32 %v1918, %v2494
  %v2559 = vmul.f32 %v1919, %v2495
  %v2560 = vmul.f32 %v1920, %v2496
  %v2561 = vmul.f32 %v1921, %v2497
  %v2562 = vmul.f32 %v1922, %v2498
  %v2563 = vmul.f32 %v1923, %v2499
  %v2564 = vmul.f32 %v1924, %v2500
  %v2565 = vmul.f32 %v1925, %v2501
  %v2566 = vmul.f32 %v1926, %v2502
  %v2567 = vmul.f32 %v1927, %v2503
  %v2568 = vmul.f32 %v1928, %v2504
  %v2569 = vmul.f32 %v1929, %v2505
  %v2570 = vmul.f32 %v1930, %v2506
  %v2571 = vmul.f32 %v1931, %v2507
  %v2572 = vmul.f32 %v1932, %v2508
  %v2573 = vmul.f32 %v1933, %v2509
  %v2574 = vmul.f32 %v1934, %v2510
  %v2575 = vmul.f32 %v1935, %v2511
  %v2576 = vmul.f32 %v1936, %v2512
  %v2577 = vmul.f32 %v1937, %v2513
  %v2578 = vmul.f32 %v1938, %v2514
  %v2579 = vmul.f32 %v1939, %v2515
  %v2580 = vmul.f32 %v1940, %v2516
  %v2581 = vmul.f32 %v1941, %v2517
  %v2582 = vmul.f32 %v1942, %v2518
  %v2583 = vmul.f32 %v1943, %v2519
  %v2584 = vmul.f32 %v1944, %v2520
  %v2585 = vmul.f32 %v1945, %v2521
  %v2586 = vmul.f32 %v1946, %v2522
  %v2587 = vmul.f32 %v1947, %v2523
  %v2588 = vmul.f32 %v1948, %v2524
  %v2589 = vmul.f32 %v1949, %v2525
  %v2590 = vmul.f32 %v1950, %v2526
  %v2591 = vadd.f32 %v2527, 0.27886808
  %v2592 = vadd.f32 %v2528, 0.27886808
  %v2593 = vadd.f32 %v2529, 0.27886808
  %v2594 = vadd.f32 %v2530, 0.27886808
  %v2595 = vadd.f32 %v2531, 0.27886808
  %v2596 = vadd.f32 %v2532, 0.27886808
  %v2597 = vadd.f32 %v2533, 0.27886808
  %v2598 = vadd.f32 %v2534, 0.27886808
  %v2599 = vadd.f32 %v2535, 0.27886808
  %v2600 = vadd.f32 %v2536, 0.27886808
  %v2601 = vadd.f32 %v2537, 0.27886808
  %v2602 = vadd.f32 %v2538, 0.27886808
  %v2603 = vadd.f32 %v2539, 0.27886808
  %v2604 = vadd.f32 %v2540, 0.27886808
  %v2605 = vadd.f32 %v2541, 0.27886808
  %v2606 = vadd.f32 %v2542, 0.27886808
  %v2607 = vadd.f32 %v2543, 0.27886808
  %v2608 = vadd.f32 %v2544, 0.27886808
  %v2609 = vadd.f32 %v2545, 0.27886808
  %v2610 = vadd.f32 %v2546, 0.27886808
  %v2611 = vadd.f32 %v2547, 0.27886808
  %v2612 = vadd.f32 %v2548, 0.27886808
  %v2613 = vadd.f32 %v2549, 0.27886808
  %v2614 = vadd.f32 %v2550, 0.27886808
  %v2615 = vadd.f32 %v2551, 0.27886808
  %v2616 = vadd.f32 %v2552, 0.27886808
  %v2617 = vadd.f32 %v2553, 0.27886808
  %v2618 = vadd.f32 %v2554, 0.27886808
  %v2619 = vadd.f32 %v2555, 0.27886808
  %v2620 = vadd.f32 %v2556, 0.27886808
  %v2621 = vadd.f32 %v2557, 0.27886808
  %v2622 = vadd.f32 %v2558, 0.27886808
  %v2623 = vadd.f32 %v2559, 0.27886808
  %v2624 = vadd.f32 %v2560, 0.27886808
  %v2625 = vadd.f32 %v2561, 0.27886808
  %v2626 = vadd.f32 %v2562, 0.27886808
  %v2627 = vadd.f32 %v2563, 0.27886808
  %v2628 = vadd.f32 %v2564, 0.27886808
  %v2629 = vadd.f32 %v2565, 0.27886808
  %v2630 = vadd.f32 %v2566, 0.27886808
  %v2631 = vadd.f32 %v2567, 0.27886808
  %v2632 = vadd.f32 %v2568, 0.27886808
  %v2633 = vadd.f32 %v2569, 0.27886808
  %v2634 = vadd.f32 %v2570, 0.27886808
  %v2635 = vadd.f32 %v2571, 0.27886808
  %v2636 = vadd.f32 %v2572, 0.27886808
  %v2637 = vadd.f32 %v2573, 0.27886808
  %v2638 = vadd.f32 %v2574, 0.27886808
  %v2639 = vadd.f32 %v2575, 0.27886808
  %v2640 = vadd.f32 %v2576, 0.27886808
  %v2641 = vadd.f32 %v2577, 0.27886808
  %v2642 = vadd.f32 %v2578, 0.27886808
  %v2643 = vadd.f32 %v2579, 0.27886808
  %v2644 = vadd.f32 %v2580, 0.27886808
  %v2645 = vadd.f32 %v2581, 0.27886808
  %v2646 = vadd.f32 %v2582, 0.27886808
  %v2647 = vadd.f32 %v2583, 0.27886808
  %v2648 = vadd.f32 %v2584, 0.27886808
  %v2649 = vadd.f32 %v2585, 0.27886808
  %v2650 = vadd.f32 %v2586, 0.27886808
  %v2651 = vadd.f32 %v2587, 0.27886808
  %v2652 = vadd.f32 %v2588, 0.27886808
  %v2653 = vadd.f32 %v2589, 0.27886808
  %v2654 = vadd.f32 %v2590, 0.27886808
  %v2655 = vmul.f32 %v1887, %v2591
  %v2656 = vmul.f32 %v1888, %v2592
  %v2657 = vmul.f32 %v1889, %v2593
  %v2658 = vmul.f32 %v1890, %v2594
  %v2659 = vmul.f32 %v1891, %v2595
  %v2660 = vmul.f32 %v1892, %v2596
  %v2661 = vmul.f32 %v1893, %v2597
  %v2662 = vmul.f32 %v1894, %v2598
  %v2663 = vmul.f32 %v1895, %v2599
  %v2664 = vmul.f32 %v1896, %v2600
  %v2665 = vmul.f32 %v1897, %v2601
  %v2666 = vmul.f32 %v1898, %v2602
  %v2667 = vmul.f32 %v1899, %v2603
  %v2668 = vmul.f32 %v1900, %v2604
  %v2669 = vmul.f32 %v1901, %v2605
  %v2670 = vmul.f32 %v1902, %v2606
  %v2671 = vmul.f32 %v1903, %v2607
  %v2672 = vmul.f32 %v1904, %v2608
  %v2673 = vmul.f32 %v1905, %v2609
  %v2674 = vmul.f32 %v1906, %v2610
  %v2675 = vmul.f32 %v1907, %v2611
  %v2676 = vmul.f32 %v1908, %v2612
  %v2677 = vmul.f32 %v1909, %v2613
  %v2678 = vmul.f32 %v1910, %v2614
  %v2679 = vmul.f32 %v1911, %v2615
  %v2680 = vmul.f32 %v1912, %v2616
  %v2681 = vmul.f32 %v1913, %v2617
  %v2682 = vmul.f32 %v1914, %v2618
  %v2683 = vmul.f32 %v1915, %v2619
  %v2684 = vmul.f32 %v1916, %v2620
  %v2685 = vmul.f32 %v1917, %v2621
  %v2686 = vmul.f32 %v1918, %v2622
  %v2687 = vmul.f32 %v1919, %v2623
  %v2688 = vmul.f32 %v1920, %v2624
  %v2689 = vmul.f32 %v1921, %v2625
  %v2690 = vmul.f32 %v1922, %v2626
  %v2691 = vmul.f32 %v1923, %v2627
  %v2692 = vmul.f32 %v1924, %v2628
  %v2693 = vmul.f32 %v1925, %v2629
  %v2694 = vmul.f32 %v1926, %v2630
  %v2695 = vmul.f32 %v1927, %v2631
  %v2696 = vmul.f32 %v1928, %v2632
  %v2697 = vmul.f32 %v1929, %v2633
  %v2698 = vmul.f32 %v1930, %v2634
  %v2699 = vmul.f32 %v1931, %v2635
  %v2700 = vmul.f32 %v1932, %v2636
  %v2701 = vmul.f32 %v1933, %v2637
  %v2702 = vmul.f32 %v1934, %v2638
  %v2703 = vmul.f32 %v1935, %v2639
  %v2704 = vmul.f32 %v1936, %v2640
  %v2705 = vmul.f32 %v1937, %v2641
  %v2706 = vmul.f32 %v1938, %v2642
  %v2707 = vmul.f32 %v1939, %v2643
  %v2708 = vmul.f32 %v1940, %v2644
  %v2709 = vmul.f32 %v1941, %v2645
  %v2710 = vmul.f32 %v1942, %v2646
  %v2711 = vmul.f32 %v1943, %v2647
  %v2712 = vmul.f32 %v1944, %v2648
  %v2713 = vmul.f32 %v1945, %v2649
  %v2714 = vmul.f32 %v1946, %v2650
  %v2715 = vmul.f32 %v1947, %v2651
  %v2716 = vmul.f32 %v1948, %v2652
  %v2717 = vmul.f32 %v1949, %v2653
  %v2718 = vmul.f32 %v1950, %v2654
  %v2719 = vadd.f32 %v2655, -0.18628806
  %v2720 = vadd.f32 %v2656, -0.18628806
  %v2721 = vadd.f32 %v2657, -0.18628806
  %v2722 = vadd.f32 %v2658, -0.18628806
  %v2723 = vadd.f32 %v2659, -0.18628806
  %v2724 = vadd.f32 %v2660, -0.18628806
  %v2725 = vadd.f32 %v2661, -0.18628806
  %v2726 = vadd.f32 %v2662, -0.18628806
  %v2727 = vadd.f32 %v2663, -0.18628806
  %v2728 = vadd.f32 %v2664, -0.18628806
  %v2729 = vadd.f32 %v2665, -0.18628806
  %v2730 = vadd.f32 %v2666, -0.18628806
  %v2731 = vadd.f32 %v2667, -0.18628806
  %v2732 = vadd.f32 %v2668, -0.18628806
  %v2733 = vadd.f32 %v2669, -0.18628806
  %v2734 = vadd.f32 %v2670, -0.18628806
  %v2735 = vadd.f32 %v2671, -0.18628806
  %v2736 = vadd.f32 %v2672, -0.18628806
  %v2737 = vadd.f32 %v2673, -0.18628806
  %v2738 = vadd.f32 %v2674, -0.18628806
  %v2739 = vadd.f32 %v2675, -0.18628806
  %v2740 = vadd.f32 %v2676, -0.18628806
  %v2741 = vadd.f32 %v2677, -0.18628806
  %v2742 = vadd.f32 %v2678, -0.18628806
  %v2743 = vadd.f32 %v2679, -0.18628806
  %v2744 = vadd.f32 %v2680, -0.18628806
  %v2745 = vadd.f32 %v2681, -0.18628806
  %v2746 = vadd.f32 %v2682, -0.18628806
  %v2747 = vadd.f32 %v2683, -0.18628806
  %v2748 = vadd.f32 %v2684, -0.18628806
  %v2749 = vadd.f32 %v2685, -0.18628806
  %v2750 = vadd.f32 %v2686, -0.18628806
  %v2751 = vadd.f32 %v2687, -0.18628806
  %v2752 = vadd.f32 %v2688, -0.18628806
  %v2753 = vadd.f32 %v2689, -0.18628806
  %v2754 = vadd.f32 %v2690, -0.18628806
  %v2755 = vadd.f32 %v2691, -0.18628806
  %v2756 = vadd.f32 %v2692, -0.18628806
  %v2757 = vadd.f32 %v2693, -0.18628806
  %v2758 = vadd.f32 %v2694, -0.18628806
  %v2759 = vadd.f32 %v2695, -0.18628806
  %v2760 = vadd.f32 %v2696, -0.18628806
  %v2761 = vadd.f32 %v2697, -0.18628806
  %v2762 = vadd.f32 %v2698, -0.18628806
  %v2763 = vadd.f32 %v2699, -0.18628806
  %v2764 = vadd.f32 %v2700, -0.18628806
  %v2765 = vadd.f32 %v2701, -0.18628806
  %v2766 = vadd.f32 %v2702, -0.18628806
  %v2767 = vadd.f32 %v2703, -0.18628806
  %v2768 = vadd.f32 %v2704, -0.18628806
  %v2769 = vadd.f32 %v2705, -0.18628806
  %v2770 = vadd.f32 %v2706, -0.18628806
  %v2771 = vadd.f32 %v2707, -0.18628806
  %v2772 = vadd.f32 %v2708, -0.18628806
  %v2773 = vadd.f32 %v2709, -0.18628806
  %v2774 = vadd.f32 %v2710, -0.18628806
  %v2775 = vadd.f32 %v2711, -0.18628806
  %v2776 = vadd.f32 %v2712, -0.18628806
  %v2777 = vadd.f32 %v2713, -0.18628806
  %v2778 = vadd.f32 %v2714, -0.18628806
  %v2779 = vadd.f32 %v2715, -0.18628806
  %v2780 = vadd.f32 %v2716, -0.18628806
  %v2781 = vadd.f32 %v2717, -0.18628806
  %v2782 = vadd.f32 %v2718, -0.18628806
  %v2783 = vmul.f32 %v1887, %v2719
  %v2784 = vmul.f32 %v1888, %v2720
  %v2785 = vmul.f32 %v1889, %v2721
  %v2786 = vmul.f32 %v1890, %v2722
  %v2787 = vmul.f32 %v1891, %v2723
  %v2788 = vmul.f32 %v1892, %v2724
  %v2789 = vmul.f32 %v1893, %v2725
  %v2790 = vmul.f32 %v1894, %v2726
  %v2791 = vmul.f32 %v1895, %v2727
  %v2792 = vmul.f32 %v1896, %v2728
  %v2793 = vmul.f32 %v1897, %v2729
  %v2794 = vmul.f32 %v1898, %v2730
  %v2795 = vmul.f32 %v1899, %v2731
  %v2796 = vmul.f32 %v1900, %v2732
  %v2797 = vmul.f32 %v1901, %v2733
  %v2798 = vmul.f32 %v1902, %v2734
  %v2799 = vmul.f32 %v1903, %v2735
  %v2800 = vmul.f32 %v1904, %v2736
  %v2801 = vmul.f32 %v1905, %v2737
  %v2802 = vmul.f32 %v1906, %v2738
  %v2803 = vmul.f32 %v1907, %v2739
  %v2804 = vmul.f32 %v1908, %v2740
  %v2805 = vmul.f32 %v1909, %v2741
  %v2806 = vmul.f32 %v1910, %v2742
  %v2807 = vmul.f32 %v1911, %v2743
  %v2808 = vmul.f32 %v1912, %v2744
  %v2809 = vmul.f32 %v1913, %v2745
  %v2810 = vmul.f32 %v1914, %v2746
  %v2811 = vmul.f32 %v1915, %v2747
  %v2812 = vmul.f32 %v1916, %v2748
  %v2813 = vmul.f32 %v1917, %v2749
  %v2814 = vmul.f32 %v1918, %v2750
  %v2815 = vmul.f32 %v1919, %v2751
  %v2816 = vmul.f32 %v1920, %v2752
  %v2817 = vmul.f32 %v1921, %v2753
  %v2818 = vmul.f32 %v1922, %v2754
  %v2819 = vmul.f32 %v1923, %v2755
  %v2820 = vmul.f32 %v1924, %v2756
  %v2821 = vmul.f32 %v1925, %v2757
  %v2822 = vmul.f32 %v1926, %v2758
  %v2823 = vmul.f32 %v1927, %v2759
  %v2824 = vmul.f32 %v1928, %v2760
  %v2825 = vmul.f32 %v1929, %v2761
  %v2826 = vmul.f32 %v1930, %v2762
  %v2827 = vmul.f32 %v1931, %v2763
  %v2828 = vmul.f32 %v1932, %v2764
  %v2829 = vmul.f32 %v1933, %v2765
  %v2830 = vmul.f32 %v1934, %v2766
  %v2831 = vmul.f32 %v1935, %v2767
  %v2832 = vmul.f32 %v1936, %v2768
  %v2833 = vmul.f32 %v1937, %v2769
  %v2834 = vmul.f32 %v1938, %v2770
  %v2835 = vmul.f32 %v1939, %v2771
  %v2836 = vmul.f32 %v1940, %v2772
  %v2837 = vmul.f32 %v1941, %v2773
  %v2838 = vmul.f32 %v1942, %v2774
  %v2839 = vmul.f32 %v1943, %v2775
  %v2840 = vmul.f32 %v1944, %v2776
  %v2841 = vmul.f32 %v1945, %v2777
  %v2842 = vmul.f32 %v1946, %v2778
  %v2843 = vmul.f32 %v1947, %v2779
  %v2844 = vmul.f32 %v1948, %v2780
  %v2845 = vmul.f32 %v1949, %v2781
  %v2846 = vmul.f32 %v1950, %v2782
  %v2847 = vadd.f32 %v2783, 0.09678418
  %v2848 = vadd.f32 %v2784, 0.09678418
  %v2849 = vadd.f32 %v2785, 0.09678418
  %v2850 = vadd.f32 %v2786, 0.09678418
  %v2851 = vadd.f32 %v2787, 0.09678418
  %v2852 = vadd.f32 %v2788, 0.09678418
  %v2853 = vadd.f32 %v2789, 0.09678418
  %v2854 = vadd.f32 %v2790, 0.09678418
  %v2855 = vadd.f32 %v2791, 0.09678418
  %v2856 = vadd.f32 %v2792, 0.09678418
  %v2857 = vadd.f32 %v2793, 0.09678418
  %v2858 = vadd.f32 %v2794, 0.09678418
  %v2859 = vadd.f32 %v2795, 0.09678418
  %v2860 = vadd.f32 %v2796, 0.09678418
  %v2861 = vadd.f32 %v2797, 0.09678418
  %v2862 = vadd.f32 %v2798, 0.09678418
  %v2863 = vadd.f32 %v2799, 0.09678418
  %v2864 = vadd.f32 %v2800, 0.09678418
  %v2865 = vadd.f32 %v2801, 0.09678418
  %v2866 = vadd.f32 %v2802, 0.09678418
  %v2867 = vadd.f32 %v2803, 0.09678418
  %v2868 = vadd.f32 %v2804, 0.09678418
  %v2869 = vadd.f32 %v2805, 0.09678418
  %v2870 = vadd.f32 %v2806, 0.09678418
  %v2871 = vadd.f32 %v2807, 0.09678418
  %v2872 = vadd.f32 %v2808, 0.09678418
  %v2873 = vadd.f32 %v2809, 0.09678418
  %v2874 = vadd.f32 %v2810, 0.09678418
  %v2875 = vadd.f32 %v2811, 0.09678418
  %v2876 = vadd.f32 %v2812, 0.09678418
  %v2877 = vadd.f32 %v2813, 0.09678418
  %v2878 = vadd.f32 %v2814, 0.09678418
  %v2879 = vadd.f32 %v2815, 0.09678418
  %v2880 = vadd.f32 %v2816, 0.09678418
  %v2881 = vadd.f32 %v2817, 0.09678418
  %v2882 = vadd.f32 %v2818, 0.09678418
  %v2883 = vadd.f32 %v2819, 0.09678418
  %v2884 = vadd.f32 %v2820, 0.09678418
  %v2885 = vadd.f32 %v2821, 0.09678418
  %v2886 = vadd.f32 %v2822, 0.09678418
  %v2887 = vadd.f32 %v2823, 0.09678418
  %v2888 = vadd.f32 %v2824, 0.09678418
  %v2889 = vadd.f32 %v2825, 0.09678418
  %v2890 = vadd.f32 %v2826, 0.09678418
  %v2891 = vadd.f32 %v2827, 0.09678418
  %v2892 = vadd.f32 %v2828, 0.09678418
  %v2893 = vadd.f32 %v2829, 0.09678418
  %v2894 = vadd.f32 %v2830, 0.09678418
  %v2895 = vadd.f32 %v2831, 0.09678418
  %v2896 = vadd.f32 %v2832, 0.09678418
  %v2897 = vadd.f32 %v2833, 0.09678418
  %v2898 = vadd.f32 %v2834, 0.09678418
  %v2899 = vadd.f32 %v2835, 0.09678418
  %v2900 = vadd.f32 %v2836, 0.09678418
  %v2901 = vadd.f32 %v2837, 0.09678418
  %v2902 = vadd.f32 %v2838, 0.09678418
  %v2903 = vadd.f32 %v2839, 0.09678418
  %v2904 = vadd.f32 %v2840, 0.09678418
  %v2905 = vadd.f32 %v2841, 0.09678418
  %v2906 = vadd.f32 %v2842, 0.09678418
  %v2907 = vadd.f32 %v2843, 0.09678418
  %v2908 = vadd.f32 %v2844, 0.09678418
  %v2909 = vadd.f32 %v2845, 0.09678418
  %v2910 = vadd.f32 %v2846, 0.09678418
  %v2911 = vmul.f32 %v1887, %v2847
  %v2912 = vmul.f32 %v1888, %v2848
  %v2913 = vmul.f32 %v1889, %v2849
  %v2914 = vmul.f32 %v1890, %v2850
  %v2915 = vmul.f32 %v1891, %v2851
  %v2916 = vmul.f32 %v1892, %v2852
  %v2917 = vmul.f32 %v1893, %v2853
  %v2918 = vmul.f32 %v1894, %v2854
  %v2919 = vmul.f32 %v1895, %v2855
  %v2920 = vmul.f32 %v1896, %v2856
  %v2921 = vmul.f32 %v1897, %v2857
  %v2922 = vmul.f32 %v1898, %v2858
  %v2923 = vmul.f32 %v1899, %v2859
  %v2924 = vmul.f32 %v1900, %v2860
  %v2925 = vmul.f32 %v1901, %v2861
  %v2926 = vmul.f32 %v1902, %v2862
  %v2927 = vmul.f32 %v1903, %v2863
  %v2928 = vmul.f32 %v1904, %v2864
  %v2929 = vmul.f32 %v1905, %v2865
  %v2930 = vmul.f32 %v1906, %v2866
  %v2931 = vmul.f32 %v1907, %v2867
  %v2932 = vmul.f32 %v1908, %v2868
  %v2933 = vmul.f32 %v1909, %v2869
  %v2934 = vmul.f32 %v1910, %v2870
  %v2935 = vmul.f32 %v1911, %v2871
  %v2936 = vmul.f32 %v1912, %v2872
  %v2937 = vmul.f32 %v1913, %v2873
  %v2938 = vmul.f32 %v1914, %v2874
  %v2939 = vmul.f32 %v1915, %v2875
  %v2940 = vmul.f32 %v1916, %v2876
  %v2941 = vmul.f32 %v1917, %v2877
  %v2942 = vmul.f32 %v1918, %v2878
  %v2943 = vmul.f32 %v1919, %v2879
  %v2944 = vmul.f32 %v1920, %v2880
  %v2945 = vmul.f32 %v1921, %v2881
  %v2946 = vmul.f32 %v1922, %v2882
  %v2947 = vmul.f32 %v1923, %v2883
  %v2948 = vmul.f32 %v1924, %v2884
  %v2949 = vmul.f32 %v1925, %v2885
  %v2950 = vmul.f32 %v1926, %v2886
  %v2951 = vmul.f32 %v1927, %v2887
  %v2952 = vmul.f32 %v1928, %v2888
  %v2953 = vmul.f32 %v1929, %v2889
  %v2954 = vmul.f32 %v1930, %v2890
  %v2955 = vmul.f32 %v1931, %v2891
  %v2956 = vmul.f32 %v1932, %v2892
  %v2957 = vmul.f32 %v1933, %v2893
  %v2958 = vmul.f32 %v1934, %v2894
  %v2959 = vmul.f32 %v1935, %v2895
  %v2960 = vmul.f32 %v1936, %v2896
  %v2961 = vmul.f32 %v1937, %v2897
  %v2962 = vmul.f32 %v1938, %v2898
  %v2963 = vmul.f32 %v1939, %v2899
  %v2964 = vmul.f32 %v1940, %v2900
  %v2965 = vmul.f32 %v1941, %v2901
  %v2966 = vmul.f32 %v1942, %v2902
  %v2967 = vmul.f32 %v1943, %v2903
  %v2968 = vmul.f32 %v1944, %v2904
  %v2969 = vmul.f32 %v1945, %v2905
  %v2970 = vmul.f32 %v1946, %v2906
  %v2971 = vmul.f32 %v1947, %v2907
  %v2972 = vmul.f32 %v1948, %v2908
  %v2973 = vmul.f32 %v1949, %v2909
  %v2974 = vmul.f32 %v1950, %v2910
  %v2975 = vadd.f32 %v2911, 0.37409195
  %v2976 = vadd.f32 %v2912, 0.37409195
  %v2977 = vadd.f32 %v2913, 0.37409195
  %v2978 = vadd.f32 %v2914, 0.37409195
  %v2979 = vadd.f32 %v2915, 0.37409195
  %v2980 = vadd.f32 %v2916, 0.37409195
  %v2981 = vadd.f32 %v2917, 0.37409195
  %v2982 = vadd.f32 %v2918, 0.37409195
  %v2983 = vadd.f32 %v2919, 0.37409195
  %v2984 = vadd.f32 %v2920, 0.37409195
  %v2985 = vadd.f32 %v2921, 0.37409195
  %v2986 = vadd.f32 %v2922, 0.37409195
  %v2987 = vadd.f32 %v2923, 0.37409195
  %v2988 = vadd.f32 %v2924, 0.37409195
  %v2989 = vadd.f32 %v2925, 0.37409195
  %v2990 = vadd.f32 %v2926, 0.37409195
  %v2991 = vadd.f32 %v2927, 0.37409195
  %v2992 = vadd.f32 %v2928, 0.37409195
  %v2993 = vadd.f32 %v2929, 0.37409195
  %v2994 = vadd.f32 %v2930, 0.37409195
  %v2995 = vadd.f32 %v2931, 0.37409195
  %v2996 = vadd.f32 %v2932, 0.37409195
  %v2997 = vadd.f32 %v2933, 0.37409195
  %v2998 = vadd.f32 %v2934, 0.37409195
  %v2999 = vadd.f32 %v2935, 0.37409195
  %v3000 = vadd.f32 %v2936, 0.37409195
  %v3001 = vadd.f32 %v2937, 0.37409195
  %v3002 = vadd.f32 %v2938, 0.37409195
  %v3003 = vadd.f32 %v2939, 0.37409195
  %v3004 = vadd.f32 %v2940, 0.37409195
  %v3005 = vadd.f32 %v2941, 0.37409195
  %v3006 = vadd.f32 %v2942, 0.37409195
  %v3007 = vadd.f32 %v2943, 0.37409195
  %v3008 = vadd.f32 %v2944, 0.37409195
  %v3009 = vadd.f32 %v2945, 0.37409195
  %v3010 = vadd.f32 %v2946, 0.37409195
  %v3011 = vadd.f32 %v2947, 0.37409195
  %v3012 = vadd.f32 %v2948, 0.37409195
  %v3013 = vadd.f32 %v2949, 0.37409195
  %v3014 = vadd.f32 %v2950, 0.37409195
  %v3015 = vadd.f32 %v2951, 0.37409195
  %v3016 = vadd.f32 %v2952, 0.37409195
  %v3017 = vadd.f32 %v2953, 0.37409195
  %v3018 = vadd.f32 %v2954, 0.37409195
  %v3019 = vadd.f32 %v2955, 0.37409195
  %v3020 = vadd.f32 %v2956, 0.37409195
  %v3021 = vadd.f32 %v2957, 0.37409195
  %v3022 = vadd.f32 %v2958, 0.37409195
  %v3023 = vadd.f32 %v2959, 0.37409195
  %v3024 = vadd.f32 %v2960, 0.37409195
  %v3025 = vadd.f32 %v2961, 0.37409195
  %v3026 = vadd.f32 %v2962, 0.37409195
  %v3027 = vadd.f32 %v2963, 0.37409195
  %v3028 = vadd.f32 %v2964, 0.37409195
  %v3029 = vadd.f32 %v2965, 0.37409195
  %v3030 = vadd.f32 %v2966, 0.37409195
  %v3031 = vadd.f32 %v2967, 0.37409195
  %v3032 = vadd.f32 %v2968, 0.37409195
  %v3033 = vadd.f32 %v2969, 0.37409195
  %v3034 = vadd.f32 %v2970, 0.37409195
  %v3035 = vadd.f32 %v2971, 0.37409195
  %v3036 = vadd.f32 %v2972, 0.37409195
  %v3037 = vadd.f32 %v2973, 0.37409195
  %v3038 = vadd.f32 %v2974, 0.37409195
  %v3039 = vmul.f32 %v1887, %v2975
  %v3040 = vmul.f32 %v1888, %v2976
  %v3041 = vmul.f32 %v1889, %v2977
  %v3042 = vmul.f32 %v1890, %v2978
  %v3043 = vmul.f32 %v1891, %v2979
  %v3044 = vmul.f32 %v1892, %v2980
  %v3045 = vmul.f32 %v1893, %v2981
  %v3046 = vmul.f32 %v1894, %v2982
  %v3047 = vmul.f32 %v1895, %v2983
  %v3048 = vmul.f32 %v1896, %v2984
  %v3049 = vmul.f32 %v1897, %v2985
  %v3050 = vmul.f32 %v1898, %v2986
  %v3051 = vmul.f32 %v1899, %v2987
  %v3052 = vmul.f32 %v1900, %v2988
  %v3053 = vmul.f32 %v1901, %v2989
  %v3054 = vmul.f32 %v1902, %v2990
  %v3055 = vmul.f32 %v1903, %v2991
  %v3056 = vmul.f32 %v1904, %v2992
  %v3057 = vmul.f32 %v1905, %v2993
  %v3058 = vmul.f32 %v1906, %v2994
  %v3059 = vmul.f32 %v1907, %v2995
  %v3060 = vmul.f32 %v1908, %v2996
  %v3061 = vmul.f32 %v1909, %v2997
  %v3062 = vmul.f32 %v1910, %v2998
  %v3063 = vmul.f32 %v1911, %v2999
  %v3064 = vmul.f32 %v1912, %v3000
  %v3065 = vmul.f32 %v1913, %v3001
  %v3066 = vmul.f32 %v1914, %v3002
  %v3067 = vmul.f32 %v1915, %v3003
  %v3068 = vmul.f32 %v1916, %v3004
  %v3069 = vmul.f32 %v1917, %v3005
  %v3070 = vmul.f32 %v1918, %v3006
  %v3071 = vmul.f32 %v1919, %v3007
  %v3072 = vmul.f32 %v1920, %v3008
  %v3073 = vmul.f32 %v1921, %v3009
  %v3074 = vmul.f32 %v1922, %v3010
  %v3075 = vmul.f32 %v1923, %v3011
  %v3076 = vmul.f32 %v1924, %v3012
  %v3077 = vmul.f32 %v1925, %v3013
  %v3078 = vmul.f32 %v1926, %v3014
  %v3079 = vmul.f32 %v1927, %v3015
  %v3080 = vmul.f32 %v1928, %v3016
  %v3081 = vmul.f32 %v1929, %v3017
  %v3082 = vmul.f32 %v1930, %v3018
  %v3083 = vmul.f32 %v1931, %v3019
  %v3084 = vmul.f32 %v1932, %v3020
  %v3085 = vmul.f32 %v1933, %v3021
  %v3086 = vmul.f32 %v1934, %v3022
  %v3087 = vmul.f32 %v1935, %v3023
  %v3088 = vmul.f32 %v1936, %v3024
  %v3089 = vmul.f32 %v1937, %v3025
  %v3090 = vmul.f32 %v1938, %v3026
  %v3091 = vmul.f32 %v1939, %v3027
  %v3092 = vmul.f32 %v1940, %v3028
  %v3093 = vmul.f32 %v1941, %v3029
  %v3094 = vmul.f32 %v1942, %v3030
  %v3095 = vmul.f32 %v1943, %v3031
  %v3096 = vmul.f32 %v1944, %v3032
  %v3097 = vmul.f32 %v1945, %v3033
  %v3098 = vmul.f32 %v1946, %v3034
  %v3099 = vmul.f32 %v1947, %v3035
  %v3100 = vmul.f32 %v1948, %v3036
  %v3101 = vmul.f32 %v1949, %v3037
  %v3102 = vmul.f32 %v1950, %v3038
  %v3103 = vadd.f32 %v3039, 1.0000237
  %v3104 = vadd.f32 %v3040, 1.0000237
  %v3105 = vadd.f32 %v3041, 1.0000237
  %v3106 = vadd.f32 %v3042, 1.0000237
  %v3107 = vadd.f32 %v3043, 1.0000237
  %v3108 = vadd.f32 %v3044, 1.0000237
  %v3109 = vadd.f32 %v3045, 1.0000237
  %v3110 = vadd.f32 %v3046, 1.0000237
  %v3111 = vadd.f32 %v3047, 1.0000237
  %v3112 = vadd.f32 %v3048, 1.0000237
  %v3113 = vadd.f32 %v3049, 1.0000237
  %v3114 = vadd.f32 %v3050, 1.0000237
  %v3115 = vadd.f32 %v3051, 1.0000237
  %v3116 = vadd.f32 %v3052, 1.0000237
  %v3117 = vadd.f32 %v3053, 1.0000237
  %v3118 = vadd.f32 %v3054, 1.0000237
  %v3119 = vadd.f32 %v3055, 1.0000237
  %v3120 = vadd.f32 %v3056, 1.0000237
  %v3121 = vadd.f32 %v3057, 1.0000237
  %v3122 = vadd.f32 %v3058, 1.0000237
  %v3123 = vadd.f32 %v3059, 1.0000237
  %v3124 = vadd.f32 %v3060, 1.0000237
  %v3125 = vadd.f32 %v3061, 1.0000237
  %v3126 = vadd.f32 %v3062, 1.0000237
  %v3127 = vadd.f32 %v3063, 1.0000237
  %v3128 = vadd.f32 %v3064, 1.0000237
  %v3129 = vadd.f32 %v3065, 1.0000237
  %v3130 = vadd.f32 %v3066, 1.0000237
  %v3131 = vadd.f32 %v3067, 1.0000237
  %v3132 = vadd.f32 %v3068, 1.0000237
  %v3133 = vadd.f32 %v3069, 1.0000237
  %v3134 = vadd.f32 %v3070, 1.0000237
  %v3135 = vadd.f32 %v3071, 1.0000237
  %v3136 = vadd.f32 %v3072, 1.0000237
  %v3137 = vadd.f32 %v3073, 1.0000237
  %v3138 = vadd.f32 %v3074, 1.0000237
  %v3139 = vadd.f32 %v3075, 1.0000237
  %v3140 = vadd.f32 %v3076, 1.0000237
  %v3141 = vadd.f32 %v3077, 1.0000237
  %v3142 = vadd.f32 %v3078, 1.0000237
  %v3143 = vadd.f32 %v3079, 1.0000237
  %v3144 = vadd.f32 %v3080, 1.0000237
  %v3145 = vadd.f32 %v3081, 1.0000237
  %v3146 = vadd.f32 %v3082, 1.0000237
  %v3147 = vadd.f32 %v3083, 1.0000237
  %v3148 = vadd.f32 %v3084, 1.0000237
  %v3149 = vadd.f32 %v3085, 1.0000237
  %v3150 = vadd.f32 %v3086, 1.0000237
  %v3151 = vadd.f32 %v3087, 1.0000237
  %v3152 = vadd.f32 %v3088, 1.0000237
  %v3153 = vadd.f32 %v3089, 1.0000237
  %v3154 = vadd.f32 %v3090, 1.0000237
  %v3155 = vadd.f32 %v3091, 1.0000237
  %v3156 = vadd.f32 %v3092, 1.0000237
  %v3157 = vadd.f32 %v3093, 1.0000237
  %v3158 = vadd.f32 %v3094, 1.0000237
  %v3159 = vadd.f32 %v3095, 1.0000237
  %v3160 = vadd.f32 %v3096, 1.0000237
  %v3161 = vadd.f32 %v3097, 1.0000237
  %v3162 = vadd.f32 %v3098, 1.0000237
  %v3163 = vadd.f32 %v3099, 1.0000237
  %v3164 = vadd.f32 %v3100, 1.0000237
  %v3165 = vadd.f32 %v3101, 1.0000237
  %v3166 = vadd.f32 %v3102, 1.0000237
  %v3167 = vmul.f32 %v1887, %v3103
  %v3168 = vmul.f32 %v1888, %v3104
  %v3169 = vmul.f32 %v1889, %v3105
  %v3170 = vmul.f32 %v1890, %v3106
  %v3171 = vmul.f32 %v1891, %v3107
  %v3172 = vmul.f32 %v1892, %v3108
  %v3173 = vmul.f32 %v1893, %v3109
  %v3174 = vmul.f32 %v1894, %v3110
  %v3175 = vmul.f32 %v1895, %v3111
  %v3176 = vmul.f32 %v1896, %v3112
  %v3177 = vmul.f32 %v1897, %v3113
  %v3178 = vmul.f32 %v1898, %v3114
  %v3179 = vmul.f32 %v1899, %v3115
  %v3180 = vmul.f32 %v1900, %v3116
  %v3181 = vmul.f32 %v1901, %v3117
  %v3182 = vmul.f32 %v1902, %v3118
  %v3183 = vmul.f32 %v1903, %v3119
  %v3184 = vmul.f32 %v1904, %v3120
  %v3185 = vmul.f32 %v1905, %v3121
  %v3186 = vmul.f32 %v1906, %v3122
  %v3187 = vmul.f32 %v1907, %v3123
  %v3188 = vmul.f32 %v1908, %v3124
  %v3189 = vmul.f32 %v1909, %v3125
  %v3190 = vmul.f32 %v1910, %v3126
  %v3191 = vmul.f32 %v1911, %v3127
  %v3192 = vmul.f32 %v1912, %v3128
  %v3193 = vmul.f32 %v1913, %v3129
  %v3194 = vmul.f32 %v1914, %v3130
  %v3195 = vmul.f32 %v1915, %v3131
  %v3196 = vmul.f32 %v1916, %v3132
  %v3197 = vmul.f32 %v1917, %v3133
  %v3198 = vmul.f32 %v1918, %v3134
  %v3199 = vmul.f32 %v1919, %v3135
  %v3200 = vmul.f32 %v1920, %v3136
  %v3201 = vmul.f32 %v1921, %v3137
  %v3202 = vmul.f32 %v1922, %v3138
  %v3203 = vmul.f32 %v1923, %v3139
  %v3204 = vmul.f32 %v1924, %v3140
  %v3205 = vmul.f32 %v1925, %v3141
  %v3206 = vmul.f32 %v1926, %v3142
  %v3207 = vmul.f32 %v1927, %v3143
  %v3208 = vmul.f32 %v1928, %v3144
  %v3209 = vmul.f32 %v1929, %v3145
  %v3210 = vmul.f32 %v1930, %v3146
  %v3211 = vmul.f32 %v1931, %v3147
  %v3212 = vmul.f32 %v1932, %v3148
  %v3213 = vmul.f32 %v1933, %v3149
  %v3214 = vmul.f32 %v1934, %v3150
  %v3215 = vmul.f32 %v1935, %v3151
  %v3216 = vmul.f32 %v1936, %v3152
  %v3217 = vmul.f32 %v1937, %v3153
  %v3218 = vmul.f32 %v1938, %v3154
  %v3219 = vmul.f32 %v1939, %v3155
  %v3220 = vmul.f32 %v1940, %v3156
  %v3221 = vmul.f32 %v1941, %v3157
  %v3222 = vmul.f32 %v1942, %v3158
  %v3223 = vmul.f32 %v1943, %v3159
  %v3224 = vmul.f32 %v1944, %v3160
  %v3225 = vmul.f32 %v1945, %v3161
  %v3226 = vmul.f32 %v1946, %v3162
  %v3227 = vmul.f32 %v1947, %v3163
  %v3228 = vmul.f32 %v1948, %v3164
  %v3229 = vmul.f32 %v1949, %v3165
  %v3230 = vmul.f32 %v1950, %v3166
  %v3231 = vadd.f32 %v2079, %v3167
  %v3232 = vadd.f32 %v2080, %v3168
  %v3233 = vadd.f32 %v2081, %v3169
  %v3234 = vadd.f32 %v2082, %v3170
  %v3235 = vadd.f32 %v2083, %v3171
  %v3236 = vadd.f32 %v2084, %v3172
  %v3237 = vadd.f32 %v2085, %v3173
  %v3238 = vadd.f32 %v2086, %v3174
  %v3239 = vadd.f32 %v2087, %v3175
  %v3240 = vadd.f32 %v2088, %v3176
  %v3241 = vadd.f32 %v2089, %v3177
  %v3242 = vadd.f32 %v2090, %v3178
  %v3243 = vadd.f32 %v2091, %v3179
  %v3244 = vadd.f32 %v2092, %v3180
  %v3245 = vadd.f32 %v2093, %v3181
  %v3246 = vadd.f32 %v2094, %v3182
  %v3247 = vadd.f32 %v2095, %v3183
  %v3248 = vadd.f32 %v2096, %v3184
  %v3249 = vadd.f32 %v2097, %v3185
  %v3250 = vadd.f32 %v2098, %v3186
  %v3251 = vadd.f32 %v2099, %v3187
  %v3252 = vadd.f32 %v2100, %v3188
  %v3253 = vadd.f32 %v2101, %v3189
  %v3254 = vadd.f32 %v2102, %v3190
  %v3255 = vadd.f32 %v2103, %v3191
  %v3256 = vadd.f32 %v2104, %v3192
  %v3257 = vadd.f32 %v2105, %v3193
  %v3258 = vadd.f32 %v2106, %v3194
  %v3259 = vadd.f32 %v2107, %v3195
  %v3260 = vadd.f32 %v2108, %v3196
  %v3261 = vadd.f32 %v2109, %v3197
  %v3262 = vadd.f32 %v2110, %v3198
  %v3263 = vadd.f32 %v2111, %v3199
  %v3264 = vadd.f32 %v2112, %v3200
  %v3265 = vadd.f32 %v2113, %v3201
  %v3266 = vadd.f32 %v2114, %v3202
  %v3267 = vadd.f32 %v2115, %v3203
  %v3268 = vadd.f32 %v2116, %v3204
  %v3269 = vadd.f32 %v2117, %v3205
  %v3270 = vadd.f32 %v2118, %v3206
  %v3271 = vadd.f32 %v2119, %v3207
  %v3272 = vadd.f32 %v2120, %v3208
  %v3273 = vadd.f32 %v2121, %v3209
  %v3274 = vadd.f32 %v2122, %v3210
  %v3275 = vadd.f32 %v2123, %v3211
  %v3276 = vadd.f32 %v2124, %v3212
  %v3277 = vadd.f32 %v2125, %v3213
  %v3278 = vadd.f32 %v2126, %v3214
  %v3279 = vadd.f32 %v2127, %v3215
  %v3280 = vadd.f32 %v2128, %v3216
  %v3281 = vadd.f32 %v2129, %v3217
  %v3282 = vadd.f32 %v2130, %v3218
  %v3283 = vadd.f32 %v2131, %v3219
  %v3284 = vadd.f32 %v2132, %v3220
  %v3285 = vadd.f32 %v2133, %v3221
  %v3286 = vadd.f32 %v2134, %v3222
  %v3287 = vadd.f32 %v2135, %v3223
  %v3288 = vadd.f32 %v2136, %v3224
  %v3289 = vadd.f32 %v2137, %v3225
  %v3290 = vadd.f32 %v2138, %v3226
  %v3291 = vadd.f32 %v2139, %v3227
  %v3292 = vadd.f32 %v2140, %v3228
  %v3293 = vadd.f32 %v2141, %v3229
  %v3294 = vadd.f32 %v2142, %v3230
  %v3295 = vmul.f32 %v3231, 1.442695
  %v3296 = vpow.pop %v3295
  %v3297 = vmul.f32 %v3232, 1.442695
  %v3298 = vpow.pop %v3297
  %v3299 = vmul.f32 %v3233, 1.442695
  %v3300 = vpow.pop %v3299
  %v3301 = vmul.f32 %v3234, 1.442695
  %v3302 = vpow.pop %v3301
  %v3303 = vmul.f32 %v3235, 1.442695
  %v3304 = vpow.pop %v3303
  %v3305 = vmul.f32 %v3236, 1.442695
  %v3306 = vpow.pop %v3305
  %v3307 = vmul.f32 %v3237, 1.442695
  %v3308 = vpow.pop %v3307
  %v3309 = vmul.f32 %v3238, 1.442695
  %v3310 = vpow.pop %v3309
  %v3311 = vmul.f32 %v3239, 1.442695
  %v3312 = vpow.pop %v3311
  %v3313 = vmul.f32 %v3240, 1.442695
  %v3314 = vpow.pop %v3313
  %v3315 = vmul.f32 %v3241, 1.442695
  %v3316 = vpow.pop %v3315
  %v3317 = vmul.f32 %v3242, 1.442695
  %v3318 = vpow.pop %v3317
  %v3319 = vmul.f32 %v3243, 1.442695
  %v3320 = vpow.pop %v3319
  %v3321 = vmul.f32 %v3244, 1.442695
  %v3322 = vpow.pop %v3321
  %v3323 = vmul.f32 %v3245, 1.442695
  %v3324 = vpow.pop %v3323
  %v3325 = vmul.f32 %v3246, 1.442695
  %v3326 = vpow.pop %v3325
  %v3327 = vmul.f32 %v3247, 1.442695
  %v3328 = vpow.pop %v3327
  %v3329 = vmul.f32 %v3248, 1.442695
  %v3330 = vpow.pop %v3329
  %v3331 = vmul.f32 %v3249, 1.442695
  %v3332 = vpow.pop %v3331
  %v3333 = vmul.f32 %v3250, 1.442695
  %v3334 = vpow.pop %v3333
  %v3335 = vmul.f32 %v3251, 1.442695
  %v3336 = vpow.pop %v3335
  %v3337 = vmul.f32 %v3252, 1.442695
  %v3338 = vpow.pop %v3337
  %v3339 = vmul.f32 %v3253, 1.442695
  %v3340 = vpow.pop %v3339
  %v3341 = vmul.f32 %v3254, 1.442695
  %v3342 = vpow.pop %v3341
  %v3343 = vmul.f32 %v3255, 1.442695
  %v3344 = vpow.pop %v3343
  %v3345 = vmul.f32 %v3256, 1.442695
  %v3346 = vpow.pop %v3345
  %v3347 = vmul.f32 %v3257, 1.442695
  %v3348 = vpow.pop %v3347
  %v3349 = vmul.f32 %v3258, 1.442695
  %v3350 = vpow.pop %v3349
  %v3351 = vmul.f32 %v3259, 1.442695
  %v3352 = vpow.pop %v3351
  %v3353 = vmul.f32 %v3260, 1.442695
  %v3354 = vpow.pop %v3353
  %v3355 = vmul.f32 %v3261, 1.442695
  %v3356 = vpow.pop %v3355
  %v3357 = vmul.f32 %v3262, 1.442695
  %v3358 = vpow.pop %v3357
  %v3359 = vmul.f32 %v3263, 1.442695
  %v3360 = vpow.pop %v3359
  %v3361 = vmul.f32 %v3264, 1.442695
  %v3362 = vpow.pop %v3361
  %v3363 = vmul.f32 %v3265, 1.442695
  %v3364 = vpow.pop %v3363
  %v3365 = vmul.f32 %v3266, 1.442695
  %v3366 = vpow.pop %v3365
  %v3367 = vmul.f32 %v3267, 1.442695
  %v3368 = vpow.pop %v3367
  %v3369 = vmul.f32 %v3268, 1.442695
  %v3370 = vpow.pop %v3369
  %v3371 = vmul.f32 %v3269, 1.442695
  %v3372 = vpow.pop %v3371
  %v3373 = vmul.f32 %v3270, 1.442695
  %v3374 = vpow.pop %v3373
  %v3375 = vmul.f32 %v3271, 1.442695
  %v3376 = vpow.pop %v3375
  %v3377 = vmul.f32 %v3272, 1.442695
  %v3378 = vpow.pop %v3377
  %v3379 = vmul.f32 %v3273, 1.442695
  %v3380 = vpow.pop %v3379
  %v3381 = vmul.f32 %v3274, 1.442695
  %v3382 = vpow.pop %v3381
  %v3383 = vmul.f32 %v3275, 1.442695
  %v3384 = vpow.pop %v3383
  %v3385 = vmul.f32 %v3276, 1.442695
  %v3386 = vpow.pop %v3385
  %v3387 = vmul.f32 %v3277, 1.442695
  %v3388 = vpow.pop %v3387
  %v3389 = vmul.f32 %v3278, 1.442695
  %v3390 = vpow.pop %v3389
  %v3391 = vmul.f32 %v3279, 1.442695
  %v3392 = vpow.pop %v3391
  %v3393 = vmul.f32 %v3280, 1.442695
  %v3394 = vpow.pop %v3393
  %v3395 = vmul.f32 %v3281, 1.442695
  %v3396 = vpow.pop %v3395
  %v3397 = vmul.f32 %v3282, 1.442695
  %v3398 = vpow.pop %v3397
  %v3399 = vmul.f32 %v3283, 1.442695
  %v3400 = vpow.pop %v3399
  %v3401 = vmul.f32 %v3284, 1.442695
  %v3402 = vpow.pop %v3401
  %v3403 = vmul.f32 %v3285, 1.442695
  %v3404 = vpow.pop %v3403
  %v3405 = vmul.f32 %v3286, 1.442695
  %v3406 = vpow.pop %v3405
  %v3407 = vmul.f32 %v3287, 1.442695
  %v3408 = vpow.pop %v3407
  %v3409 = vmul.f32 %v3288, 1.442695
  %v3410 = vpow.pop %v3409
  %v3411 = vmul.f32 %v3289, 1.442695
  %v3412 = vpow.pop %v3411
  %v3413 = vmul.f32 %v3290, 1.442695
  %v3414 = vpow.pop %v3413
  %v3415 = vmul.f32 %v3291, 1.442695
  %v3416 = vpow.pop %v3415
  %v3417 = vmul.f32 %v3292, 1.442695
  %v3418 = vpow.pop %v3417
  %v3419 = vmul.f32 %v3293, 1.442695
  %v3420 = vpow.pop %v3419
  %v3421 = vmul.f32 %v3294, 1.442695
  %v3422 = vpow.pop %v3421
  %v3423 = vmul.f32 %v1887, %v3296
  %v3424 = vmul.f32 %v1888, %v3298
  %v3425 = vmul.f32 %v1889, %v3300
  %v3426 = vmul.f32 %v1890, %v3302
  %v3427 = vmul.f32 %v1891, %v3304
  %v3428 = vmul.f32 %v1892, %v3306
  %v3429 = vmul.f32 %v1893, %v3308
  %v3430 = vmul.f32 %v1894, %v3310
  %v3431 = vmul.f32 %v1895, %v3312
  %v3432 = vmul.f32 %v1896, %v3314
  %v3433 = vmul.f32 %v1897, %v3316
  %v3434 = vmul.f32 %v1898, %v3318
  %v3435 = vmul.f32 %v1899, %v3320
  %v3436 = vmul.f32 %v1900, %v3322
  %v3437 = vmul.f32 %v1901, %v3324
  %v3438 = vmul.f32 %v1902, %v3326
  %v3439 = vmul.f32 %v1903, %v3328
  %v3440 = vmul.f32 %v1904, %v3330
  %v3441 = vmul.f32 %v1905, %v3332
  %v3442 = vmul.f32 %v1906, %v3334
  %v3443 = vmul.f32 %v1907, %v3336
  %v3444 = vmul.f32 %v1908, %v3338
  %v3445 = vmul.f32 %v1909, %v3340
  %v3446 = vmul.f32 %v1910, %v3342
  %v3447 = vmul.f32 %v1911, %v3344
  %v3448 = vmul.f32 %v1912, %v3346
  %v3449 = vmul.f32 %v1913, %v3348
  %v3450 = vmul.f32 %v1914, %v3350
  %v3451 = vmul.f32 %v1915, %v3352
  %v3452 = vmul.f32 %v1916, %v3354
  %v3453 = vmul.f32 %v1917, %v3356
  %v3454 = vmul.f32 %v1918, %v3358
  %v3455 = vmul.f32 %v1919, %v3360
  %v3456 = vmul.f32 %v1920, %v3362
  %v3457 = vmul.f32 %v1921, %v3364
  %v3458 = vmul.f32 %v1922, %v3366
  %v3459 = vmul.f32 %v1923, %v3368
  %v3460 = vmul.f32 %v1924, %v3370
  %v3461 = vmul.f32 %v1925, %v3372
  %v3462 = vmul.f32 %v1926, %v3374
  %v3463 = vmul.f32 %v1927, %v3376
  %v3464 = vmul.f32 %v1928, %v3378
  %v3465 = vmul.f32 %v1929, %v3380
  %v3466 = vmul.f32 %v1930, %v3382
  %v3467 = vmul.f32 %v1931, %v3384
  %v3468 = vmul.f32 %v1932, %v3386
  %v3469 = vmul.f32 %v1933, %v3388
  %v3470 = vmul.f32 %v1934, %v3390
  %v3471 = vmul.f32 %v1935, %v3392
  %v3472 = vmul.f32 %v1936, %v3394
  %v3473 = vmul.f32 %v1937, %v3396
  %v3474 = vmul.f32 %v1938, %v3398
  %v3475 = vmul.f32 %v1939, %v3400
  %v3476 = vmul.f32 %v1940, %v3402
  %v3477 = vmul.f32 %v1941, %v3404
  %v3478 = vmul.f32 %v1942, %v3406
  %v3479 = vmul.f32 %v1943, %v3408
  %v3480 = vmul.f32 %v1944, %v3410
  %v3481 = vmul.f32 %v1945, %v3412
  %v3482 = vmul.f32 %v1946, %v3414
  %v3483 = vmul.f32 %v1947, %v3416
  %v3484 = vmul.f32 %v1948, %v3418
  %v3485 = vmul.f32 %v1949, %v3420
  %v3486 = vmul.f32 %v1950, %v3422
  %vm3487 = vcmp.ge.f32.partialorder %v1439, 0.0
  %vm3488 = vcmp.ge.f32.partialorder %v1440, 0.0
  %vm3489 = vcmp.ge.f32.partialorder %v1441, 0.0
  %vm3490 = vcmp.ge.f32.partialorder %v1442, 0.0
  %vm3491 = vcmp.ge.f32.partialorder %v1443, 0.0
  %vm3492 = vcmp.ge.f32.partialorder %v1444, 0.0
  %vm3493 = vcmp.ge.f32.partialorder %v1445, 0.0
  %vm3494 = vcmp.ge.f32.partialorder %v1446, 0.0
  %vm3495 = vcmp.ge.f32.partialorder %v1447, 0.0
  %vm3496 = vcmp.ge.f32.partialorder %v1448, 0.0
  %vm3497 = vcmp.ge.f32.partialorder %v1449, 0.0
  %vm3498 = vcmp.ge.f32.partialorder %v1450, 0.0
  %vm3499 = vcmp.ge.f32.partialorder %v1451, 0.0
  %vm3500 = vcmp.ge.f32.partialorder %v1452, 0.0
  %vm3501 = vcmp.ge.f32.partialorder %v1453, 0.0
  %vm3502 = vcmp.ge.f32.partialorder %v1454, 0.0
  %vm3503 = vcmp.ge.f32.partialorder %v1455, 0.0
  %vm3504 = vcmp.ge.f32.partialorder %v1456, 0.0
  %vm3505 = vcmp.ge.f32.partialorder %v1457, 0.0
  %vm3506 = vcmp.ge.f32.partialorder %v1458, 0.0
  %vm3507 = vcmp.ge.f32.partialorder %v1459, 0.0
  %vm3508 = vcmp.ge.f32.partialorder %v1460, 0.0
  %vm3509 = vcmp.ge.f32.partialorder %v1461, 0.0
  %vm3510 = vcmp.ge.f32.partialorder %v1462, 0.0
  %vm3511 = vcmp.ge.f32.partialorder %v1463, 0.0
  %vm3512 = vcmp.ge.f32.partialorder %v1464, 0.0
  %vm3513 = vcmp.ge.f32.partialorder %v1465, 0.0
  %vm3514 = vcmp.ge.f32.partialorder %v1466, 0.0
  %vm3515 = vcmp.ge.f32.partialorder %v1467, 0.0
  %vm3516 = vcmp.ge.f32.partialorder %v1468, 0.0
  %vm3517 = vcmp.ge.f32.partialorder %v1469, 0.0
  %vm3518 = vcmp.ge.f32.partialorder %v1470, 0.0
  %vm3519 = vcmp.ge.f32.partialorder %v1471, 0.0
  %vm3520 = vcmp.ge.f32.partialorder %v1472, 0.0
  %vm3521 = vcmp.ge.f32.partialorder %v1473, 0.0
  %vm3522 = vcmp.ge.f32.partialorder %v1474, 0.0
  %vm3523 = vcmp.ge.f32.partialorder %v1475, 0.0
  %vm3524 = vcmp.ge.f32.partialorder %v1476, 0.0
  %vm3525 = vcmp.ge.f32.partialorder %v1477, 0.0
  %vm3526 = vcmp.ge.f32.partialorder %v1478, 0.0
  %vm3527 = vcmp.ge.f32.partialorder %v1479, 0.0
  %vm3528 = vcmp.ge.f32.partialorder %v1480, 0.0
  %vm3529 = vcmp.ge.f32.partialorder %v1481, 0.0
  %vm3530 = vcmp.ge.f32.partialorder %v1482, 0.0
  %vm3531 = vcmp.ge.f32.partialorder %v1483, 0.0
  %vm3532 = vcmp.ge.f32.partialorder %v1484, 0.0
  %vm3533 = vcmp.ge.f32.partialorder %v1485, 0.0
  %vm3534 = vcmp.ge.f32.partialorder %v1486, 0.0
  %vm3535 = vcmp.ge.f32.partialorder %v1487, 0.0
  %vm3536 = vcmp.ge.f32.partialorder %v1488, 0.0
  %vm3537 = vcmp.ge.f32.partialorder %v1489, 0.0
  %vm3538 = vcmp.ge.f32.partialorder %v1490, 0.0
  %vm3539 = vcmp.ge.f32.partialorder %v1491, 0.0
  %vm3540 = vcmp.ge.f32.partialorder %v1492, 0.0
  %vm3541 = vcmp.ge.f32.partialorder %v1493, 0.0
  %vm3542 = vcmp.ge.f32.partialorder %v1494, 0.0
  %vm3543 = vcmp.ge.f32.partialorder %v1495, 0.0
  %vm3544 = vcmp.ge.f32.partialorder %v1496, 0.0
  %vm3545 = vcmp.ge.f32.partialorder %v1497, 0.0
  %vm3546 = vcmp.ge.f32.partialorder %v1498, 0.0
  %vm3547 = vcmp.ge.f32.partialorder %v1499, 0.0
  %vm3548 = vcmp.ge.f32.partialorder %v1500, 0.0
  %vm3549 = vcmp.ge.f32.partialorder %v1501, 0.0
  %vm3550 = vcmp.ge.f32.partialorder %v1502, 0.0
  %v3551 = vsub.f32 1.0, %v3423
  %v3552 = vsub.f32 1.0, %v3424
  %v3553 = vsub.f32 1.0, %v3425
  %v3554 = vsub.f32 1.0, %v3426
  %v3555 = vsub.f32 1.0, %v3427
  %v3556 = vsub.f32 1.0, %v3428
  %v3557 = vsub.f32 1.0, %v3429
  %v3558 = vsub.f32 1.0, %v3430
  %v3559 = vsub.f32 1.0, %v3431
  %v3560 = vsub.f32 1.0, %v3432
  %v3561 = vsub.f32 1.0, %v3433
  %v3562 = vsub.f32 1.0, %v3434
  %v3563 = vsub.f32 1.0, %v3435
  %v3564 = vsub.f32 1.0, %v3436
  %v3565 = vsub.f32 1.0, %v3437
  %v3566 = vsub.f32 1.0, %v3438
  %v3567 = vsub.f32 1.0, %v3439
  %v3568 = vsub.f32 1.0, %v3440
  %v3569 = vsub.f32 1.0, %v3441
  %v3570 = vsub.f32 1.0, %v3442
  %v3571 = vsub.f32 1.0, %v3443
  %v3572 = vsub.f32 1.0, %v3444
  %v3573 = vsub.f32 1.0, %v3445
  %v3574 = vsub.f32 1.0, %v3446
  %v3575 = vsub.f32 1.0, %v3447
  %v3576 = vsub.f32 1.0, %v3448
  %v3577 = vsub.f32 1.0, %v3449
  %v3578 = vsub.f32 1.0, %v3450
  %v3579 = vsub.f32 1.0, %v3451
  %v3580 = vsub.f32 1.0, %v3452
  %v3581 = vsub.f32 1.0, %v3453
  %v3582 = vsub.f32 1.0, %v3454
  %v3583 = vsub.f32 1.0, %v3455
  %v3584 = vsub.f32 1.0, %v3456
  %v3585 = vsub.f32 1.0, %v3457
  %v3586 = vsub.f32 1.0, %v3458
  %v3587 = vsub.f32 1.0, %v3459
  %v3588 = vsub.f32 1.0, %v3460
  %v3589 = vsub.f32 1.0, %v3461
  %v3590 = vsub.f32 1.0, %v3462
  %v3591 = vsub.f32 1.0, %v3463
  %v3592 = vsub.f32 1.0, %v3464
  %v3593 = vsub.f32 1.0, %v3465
  %v3594 = vsub.f32 1.0, %v3466
  %v3595 = vsub.f32 1.0, %v3467
  %v3596 = vsub.f32 1.0, %v3468
  %v3597 = vsub.f32 1.0, %v3469
  %v3598 = vsub.f32 1.0, %v3470
  %v3599 = vsub.f32 1.0, %v3471
  %v3600 = vsub.f32 1.0, %v3472
  %v3601 = vsub.f32 1.0, %v3473
  %v3602 = vsub.f32 1.0, %v3474
  %v3603 = vsub.f32 1.0, %v3475
  %v3604 = vsub.f32 1.0, %v3476
  %v3605 = vsub.f32 1.0, %v3477
  %v3606 = vsub.f32 1.0, %v3478
  %v3607 = vsub.f32 1.0, %v3479
  %v3608 = vsub.f32 1.0, %v3480
  %v3609 = vsub.f32 1.0, %v3481
  %v3610 = vsub.f32 1.0, %v3482
  %v3611 = vsub.f32 1.0, %v3483
  %v3612 = vsub.f32 1.0, %v3484
  %v3613 = vsub.f32 1.0, %v3485
  %v3614 = vsub.f32 1.0, %v3486
  %v3615 = vsub.f32 %v3423, 1.0
  %v3616 = vsub.f32 %v3424, 1.0
  %v3617 = vsub.f32 %v3425, 1.0
  %v3618 = vsub.f32 %v3426, 1.0
  %v3619 = vsub.f32 %v3427, 1.0
  %v3620 = vsub.f32 %v3428, 1.0
  %v3621 = vsub.f32 %v3429, 1.0
  %v3622 = vsub.f32 %v3430, 1.0
  %v3623 = vsub.f32 %v3431, 1.0
  %v3624 = vsub.f32 %v3432, 1.0
  %v3625 = vsub.f32 %v3433, 1.0
  %v3626 = vsub.f32 %v3434, 1.0
  %v3627 = vsub.f32 %v3435, 1.0
  %v3628 = vsub.f32 %v3436, 1.0
  %v3629 = vsub.f32 %v3437, 1.0
  %v3630 = vsub.f32 %v3438, 1.0
  %v3631 = vsub.f32 %v3439, 1.0
  %v3632 = vsub.f32 %v3440, 1.0
  %v3633 = vsub.f32 %v3441, 1.0
  %v3634 = vsub.f32 %v3442, 1.0
  %v3635 = vsub.f32 %v3443, 1.0
  %v3636 = vsub.f32 %v3444, 1.0
  %v3637 = vsub.f32 %v3445, 1.0
  %v3638 = vsub.f32 %v3446, 1.0
  %v3639 = vsub.f32 %v3447, 1.0
  %v3640 = vsub.f32 %v3448, 1.0
  %v3641 = vsub.f32 %v3449, 1.0
  %v3642 = vsub.f32 %v3450, 1.0
  %v3643 = vsub.f32 %v3451, 1.0
  %v3644 = vsub.f32 %v3452, 1.0
  %v3645 = vsub.f32 %v3453, 1.0
  %v3646 = vsub.f32 %v3454, 1.0
  %v3647 = vsub.f32 %v3455, 1.0
  %v3648 = vsub.f32 %v3456, 1.0
  %v3649 = vsub.f32 %v3457, 1.0
  %v3650 = vsub.f32 %v3458, 1.0
  %v3651 = vsub.f32 %v3459, 1.0
  %v3652 = vsub.f32 %v3460, 1.0
  %v3653 = vsub.f32 %v3461, 1.0
  %v3654 = vsub.f32 %v3462, 1.0
  %v3655 = vsub.f32 %v3463, 1.0
  %v3656 = vsub.f32 %v3464, 1.0
  %v3657 = vsub.f32 %v3465, 1.0
  %v3658 = vsub.f32 %v3466, 1.0
  %v3659 = vsub.f32 %v3467, 1.0
  %v3660 = vsub.f32 %v3468, 1.0
  %v3661 = vsub.f32 %v3469, 1.0
  %v3662 = vsub.f32 %v3470, 1.0
  %v3663 = vsub.f32 %v3471, 1.0
  %v3664 = vsub.f32 %v3472, 1.0
  %v3665 = vsub.f32 %v3473, 1.0
  %v3666 = vsub.f32 %v3474, 1.0
  %v3667 = vsub.f32 %v3475, 1.0
  %v3668 = vsub.f32 %v3476, 1.0
  %v3669 = vsub.f32 %v3477, 1.0
  %v3670 = vsub.f32 %v3478, 1.0
  %v3671 = vsub.f32 %v3479, 1.0
  %v3672 = vsub.f32 %v3480, 1.0
  %v3673 = vsub.f32 %v3481, 1.0
  %v3674 = vsub.f32 %v3482, 1.0
  %v3675 = vsub.f32 %v3483, 1.0
  %v3676 = vsub.f32 %v3484, 1.0
  %v3677 = vsub.f32 %v3485, 1.0
  %v3678 = vsub.f32 %v3486, 1.0
  %v3679 = vsel %vm3487, %v3551, %v3615
  %v3680 = vsel %vm3488, %v3552, %v3616
  %v3681 = vsel %vm3489, %v3553, %v3617
  %v3682 = vsel %vm3490, %v3554, %v3618
  %v3683 = vsel %vm3491, %v3555, %v3619
  %v3684 = vsel %vm3492, %v3556, %v3620
  %v3685 = vsel %vm3493, %v3557, %v3621
  %v3686 = vsel %vm3494, %v3558, %v3622
  %v3687 = vsel %vm3495, %v3559, %v3623
  %v3688 = vsel %vm3496, %v3560, %v3624
  %v3689 = vsel %vm3497, %v3561, %v3625
  %v3690 = vsel %vm3498, %v3562, %v3626
  %v3691 = vsel %vm3499, %v3563, %v3627
  %v3692 = vsel %vm3500, %v3564, %v3628
  %v3693 = vsel %vm3501, %v3565, %v3629
  %v3694 = vsel %vm3502, %v3566, %v3630
  %v3695 = vsel %vm3503, %v3567, %v3631
  %v3696 = vsel %vm3504, %v3568, %v3632
  %v3697 = vsel %vm3505, %v3569, %v3633
  %v3698 = vsel %vm3506, %v3570, %v3634
  %v3699 = vsel %vm3507, %v3571, %v3635
  %v3700 = vsel %vm3508, %v3572, %v3636
  %v3701 = vsel %vm3509, %v3573, %v3637
  %v3702 = vsel %vm3510, %v3574, %v3638
  %v3703 = vsel %vm3511, %v3575, %v3639
  %v3704 = vsel %vm3512, %v3576, %v3640
  %v3705 = vsel %vm3513, %v3577, %v3641
  %v3706 = vsel %vm3514, %v3578, %v3642
  %v3707 = vsel %vm3515, %v3579, %v3643
  %v3708 = vsel %vm3516, %v3580, %v3644
  %v3709 = vsel %vm3517, %v3581, %v3645
  %v3710 = vsel %vm3518, %v3582, %v3646
  %v3711 = vsel %vm3519, %v3583, %v3647
  %v3712 = vsel %vm3520, %v3584, %v3648
  %v3713 = vsel %vm3521, %v3585, %v3649
  %v3714 = vsel %vm3522, %v3586, %v3650
  %v3715 = vsel %vm3523, %v3587, %v3651
  %v3716 = vsel %vm3524, %v3588, %v3652
  %v3717 = vsel %vm3525, %v3589, %v3653
  %v3718 = vsel %vm3526, %v3590, %v3654
  %v3719 = vsel %vm3527, %v3591, %v3655
  %v3720 = vsel %vm3528, %v3592, %v3656
  %v3721 = vsel %vm3529, %v3593, %v3657
  %v3722 = vsel %vm3530, %v3594, %v3658
  %v3723 = vsel %vm3531, %v3595, %v3659
  %v3724 = vsel %vm3532, %v3596, %v3660
  %v3725 = vsel %vm3533, %v3597, %v3661
  %v3726 = vsel %vm3534, %v3598, %v3662
  %v3727 = vsel %vm3535, %v3599, %v3663
  %v3728 = vsel %vm3536, %v3600, %v3664
  %v3729 = vsel %vm3537, %v3601, %v3665
  %v3730 = vsel %vm3538, %v3602, %v3666
  %v3731 = vsel %vm3539, %v3603, %v3667
  %v3732 = vsel %vm3540, %v3604, %v3668
  %v3733 = vsel %vm3541, %v3605, %v3669
  %v3734 = vsel %vm3542, %v3606, %v3670
  %v3735 = vsel %vm3543, %v3607, %v3671
  %v3736 = vsel %vm3544, %v3608, %v3672
  %v3737 = vsel %vm3545, %v3609, %v3673
  %v3738 = vsel %vm3546, %v3610, %v3674
  %v3739 = vsel %vm3547, %v3611, %v3675
  %v3740 = vsel %vm3548, %v3612, %v3676
  %v3741 = vsel %vm3549, %v3613, %v3677
  %v3742 = vsel %vm3550, %v3614, %v3678
  %v3743 = vadd.f32 %v3679, 1.0
  %v3744 = vadd.f32 %v3680, 1.0
  %v3745 = vadd.f32 %v3681, 1.0
  %v3746 = vadd.f32 %v3682, 1.0
  %v3747 = vadd.f32 %v3683, 1.0
  %v3748 = vadd.f32 %v3684, 1.0
  %v3749 = vadd.f32 %v3685, 1.0
  %v3750 = vadd.f32 %v3686, 1.0
  %v3751 = vadd.f32 %v3687, 1.0
  %v3752 = vadd.f32 %v3688, 1.0
  %v3753 = vadd.f32 %v3689, 1.0
  %v3754 = vadd.f32 %v3690, 1.0
  %v3755 = vadd.f32 %v3691, 1.0
  %v3756 = vadd.f32 %v3692, 1.0
  %v3757 = vadd.f32 %v3693, 1.0
  %v3758 = vadd.f32 %v3694, 1.0
  %v3759 = vadd.f32 %v3695, 1.0
  %v3760 = vadd.f32 %v3696, 1.0
  %v3761 = vadd.f32 %v3697, 1.0
  %v3762 = vadd.f32 %v3698, 1.0
  %v3763 = vadd.f32 %v3699, 1.0
  %v3764 = vadd.f32 %v3700, 1.0
  %v3765 = vadd.f32 %v3701, 1.0
  %v3766 = vadd.f32 %v3702, 1.0
  %v3767 = vadd.f32 %v3703, 1.0
  %v3768 = vadd.f32 %v3704, 1.0
  %v3769 = vadd.f32 %v3705, 1.0
  %v3770 = vadd.f32 %v3706, 1.0
  %v3771 = vadd.f32 %v3707, 1.0
  %v3772 = vadd.f32 %v3708, 1.0
  %v3773 = vadd.f32 %v3709, 1.0
  %v3774 = vadd.f32 %v3710, 1.0
  %v3775 = vadd.f32 %v3711, 1.0
  %v3776 = vadd.f32 %v3712, 1.0
  %v3777 = vadd.f32 %v3713, 1.0
  %v3778 = vadd.f32 %v3714, 1.0
  %v3779 = vadd.f32 %v3715, 1.0
  %v3780 = vadd.f32 %v3716, 1.0
  %v3781 = vadd.f32 %v3717, 1.0
  %v3782 = vadd.f32 %v3718, 1.0
  %v3783 = vadd.f32 %v3719, 1.0
  %v3784 = vadd.f32 %v3720, 1.0
  %v3785 = vadd.f32 %v3721, 1.0
  %v3786 = vadd.f32 %v3722, 1.0
  %v3787 = vadd.f32 %v3723, 1.0
  %v3788 = vadd.f32 %v3724, 1.0
  %v3789 = vadd.f32 %v3725, 1.0
  %v3790 = vadd.f32 %v3726, 1.0
  %v3791 = vadd.f32 %v3727, 1.0
  %v3792 = vadd.f32 %v3728, 1.0
  %v3793 = vadd.f32 %v3729, 1.0
  %v3794 = vadd.f32 %v3730, 1.0
  %v3795 = vadd.f32 %v3731, 1.0
  %v3796 = vadd.f32 %v3732, 1.0
  %v3797 = vadd.f32 %v3733, 1.0
  %v3798 = vadd.f32 %v3734, 1.0
  %v3799 = vadd.f32 %v3735, 1.0
  %v3800 = vadd.f32 %v3736, 1.0
  %v3801 = vadd.f32 %v3737, 1.0
  %v3802 = vadd.f32 %v3738, 1.0
  %v3803 = vadd.f32 %v3739, 1.0
  %v3804 = vadd.f32 %v3740, 1.0
  %v3805 = vadd.f32 %v3741, 1.0
  %v3806 = vadd.f32 %v3742, 1.0
  %v3807 = vmul.f32 %v1375, %v3743
  %v3808 = vmul.f32 %v1376, %v3744
  %v3809 = vmul.f32 %v1377, %v3745
  %v3810 = vmul.f32 %v1378, %v3746
  %v3811 = vmul.f32 %v1379, %v3747
  %v3812 = vmul.f32 %v1380, %v3748
  %v3813 = vmul.f32 %v1381, %v3749
  %v3814 = vmul.f32 %v1382, %v3750
  %v3815 = vmul.f32 %v1383, %v3751
  %v3816 = vmul.f32 %v1384, %v3752
  %v3817 = vmul.f32 %v1385, %v3753
  %v3818 = vmul.f32 %v1386, %v3754
  %v3819 = vmul.f32 %v1387, %v3755
  %v3820 = vmul.f32 %v1388, %v3756
  %v3821 = vmul.f32 %v1389, %v3757
  %v3822 = vmul.f32 %v1390, %v3758
  %v3823 = vmul.f32 %v1391, %v3759
  %v3824 = vmul.f32 %v1392, %v3760
  %v3825 = vmul.f32 %v1393, %v3761
  %v3826 = vmul.f32 %v1394, %v3762
  %v3827 = vmul.f32 %v1395, %v3763
  %v3828 = vmul.f32 %v1396, %v3764
  %v3829 = vmul.f32 %v1397, %v3765
  %v3830 = vmul.f32 %v1398, %v3766
  %v3831 = vmul.f32 %v1399, %v3767
  %v3832 = vmul.f32 %v1400, %v3768
  %v3833 = vmul.f32 %v1401, %v3769
  %v3834 = vmul.f32 %v1402, %v3770
  %v3835 = vmul.f32 %v1403, %v3771
  %v3836 = vmul.f32 %v1404, %v3772
  %v3837 = vmul.f32 %v1405, %v3773
  %v3838 = vmul.f32 %v1406, %v3774
  %v3839 = vmul.f32 %v1407, %v3775
  %v3840 = vmul.f32 %v1408, %v3776
  %v3841 = vmul.f32 %v1409, %v3777
  %v3842 = vmul.f32 %v1410, %v3778
  %v3843 = vmul.f32 %v1411, %v3779
  %v3844 = vmul.f32 %v1412, %v3780
  %v3845 = vmul.f32 %v1413, %v3781
  %v3846 = vmul.f32 %v1414, %v3782
  %v3847 = vmul.f32 %v1415, %v3783
  %v3848 = vmul.f32 %v1416, %v3784
  %v3849 = vmul.f32 %v1417, %v3785
  %v3850 = vmul.f32 %v1418, %v3786
  %v3851 = vmul.f32 %v1419, %v3787
  %v3852 = vmul.f32 %v1420, %v3788
  %v3853 = vmul.f32 %v1421, %v3789
  %v3854 = vmul.f32 %v1422, %v3790
  %v3855 = vmul.f32 %v1423, %v3791
  %v3856 = vmul.f32 %v1424, %v3792
  %v3857 = vmul.f32 %v1425, %v3793
  %v3858 = vmul.f32 %v1426, %v3794
  %v3859 = vmul.f32 %v1427, %v3795
  %v3860 = vmul.f32 %v1428, %v3796
  %v3861 = vmul.f32 %v1429, %v3797
  %v3862 = vmul.f32 %v1430, %v3798
  %v3863 = vmul.f32 %v1431, %v3799
  %v3864 = vmul.f32 %v1432, %v3800
  %v3865 = vmul.f32 %v1433, %v3801
  %v3866 = vmul.f32 %v1434, %v3802
  %v3867 = vmul.f32 %v1435, %v3803
  %v3868 = vmul.f32 %v1436, %v3804
  %v3869 = vmul.f32 %v1437, %v3805
  %v3870 = vmul.f32 %v1438, %v3806
  %v3871 = vld [vmem:[%s5] sm:$0xff]
  %v3872 = vld [vmem:[%s5 + $0x8] sm:$0xff]
  %v3873 = vld [vmem:[%s5 + $0x10] sm:$0xff]
  %v3874 = vld [vmem:[%s5 + $0x18] sm:$0xff]
  %v3875 = vld [vmem:[%s5 + $0x20] sm:$0xff]
  %v3876 = vld [vmem:[%s5 + $0x28] sm:$0xff]
  %v3877 = vld [vmem:[%s5 + $0x30] sm:$0xff]
  %v3878 = vld [vmem:[%s5 + $0x38] sm:$0xff]
  %v3879 = vld [vmem:[%s5 + $0x40] sm:$0xff]
  %v3880 = vld [vmem:[%s5 + $0x48] sm:$0xff]
  %v3881 = vld [vmem:[%s5 + $0x50] sm:$0xff]
  %v3882 = vld [vmem:[%s5 + $0x58] sm:$0xff]
  %v3883 = vld [vmem:[%s5 + $0x60] sm:$0xff]
  %v3884 = vld [vmem:[%s5 + $0x68] sm:$0xff]
  %v3885 = vld [vmem:[%s5 + $0x70] sm:$0xff]
  %v3886 = vld [vmem:[%s5 + $0x78] sm:$0xff]
  %v3887 = vld [vmem:[%s5 + $0x80] sm:$0xff]
  %v3888 = vld [vmem:[%s5 + $0x88] sm:$0xff]
  %v3889 = vld [vmem:[%s5 + $0x90] sm:$0xff]
  %v3890 = vld [vmem:[%s5 + $0x98] sm:$0xff]
  %v3891 = vld [vmem:[%s5 + $0xa0] sm:$0xff]
  %v3892 = vld [vmem:[%s5 + $0xa8] sm:$0xff]
  %v3893 = vld [vmem:[%s5 + $0xb0] sm:$0xff]
  %v3894 = vld [vmem:[%s5 + $0xb8] sm:$0xff]
  %v3895 = vld [vmem:[%s5 + $0xc0] sm:$0xff]
  %v3896 = vld [vmem:[%s5 + $0xc8] sm:$0xff]
  %v3897 = vld [vmem:[%s5 + $0xd0] sm:$0xff]
  %v3898 = vld [vmem:[%s5 + $0xd8] sm:$0xff]
  %v3899 = vld [vmem:[%s5 + $0xe0] sm:$0xff]
  %v3900 = vld [vmem:[%s5 + $0xe8] sm:$0xff]
  %v3901 = vld [vmem:[%s5 + $0xf0] sm:$0xff]
  %v3902 = vld [vmem:[%s5 + $0xf8] sm:$0xff]
  %v3903 = vld [vmem:[%s6] sm:$0x1]
  %v3905 = vlaneseq
  %v3906 = vshrl.u32 %v3905, 7
  %v3907 = vsub.s32 0, %v3906
  %v3908 = vrot.slane %v3903, %v3907
  %3910 = vmatprep.subr.mxu0 0.0
  %3911 = vmatpush1.msra.mxu0 %v3871
  %3912 = vmatprep.subr.mxu0 0.0
  %3913 = vmatpush1.msra.mxu0 %v3872
  %3914 = vmatprep.subr.mxu0 0.0
  %3915 = vmatpush1.msra.mxu0 %v3873
  %3916 = vmatprep.subr.mxu0 0.0
  %3917 = vmatpush1.msra.mxu0 %v3874
  %3918 = vmatprep.subr.mxu0 0.0
  %3919 = vmatpush1.msra.mxu0 %v3875
  %3920 = vmatprep.subr.mxu0 0.0
  %3921 = vmatpush1.msra.mxu0 %v3876
  %3922 = vmatprep.subr.mxu0 0.0
  %3923 = vmatpush1.msra.mxu0 %v3877
  %3924 = vmatprep.subr.mxu0 0.0
  %3925 = vmatpush1.msra.mxu0 %v3878
  %3926 = vmatprep.subr.mxu0 0.0
  %3927 = vmatpush1.msra.mxu0 %v3879
  %3928 = vmatprep.subr.mxu0 0.0
  %3929 = vmatpush1.msra.mxu0 %v3880
  %3930 = vmatprep.subr.mxu0 0.0
  %3931 = vmatpush1.msra.mxu0 %v3881
  %3932 = vmatprep.subr.mxu0 0.0
  %3933 = vmatpush1.msra.mxu0 %v3882
  %3934 = vmatprep.subr.mxu0 0.0
  %3935 = vmatpush1.msra.mxu0 %v3883
  %3936 = vmatprep.subr.mxu0 0.0
  %3937 = vmatpush1.msra.mxu0 %v3884
  %3938 = vmatprep.subr.mxu0 0.0
  %3939 = vmatpush1.msra.mxu0 %v3885
  %3940 = vmatprep.subr.mxu0 0.0
  %3941 = vmatpush1.msra.mxu0 %v3886
  %3942 = vmatprep.subr.mxu0 0.0
  %3943 = vmatpush1.msra.mxu0 %v3887
  %3944 = vmatprep.subr.mxu0 0.0
  %3945 = vmatpush1.msra.mxu0 %v3888
  %3946 = vmatprep.subr.mxu0 0.0
  %3947 = vmatpush1.msra.mxu0 %v3889
  %3948 = vmatprep.subr.mxu0 0.0
  %3949 = vmatpush1.msra.mxu0 %v3890
  %3950 = vmatprep.subr.mxu0 0.0
  %3951 = vmatpush1.msra.mxu0 %v3891
  %3952 = vmatprep.subr.mxu0 0.0
  %3953 = vmatpush1.msra.mxu0 %v3892
  %3954 = vmatprep.subr.mxu0 0.0
  %3955 = vmatpush1.msra.mxu0 %v3893
  %3956 = vmatprep.subr.mxu0 0.0
  %3957 = vmatpush1.msra.mxu0 %v3894
  %3958 = vmatprep.subr.mxu0 0.0
  %3959 = vmatpush1.msra.mxu0 %v3895
  %3960 = vmatprep.subr.mxu0 0.0
  %3961 = vmatpush1.msra.mxu0 %v3896
  %3962 = vmatprep.subr.mxu0 0.0
  %3963 = vmatpush1.msra.mxu0 %v3897
  %3964 = vmatprep.subr.mxu0 0.0
  %3965 = vmatpush1.msra.mxu0 %v3898
  %3966 = vmatprep.subr.mxu0 0.0
  %3967 = vmatpush1.msra.mxu0 %v3899
  %3968 = vmatprep.subr.mxu0 0.0
  %3969 = vmatpush1.msra.mxu0 %v3900
  %3970 = vmatprep.subr.mxu0 0.0
  %3971 = vmatpush1.msra.mxu0 %v3901
  %3972 = vmatprep.subr.mxu0 0.0
  %3973 = vmatpush1.msra.mxu0 %v3902
  %3974 = vmatprep.mubr.f32.mxu0 %v3808
  %3975 = vmatmul.mubr.f32.gmra.mrb[0].mxu0 %v3807
  %v3976 = vpop.f32.mrb[0].mxu0
  %v3977 = vadd.f32 %v3908, %v3976
  %v3978 = vpop.f32.mrb[0].mxu0
  %3979 = vmatprep.mubr.f32.mxu0 %v3810
  %3980 = vmatmul.mubr.f32.gmra.mrb[0].mxu0 %v3809
  %v3981 = vpop.f32.mrb[0].mxu0
  %v3982 = vadd.f32 %v3908, %v3981
  %v3983 = vpop.f32.mrb[0].mxu0
  %3984 = vmatprep.mubr.f32.mxu0 %v3812
  %3985 = vmatmul.mubr.f32.gmra.mrb[0].mxu0 %v3811
  %v3986 = vpop.f32.mrb[0].mxu0
  %v3987 = vadd.f32 %v3908, %v3986
  %v3988 = vpop.f32.mrb[0].mxu0
  %3989 = vmatprep.mubr.f32.mxu0 %v3814
  %3990 = vmatmul.mubr.f32.gmra.mrb[0].mxu0 %v3813
  %v3991 = vpop.f32.mrb[0].mxu0
  %v3992 = vadd.f32 %v3908, %v3991
  %v3993 = vpop.f32.mrb[0].mxu0
  %3994 = vmatprep.mubr.f32.mxu0 %v3816
  %3995 = vmatmul.mubr.f32.gmra.mrb[0].mxu0 %v3815
  %v3996 = vpop.f32.mrb[0].mxu0
  %v3997 = vadd.f32 %v3908, %v3996
  %v3998 = vpop.f32.mrb[0].mxu0
  %3999 = vmatprep.mubr.f32.mxu0 %v3818
  %4000 = vmatmul.mubr.f32.gmra.mrb[0].mxu0 %v3817
  %v4001 = vpop.f32.mrb[0].mxu0
  %v4002 = vadd.f32 %v3908, %v4001
  %v4003 = vpop.f32.mrb[0].mxu0
  %4004 = vmatprep.mubr.f32.mxu0 %v3820
  %4005 = vmatmul.mubr.f32.gmra.mrb[0].mxu0 %v3819
  %v4006 = vpop.f32.mrb[0].mxu0
  %v4007 = vadd.f32 %v3908, %v4006
  %v4008 = vpop.f32.mrb[0].mxu0
  %4009 = vmatprep.mubr.f32.mxu0 %v3822
  %4010 = vmatmul.mubr.f32.gmra.mrb[0].mxu0 %v3821
  %v4011 = vpop.f32.mrb[0].mxu0
  %v4012 = vadd.f32 %v3908, %v4011
  %v4013 = vpop.f32.mrb[0].mxu0
  %4014 = vmatprep.mubr.f32.mxu0 %v3824
  %4015 = vmatmul.mubr.f32.gmra.mrb[0].mxu0 %v3823
  %v4016 = vpop.f32.mrb[0].mxu0
  %v4017 = vadd.f32 %v3908, %v4016
  %v4018 = vpop.f32.mrb[0].mxu0
  %4019 = vmatprep.mubr.f32.mxu0 %v3826
  %4020 = vmatmul.mubr.f32.gmra.mrb[0].mxu0 %v3825
  %v4021 = vpop.f32.mrb[0].mxu0
  %v4022 = vadd.f32 %v3908, %v4021
  %v4023 = vpop.f32.mrb[0].mxu0
  %4024 = vmatprep.mubr.f32.mxu0 %v3828
  %4025 = vmatmul.mubr.f32.gmra.mrb[0].mxu0 %v3827
  %v4026 = vpop.f32.mrb[0].mxu0
  %v4027 = vadd.f32 %v3908, %v4026
  %v4028 = vpop.f32.mrb[0].mxu0
  %4029 = vmatprep.mubr.f32.mxu0 %v3830
  %4030 = vmatmul.mubr.f32.gmra.mrb[0].mxu0 %v3829
  %v4031 = vpop.f32.mrb[0].mxu0
  %v4032 = vadd.f32 %v3908, %v4031
  %v4033 = vpop.f32.mrb[0].mxu0
  %4034 = vmatprep.mubr.f32.mxu0 %v3832
  %4035 = vmatmul.mubr.f32.gmra.mrb[0].mxu0 %v3831
  %v4036 = vpop.f32.mrb[0].mxu0
  %v4037 = vadd.f32 %v3908, %v4036
  %v4038 = vpop.f32.mrb[0].mxu0
  %4039 = vmatprep.mubr.f32.mxu0 %v3834
  %4040 = vmatmul.mubr.f32.gmra.mrb[0].mxu0 %v3833
  %v4041 = vpop.f32.mrb[0].mxu0
  %v4042 = vadd.f32 %v3908, %v4041
  %v4043 = vpop.f32.mrb[0].mxu0
  %4044 = vmatprep.mubr.f32.mxu0 %v3836
  %4045 = vmatmul.mubr.f32.gmra.mrb[0].mxu0 %v3835
  %v4046 = vpop.f32.mrb[0].mxu0
  %v4047 = vadd.f32 %v3908, %v4046
  %v4048 = vpop.f32.mrb[0].mxu0
  %4049 = vmatprep.mubr.f32.mxu0 %v3838
  %4050 = vmatmul.mubr.f32.gmra.mrb[0].mxu0 %v3837
  %v4051 = vpop.f32.mrb[0].mxu0
  %v4052 = vadd.f32 %v3908, %v4051
  %v4053 = vpop.f32.mrb[0].mxu0
  %4054 = vmatprep.mubr.f32.mxu0 %v3840
  %4055 = vmatmul.mubr.f32.gmra.mrb[0].mxu0 %v3839
  %v4056 = vpop.f32.mrb[0].mxu0
  %v4057 = vadd.f32 %v3908, %v4056
  %v4058 = vpop.f32.mrb[0].mxu0
  %4059 = vmatprep.mubr.f32.mxu0 %v3842
  %4060 = vmatmul.mubr.f32.gmra.mrb[0].mxu0 %v3841
  %v4061 = vpop.f32.mrb[0].mxu0
  %v4062 = vadd.f32 %v3908, %v4061
  %v4063 = vpop.f32.mrb[0].mxu0
  %4064 = vmatprep.mubr.f32.mxu0 %v3844
  %4065 = vmatmul.mubr.f32.gmra.mrb[0].mxu0 %v3843
  %v4066 = vpop.f32.mrb[0].mxu0
  %v4067 = vadd.f32 %v3908, %v4066
  %v4068 = vpop.f32.mrb[0].mxu0
  %4069 = vmatprep.mubr.f32.mxu0 %v3846
  %4070 = vmatmul.mubr.f32.gmra.mrb[0].mxu0 %v3845
  %v4071 = vpop.f32.mrb[0].mxu0
  %v4072 = vadd.f32 %v3908, %v4071
  %v4073 = vpop.f32.mrb[0].mxu0
  %4074 = vmatprep.mubr.f32.mxu0 %v3848
  %4075 = vmatmul.mubr.f32.gmra.mrb[0].mxu0 %v3847
  %v4076 = vpop.f32.mrb[0].mxu0
  %v4077 = vadd.f32 %v3908, %v4076
  %v4078 = vpop.f32.mrb[0].mxu0
  %4079 = vmatprep.mubr.f32.mxu0 %v3850
  %4080 = vmatmul.mubr.f32.gmra.mrb[0].mxu0 %v3849
  %v4081 = vpop.f32.mrb[0].mxu0
  %v4082 = vadd.f32 %v3908, %v4081
  %v4083 = vpop.f32.mrb[0].mxu0
  %4084 = vmatprep.mubr.f32.mxu0 %v3852
  %4085 = vmatmul.mubr.f32.gmra.mrb[0].mxu0 %v3851
  %v4086 = vpop.f32.mrb[0].mxu0
  %v4087 = vadd.f32 %v3908, %v4086
  %v4088 = vpop.f32.mrb[0].mxu0
  %4089 = vmatprep.mubr.f32.mxu0 %v3854
  %4090 = vmatmul.mubr.f32.gmra.mrb[0].mxu0 %v3853
  %v4091 = vpop.f32.mrb[0].mxu0
  %v4092 = vadd.f32 %v3908, %v4091
  %v4093 = vpop.f32.mrb[0].mxu0
  %4094 = vmatprep.mubr.f32.mxu0 %v3856
  %4095 = vmatmul.mubr.f32.gmra.mrb[0].mxu0 %v3855
  %v4096 = vpop.f32.mrb[0].mxu0
  %v4097 = vadd.f32 %v3908, %v4096
  %v4098 = vpop.f32.mrb[0].mxu0
  %4099 = vmatprep.mubr.f32.mxu0 %v3858
  %4100 = vmatmul.mubr.f32.gmra.mrb[0].mxu0 %v3857
  %v4101 = vpop.f32.mrb[0].mxu0
  %v4102 = vadd.f32 %v3908, %v4101
  %v4103 = vpop.f32.mrb[0].mxu0
  %4104 = vmatprep.mubr.f32.mxu0 %v3860
  %4105 = vmatmul.mubr.f32.gmra.mrb[0].mxu0 %v3859
  %v4106 = vpop.f32.mrb[0].mxu0
  %v4107 = vadd.f32 %v3908, %v4106
  %v4108 = vpop.f32.mrb[0].mxu0
  %4109 = vmatprep.mubr.f32.mxu0 %v3862
  %4110 = vmatmul.mubr.f32.gmra.mrb[0].mxu0 %v3861
  %v4111 = vpop.f32.mrb[0].mxu0
  %v4112 = vadd.f32 %v3908, %v4111
  %v4113 = vpop.f32.mrb[0].mxu0
  %4114 = vmatprep.mubr.f32.mxu0 %v3864
  %4115 = vmatmul.mubr.f32.gmra.mrb[0].mxu0 %v3863
  %v4116 = vpop.f32.mrb[0].mxu0
  %v4117 = vadd.f32 %v3908, %v4116
  %v4118 = vpop.f32.mrb[0].mxu0
  %4119 = vmatprep.mubr.f32.mxu0 %v3866
  %4120 = vmatmul.mubr.f32.gmra.mrb[0].mxu0 %v3865
  %v4121 = vpop.f32.mrb[0].mxu0
  %v4122 = vadd.f32 %v3908, %v4121
  %v4123 = vpop.f32.mrb[0].mxu0
  %4124 = vmatprep.mubr.f32.mxu0 %v3868
  %4125 = vmatmul.mubr.f32.gmra.mrb[0].mxu0 %v3867
  %v4126 = vpop.f32.mrb[0].mxu0
  %v4127 = vadd.f32 %v3908, %v4126
  %v4128 = vpop.f32.mrb[0].mxu0
  %4129 = vmatprep.mubr.f32.mxu0 %v3870
  %4130 = vmatmul.mubr.f32.gmra.mrb[0].mxu0 %v3869
  %v4131 = vpop.f32.mrb[0].mxu0
  %v4132 = vadd.f32 %v3908, %v4131
  %v4133 = vpop.f32.mrb[0].mxu0
  %4134 = vdwg.mxu0
  %v4135 = vadd.f32 %v1042, %v3977
  %v4136 = vadd.f32 %v1043, %v3982
  %v4137 = vadd.f32 %v1044, %v3987
  %v4138 = vadd.f32 %v1045, %v3992
  %v4139 = vadd.f32 %v1046, %v3997
  %v4140 = vadd.f32 %v1047, %v4002
  %v4141 = vadd.f32 %v1048, %v4007
  %v4142 = vadd.f32 %v1049, %v4012
  %v4143 = vadd.f32 %v1050, %v4017
  %v4144 = vadd.f32 %v1051, %v4022
  %v4145 = vadd.f32 %v1052, %v4027
  %v4146 = vadd.f32 %v1053, %v4032
  %v4147 = vadd.f32 %v1054, %v4037
  %v4148 = vadd.f32 %v1055, %v4042
  %v4149 = vadd.f32 %v1056, %v4047
  %v4150 = vadd.f32 %v1057, %v4052
  %v4151 = vadd.f32 %v1058, %v4057
  %v4152 = vadd.f32 %v1059, %v4062
  %v4153 = vadd.f32 %v1060, %v4067
  %v4154 = vadd.f32 %v1061, %v4072
  %v4155 = vadd.f32 %v1062, %v4077
  %v4156 = vadd.f32 %v1063, %v4082
  %v4157 = vadd.f32 %v1064, %v4087
  %v4158 = vadd.f32 %v1065, %v4092
  %v4159 = vadd.f32 %v1066, %v4097
  %v4160 = vadd.f32 %v1067, %v4102
  %v4161 = vadd.f32 %v1068, %v4107
  %v4162 = vadd.f32 %v1069, %v4112
  %v4163 = vadd.f32 %v1070, %v4117
  %v4164 = vadd.f32 %v1071, %v4122
  %v4165 = vadd.f32 %v1072, %v4127
  %v4166 = vadd.f32 %v1073, %v4132
  %4167 = vst [vmem:[%s37] sm:$0xff] %v4135
  %4168 = vst [vmem:[%s37 + $0x8] sm:$0xff] %v4136
  %4169 = vst [vmem:[%s37 + $0x10] sm:$0xff] %v4137
  %4170 = vst [vmem:[%s37 + $0x18] sm:$0xff] %v4138
  %4171 = vst [vmem:[%s37 + $0x20] sm:$0xff] %v4139
  %4172 = vst [vmem:[%s37 + $0x28] sm:$0xff] %v4140
  %4173 = vst [vmem:[%s37 + $0x30] sm:$0xff] %v4141
  %4174 = vst [vmem:[%s37 + $0x38] sm:$0xff] %v4142
  %4175 = vst [vmem:[%s37 + $0x40] sm:$0xff] %v4143
  %4176 = vst [vmem:[%s37 + $0x48] sm:$0xff] %v4144
  %4177 = vst [vmem:[%s37 + $0x50] sm:$0xff] %v4145
  %4178 = vst [vmem:[%s37 + $0x58] sm:$0xff] %v4146
  %4179 = vst [vmem:[%s37 + $0x60] sm:$0xff] %v4147
  %4180 = vst [vmem:[%s37 + $0x68] sm:$0xff] %v4148
  %4181 = vst [vmem:[%s37 + $0x70] sm:$0xff] %v4149
  %4182 = vst [vmem:[%s37 + $0x78] sm:$0xff] %v4150
  %4183 = vst [vmem:[%s37 + $0x80] sm:$0xff] %v4151
  %4184 = vst [vmem:[%s37 + $0x88] sm:$0xff] %v4152
  %4185 = vst [vmem:[%s37 + $0x90] sm:$0xff] %v4153
  %4186 = vst [vmem:[%s37 + $0x98] sm:$0xff] %v4154
  %4187 = vst [vmem:[%s37 + $0xa0] sm:$0xff] %v4155
  %4188 = vst [vmem:[%s37 + $0xa8] sm:$0xff] %v4156
  %4189 = vst [vmem:[%s37 + $0xb0] sm:$0xff] %v4157
  %4190 = vst [vmem:[%s37 + $0xb8] sm:$0xff] %v4158
  %4191 = vst [vmem:[%s37 + $0xc0] sm:$0xff] %v4159
  %4192 = vst [vmem:[%s37 + $0xc8] sm:$0xff] %v4160
  %4193 = vst [vmem:[%s37 + $0xd0] sm:$0xff] %v4161
  %4194 = vst [vmem:[%s37 + $0xd8] sm:$0xff] %v4162
  %4195 = vst [vmem:[%s37 + $0xe0] sm:$0xff] %v4163
  %4196 = vst [vmem:[%s37 + $0xe8] sm:$0xff] %v4164
  %4197 = vst [vmem:[%s37 + $0xf0] sm:$0xff] %v4165
  %4198 = vst [vmem:[%s37 + $0xf8] sm:$0xff] %v4166
  %s4199 = sadd.s32 0, 0
  %p4200 = scmp.lt.s32.totalorder %s4199, 0
  %s4201 = scalar_select %p4200, %s4199, 0
  %s4202 = smul.addr %s4201, 32
  %s4203 = smul.addr %s4202, 8
  %s4204 = scalar_lea.vmem %s7, %s4203
  // Predicated region
  $region34: #{repvit_block.1} parent=0 // pred_check
    _
  $region35: #{repvit_block.1} parent=0 // pred_check_branch
    %4206 = sbr.rel (0) target = $region37
  $region36: #{repvit_block.1} parent=0 // pred_region
    %s4207 = sadd.s32 0, 0
  $region37: #{repvit_block.1} parent=0 // pred_fallthru
    _
  // Predicated region
  $region38: #{repvit_block.1} parent=0 // pred_check
    _
  $region39: #{repvit_block.1} parent=0 // pred_check_branch
    %4209 = sbr.rel (0) target = $region41
  $region40: #{repvit_block.1} parent=0 // pred_region
    %s4210 = sadd.s32 0, 0
    %p4211 = scmp.lt.s32.totalorder %s4210, 0
    %s4212 = scalar_select %p4211, %s4210, 0
    %s4213 = smul.addr %s4212, 32
    %s4214 = smul.addr %s4213, 8
    %s4215 = scalar_lea.vmem %s7, %s4214
  $region41: #{repvit_block.1} parent=0 // pred_fallthru
    _

</llo_original>
